<compile_context>
chip_gen: v5e
topology: v5e:2x2
jax: 0.10.0
libtpu: 0.0.40
codegen_flags: <defaults>
</compile_context>

<pallas_src>
import jax
import jax.numpy as jnp
from jax.experimental import pallas as pl
from jax.experimental.pallas import tpu as pltpu

BODY_INDEXES = (1, 2, 3, 4, 15, 16, 17, 18, 19, 20, 21, 22, 23, 24)
LANES = 128


def _row_chunk(rows, cap=2048):
    """Largest legal sublane-chunk (full rows, or a multiple-of-8 divisor <= cap)."""
    if rows <= cap:
        return rows
    start = cap - (cap % 8)
    for c in range(start, 7, -8):
        if rows % c == 0:
            return c
    return rows


# ----------------------------------------------------------------------------
# Kernel 1: image preprocessing  img[:, [2,1,0]] * 255
#   One block per (batch, row-chunk) carrying all 3 channels; the BGR flip is
#   done with three static channel writes inside the kernel.
# ----------------------------------------------------------------------------
def _img_preproc_kernel(img_ref, out_ref):
    out_ref[0, 0] = img_ref[0, 2] * 255.0
    out_ref[0, 1] = img_ref[0, 1] * 255.0
    out_ref[0, 2] = img_ref[0, 0] * 255.0


def img_preprocess(img):
    B, C, H, W = img.shape
    assert C == 3
    hw = H * W
    assert hw % LANES == 0, "demo requires H*W to be a multiple of 128"
    rows = hw // LANES
    rc = _row_chunk(rows)
    x = img.reshape(B, C, rows, LANES)
    out = pl.pallas_call(
        _img_preproc_kernel,
        out_shape=jax.ShapeDtypeStruct((B, C, rows, LANES), img.dtype),
        grid_spec=pltpu.PrefetchScalarGridSpec(
            num_scalar_prefetch=0,
            grid=(B, rows // rc),
            in_specs=[pl.BlockSpec((1, C, rc, LANES), lambda b, r: (b, 0, r, 0))],
            out_specs=pl.BlockSpec((1, C, rc, LANES), lambda b, r: (b, 0, r, 0)),
        ),
        compiler_params=pltpu.CompilerParams(
            dimension_semantics=("parallel", "parallel")
        ),
    )(x)
    return out.reshape(B, C, H, W)


# ----------------------------------------------------------------------------
# Kernel 2: coarse/fine softmax fusion + body-part gather (whole-plane blocks)
#   coarse_ref: (1,  2, 1, R, 128) logits        (any float dtype; upcast f32)
#   fine_ref:   (1, 25, 1, R, 128) logits
#   out_ref:    (1, 14, 1, R, 128) = softmax(fine)[body_idx] * softmax(coarse)[1]
# ----------------------------------------------------------------------------
def _body_kernel(coarse_ref, fine_ref, out_ref):
    n_fine = fine_ref.shape[1]

    def plane(ref, i):
        return ref[0, i, 0].astype(jnp.float32)

    # coarse softmax pieces over the 2-channel axis (max-stabilized); only the
    # channel-1 numerator e1 and the partial denominator csum stay live.
    c0 = plane(coarse_ref, 0)
    c1 = plane(coarse_ref, 1)
    cm = jnp.maximum(c0, c1)
    e0 = jnp.exp(c0 - cm)
    e1 = jnp.exp(c1 - cm)
    csum = e0 + e1

    # streamed running max over the 25 fine channels (<= 2 live planes)
    fm = plane(fine_ref, 0)
    for i in range(1, n_fine):
        fm = jnp.maximum(fm, plane(fine_ref, i))

    # streamed fine softmax denominator (exp on the EUP slot, which has slack)
    fden = jnp.exp(plane(fine_ref, 0) - fm)
    for i in range(1, n_fine):
        fden = fden + jnp.exp(plane(fine_ref, i) - fm)

    # one fused denominator: coarse_p1 * fine_softmax = exp(f-fm) * e1 / (csum*fden)
    # approx reciprocal on the EUP + one Newton step (~f32 accuracy, not
    # bit-for-bit vs. the PyTorch divide; well within 1e-5).
    den = csum * fden
    inv = pl.reciprocal(den, approx=True)
    inv = inv * (2.0 - den * inv)
    gate = e1 * inv                                   # hoisted out of the loop

    # static 14-channel gather; recompute exp per kept channel (1 live plane),
    # each store is a full lane-dense (R,128) plane (no masked vst).
    for j, idx in enumerate(BODY_INDEXES):
        out_ref[0, j, 0] = (jnp.exp(plane(fine_ref, idx) - fm) * gate).astype(
            out_ref.dtype
        )


def densepose_body(coarse, fine, *, out_dtype=None):
    B, C2, H, W = coarse.shape
    Bf, C25, Hf, Wf = fine.shape
    assert (B, H, W) == (Bf, Hf, Wf) and C2 == 2 and C25 == 25
    nb = len(BODY_INDEXES)
    if out_dtype is None:
        out_dtype = jnp.result_type(coarse.dtype, fine.dtype)

    hw = H * W
    assert hw % LANES == 0, "demo requires H*W to be a multiple of 128"
    rows = hw // LANES                           # 98 for 112x112

    # Whole-plane blocks, one grid step per batch item.  If B == 1, split the
    # plane in two so v7x's two TensorCores both get a "parallel" step.
    n_split = 2 if (B < 2 and rows % 2 == 0) else 1
    rs = rows // n_split

    # Free, contiguous reshape to a lane-dense layout (last dim = 128 lanes,
    # block's last two dims equal the full array dims -> legal, no masking).
    c = coarse.reshape(B, C2, n_split, rs, LANES)
    f = fine.reshape(B, C25, n_split, rs, LANES)

    out = pl.pallas_call(
        _body_kernel,
        out_shape=jax.ShapeDtypeStruct((B, nb, n_split, rs, LANES), out_dtype),
        grid_spec=pltpu.PrefetchScalarGridSpec(
            num_scalar_prefetch=0,
            grid=(B, n_split),
            in_specs=[
                pl.BlockSpec((1, C2, 1, rs, LANES), lambda b, s: (b, 0, s, 0, 0)),
                pl.BlockSpec((1, C25, 1, rs, LANES), lambda b, s: (b, 0, s, 0, 0)),
            ],
            out_specs=pl.BlockSpec((1, nb, 1, rs, LANES), lambda b, s: (b, 0, s, 0, 0)),
        ),
        compiler_params=pltpu.CompilerParams(
            dimension_semantics=("parallel", "parallel")
        ),
    )(c, f)
    return out.reshape(B, nb, H, W)


# ----------------------------------------------------------------------------
# Full DenseNet.forward equivalent (model.inference stubbed by input logits)
# ----------------------------------------------------------------------------
def densenet_forward(img, coarse_logits, fine_logits):
    # TODO(synk): detectron2 DefaultPredictor model.inference (backbone + RPN +
    # ROI heads + DensePose head) is not translatable to a Pallas kernel; its
    # per-instance head outputs are taken as inputs (including the -10000.0
    # "no detection" fill).  The BGR flip + *255 preprocessing that would feed
    # it is provided by img_preprocess() but is intentionally NOT run in this
    # hot path (its only consumer is the untranslatable model).
    del img
    return densepose_body(coarse_logits, fine_logits)


def _reference(coarse, fine):
    c = jax.nn.softmax(coarse.astype(jnp.float32), axis=1)[:, 1:2]
    f = jax.nn.softmax(fine.astype(jnp.float32), axis=1) * c
    return f[:, list(BODY_INDEXES)]


if __name__ == "__main__":
    key = jax.random.PRNGKey(0)
    k_img, k_coarse, k_fine = jax.random.split(key, 3)

    B, H, W = 2, 112, 112                       # 112x112 is fixed by DensePose heads
    img = jax.random.uniform(k_img, (B, 3, 32, 32), dtype=jnp.float32)

    coarse = jax.random.normal(k_coarse, (B, 2, H, W), dtype=jnp.float32)
    fine = jax.random.normal(k_fine, (B, 25, H, W), dtype=jnp.float32)

    # mimic the "no detection" fallback of the PyTorch forward for batch item 1
    coarse = coarse.at[1].set(-10000.0)
    fine = fine.at[1].set(-10000.0)

    # f32 path: matches the PyTorch-style reference to 1e-5
    body = jax.block_until_ready(densenet_forward(img, coarse, fine))
    ref = _reference(coarse, fine)
    assert body.shape == (B, len(BODY_INDEXES), H, W), body.shape
    assert jnp.allclose(body, ref, atol=1e-5, rtol=1e-5)

    # bf16 input/output path (halves HBM traffic; kernel upcasts to f32
    # internally).  Compared against the f32 reference computed from the same
    # bf16-rounded logits; only the bf16 output rounding differs.
    coarse_bf = coarse.astype(jnp.bfloat16)
    fine_bf = fine.astype(jnp.bfloat16)
    body_bf = jax.block_until_ready(
        densepose_body(coarse_bf, fine_bf, out_dtype=jnp.bfloat16)
    )
    ref_bf = _reference(coarse_bf.astype(jnp.float32), fine_bf.astype(jnp.float32))
    assert jnp.allclose(body_bf.astype(jnp.float32), ref_bf, atol=1e-2)

    # exercise + verify the preprocessing kernel separately; its consumer
    # (model.inference) cannot be implemented here.
    pre = jax.block_until_ready(img_preprocess(img))
    pre_ref = img[:, ::-1, :, :] * 255.0
    assert jnp.allclose(pre, pre_ref, atol=1e-5, rtol=1e-5)

    print("KERNEL_OK")
</pallas_src>

<mosaic_0001>
module attributes {stable_mosaic.version = 11 : i64} {
  func.func @_body_kernel(%arg0: i32, %arg1: i32, %arg2: memref<1x2x1x98x128xf32, #tpu.memory_space<vmem>>, %arg3: memref<1x25x1x98x128xf32, #tpu.memory_space<vmem>>, %arg4: memref<1x14x1x98x128xf32, #tpu.memory_space<vmem>>) attributes {dimension_semantics = [#tpu.dimension_semantics<parallel>, #tpu.dimension_semantics<parallel>], iteration_bounds = array<i64: 2, 1>, scalar_prefetch = 0 : i64, scratch_operands = 0 : i64, tpu.core_type = #tpu.core_type<tc>, window_params = [{transform_indices = @transform_0, window_bounds = array<i64: 1, 2, 1, 98, 128>}, {transform_indices = @transform_1, window_bounds = array<i64: 1, 25, 1, 98, 128>}, {transform_indices = @transform_2, window_bounds = array<i64: 1, 14, 1, 98, 128>}]} {
    %c0 = arith.constant 0 : index
    %c0_0 = arith.constant 0 : index
    %c0_1 = arith.constant 0 : index
    %c0_2 = arith.constant 0 : index
    %c0_3 = arith.constant 0 : index
    %0 = vector.load %arg2[%c0, %c0_0, %c0_1, %c0_2, %c0_3] : memref<1x2x1x98x128xf32, #tpu.memory_space<vmem>>, vector<1x1x1x98x128xf32>
    %1 = vector.shape_cast %0 : vector<1x1x1x98x128xf32> to vector<98x128xf32>
    %c0_4 = arith.constant 0 : index
    %c1 = arith.constant 1 : index
    %c0_5 = arith.constant 0 : index
    %c0_6 = arith.constant 0 : index
    %c0_7 = arith.constant 0 : index
    %2 = vector.load %arg2[%c0_4, %c1, %c0_5, %c0_6, %c0_7] : memref<1x2x1x98x128xf32, #tpu.memory_space<vmem>>, vector<1x1x1x98x128xf32>
    %3 = vector.shape_cast %2 : vector<1x1x1x98x128xf32> to vector<98x128xf32>
    %4 = arith.maximumf %1, %3 : vector<98x128xf32>
    %5 = arith.subf %1, %4 : vector<98x128xf32>
    %6 = math.exp %5 : vector<98x128xf32>
    %7 = arith.subf %3, %4 : vector<98x128xf32>
    %8 = math.exp %7 : vector<98x128xf32>
    %9 = arith.addf %6, %8 : vector<98x128xf32>
    %c0_8 = arith.constant 0 : index
    %c0_9 = arith.constant 0 : index
    %c0_10 = arith.constant 0 : index
    %c0_11 = arith.constant 0 : index
    %c0_12 = arith.constant 0 : index
    %10 = vector.load %arg3[%c0_8, %c0_9, %c0_10, %c0_11, %c0_12] : memref<1x25x1x98x128xf32, #tpu.memory_space<vmem>>, vector<1x1x1x98x128xf32>
    %11 = vector.shape_cast %10 : vector<1x1x1x98x128xf32> to vector<98x128xf32>
    %c0_13 = arith.constant 0 : index
    %c1_14 = arith.constant 1 : index
    %c0_15 = arith.constant 0 : index
    %c0_16 = arith.constant 0 : index
    %c0_17 = arith.constant 0 : index
    %12 = vector.load %arg3[%c0_13, %c1_14, %c0_15, %c0_16, %c0_17] : memref<1x25x1x98x128xf32, #tpu.memory_space<vmem>>, vector<1x1x1x98x128xf32>
    %13 = vector.shape_cast %12 : vector<1x1x1x98x128xf32> to vector<98x128xf32>
    %14 = arith.maximumf %11, %13 : vector<98x128xf32>
    %c0_18 = arith.constant 0 : index
    %c2 = arith.constant 2 : index
    %c0_19 = arith.constant 0 : index
    %c0_20 = arith.constant 0 : index
    %c0_21 = arith.constant 0 : index
    %15 = vector.load %arg3[%c0_18, %c2, %c0_19, %c0_20, %c0_21] : memref<1x25x1x98x128xf32, #tpu.memory_space<vmem>>, vector<1x1x1x98x128xf32>
    %16 = vector.shape_cast %15 : vector<1x1x1x98x128xf32> to vector<98x128xf32>
    %17 = arith.maximumf %14, %16 : vector<98x128xf32>
    %c0_22 = arith.constant 0 : index
    %c3 = arith.constant 3 : index
    %c0_23 = arith.constant 0 : index
    %c0_24 = arith.constant 0 : index
    %c0_25 = arith.constant 0 : index
    %18 = vector.load %arg3[%c0_22, %c3, %c0_23, %c0_24, %c0_25] : memref<1x25x1x98x128xf32, #tpu.memory_space<vmem>>, vector<1x1x1x98x128xf32>
    %19 = vector.shape_cast %18 : vector<1x1x1x98x128xf32> to vector<98x128xf32>
    %20 = arith.maximumf %17, %19 : vector<98x128xf32>
    %c0_26 = arith.constant 0 : index
    %c4 = arith.constant 4 : index
    %c0_27 = arith.constant 0 : index
    %c0_28 = arith.constant 0 : index
    %c0_29 = arith.constant 0 : index
    %21 = vector.load %arg3[%c0_26, %c4, %c0_27, %c0_28, %c0_29] : memref<1x25x1x98x128xf32, #tpu.memory_space<vmem>>, vector<1x1x1x98x128xf32>
    %22 = vector.shape_cast %21 : vector<1x1x1x98x128xf32> to vector<98x128xf32>
    %23 = arith.maximumf %20, %22 : vector<98x128xf32>
    %c0_30 = arith.constant 0 : index
    %c5 = arith.constant 5 : index
    %c0_31 = arith.constant 0 : index
    %c0_32 = arith.constant 0 : index
    %c0_33 = arith.constant 0 : index
    %24 = vector.load %arg3[%c0_30, %c5, %c0_31, %c0_32, %c0_33] : memref<1x25x1x98x128xf32, #tpu.memory_space<vmem>>, vector<1x1x1x98x128xf32>
    %25 = vector.shape_cast %24 : vector<1x1x1x98x128xf32> to vector<98x128xf32>
    %26 = arith.maximumf %23, %25 : vector<98x128xf32>
    %c0_34 = arith.constant 0 : index
    %c6 = arith.constant 6 : index
    %c0_35 = arith.constant 0 : index
    %c0_36 = arith.constant 0 : index
    %c0_37 = arith.constant 0 : index
    %27 = vector.load %arg3[%c0_34, %c6, %c0_35, %c0_36, %c0_37] : memref<1x25x1x98x128xf32, #tpu.memory_space<vmem>>, vector<1x1x1x98x128xf32>
    %28 = vector.shape_cast %27 : vector<1x1x1x98x128xf32> to vector<98x128xf32>
    %29 = arith.maximumf %26, %28 : vector<98x128xf32>
    %c0_38 = arith.constant 0 : index
    %c7 = arith.constant 7 : index
    %c0_39 = arith.constant 0 : index
    %c0_40 = arith.constant 0 : index
    %c0_41 = arith.constant 0 : index
    %30 = vector.load %arg3[%c0_38, %c7, %c0_39, %c0_40, %c0_41] : memref<1x25x1x98x128xf32, #tpu.memory_space<vmem>>, vector<1x1x1x98x128xf32>
    %31 = vector.shape_cast %30 : vector<1x1x1x98x128xf32> to vector<98x128xf32>
    %32 = arith.maximumf %29, %31 : vector<98x128xf32>
    %c0_42 = arith.constant 0 : index
    %c8 = arith.constant 8 : index
    %c0_43 = arith.constant 0 : index
    %c0_44 = arith.constant 0 : index
    %c0_45 = arith.constant 0 : index
    %33 = vector.load %arg3[%c0_42, %c8, %c0_43, %c0_44, %c0_45] : memref<1x25x1x98x128xf32, #tpu.memory_space<vmem>>, vector<1x1x1x98x128xf32>
    %34 = vector.shape_cast %33 : vector<1x1x1x98x128xf32> to vector<98x128xf32>
    %35 = arith.maximumf %32, %34 : vector<98x128xf32>
    %c0_46 = arith.constant 0 : index
    %c9 = arith.constant 9 : index
    %c0_47 = arith.constant 0 : index
    %c0_48 = arith.constant 0 : index
    %c0_49 = arith.constant 0 : index
    %36 = vector.load %arg3[%c0_46, %c9, %c0_47, %c0_48, %c0_49] : memref<1x25x1x98x128xf32, #tpu.memory_space<vmem>>, vector<1x1x1x98x128xf32>
    %37 = vector.shape_cast %36 : vector<1x1x1x98x128xf32> to vector<98x128xf32>
    %38 = arith.maximumf %35, %37 : vector<98x128xf32>
    %c0_50 = arith.constant 0 : index
    %c10 = arith.constant 10 : index
    %c0_51 = arith.constant 0 : index
    %c0_52 = arith.constant 0 : index
    %c0_53 = arith.constant 0 : index
    %39 = vector.load %arg3[%c0_50, %c10, %c0_51, %c0_52, %c0_53] : memref<1x25x1x98x128xf32, #tpu.memory_space<vmem>>, vector<1x1x1x98x128xf32>
    %40 = vector.shape_cast %39 : vector<1x1x1x98x128xf32> to vector<98x128xf32>
    %41 = arith.maximumf %38, %40 : vector<98x128xf32>
    %c0_54 = arith.constant 0 : index
    %c11 = arith.constant 11 : index
    %c0_55 = arith.constant 0 : index
    %c0_56 = arith.constant 0 : index
    %c0_57 = arith.constant 0 : index
    %42 = vector.load %arg3[%c0_54, %c11, %c0_55, %c0_56, %c0_57] : memref<1x25x1x98x128xf32, #tpu.memory_space<vmem>>, vector<1x1x1x98x128xf32>
    %43 = vector.shape_cast %42 : vector<1x1x1x98x128xf32> to vector<98x128xf32>
    %44 = arith.maximumf %41, %43 : vector<98x128xf32>
    %c0_58 = arith.constant 0 : index
    %c12 = arith.constant 12 : index
    %c0_59 = arith.constant 0 : index
    %c0_60 = arith.constant 0 : index
    %c0_61 = arith.constant 0 : index
    %45 = vector.load %arg3[%c0_58, %c12, %c0_59, %c0_60, %c0_61] : memref<1x25x1x98x128xf32, #tpu.memory_space<vmem>>, vector<1x1x1x98x128xf32>
    %46 = vector.shape_cast %45 : vector<1x1x1x98x128xf32> to vector<98x128xf32>
    %47 = arith.maximumf %44, %46 : vector<98x128xf32>
    %c0_62 = arith.constant 0 : index
    %c13 = arith.constant 13 : index
    %c0_63 = arith.constant 0 : index
    %c0_64 = arith.constant 0 : index
    %c0_65 = arith.constant 0 : index
    %48 = vector.load %arg3[%c0_62, %c13, %c0_63, %c0_64, %c0_65] : memref<1x25x1x98x128xf32, #tpu.memory_space<vmem>>, vector<1x1x1x98x128xf32>
    %49 = vector.shape_cast %48 : vector<1x1x1x98x128xf32> to vector<98x128xf32>
    %50 = arith.maximumf %47, %49 : vector<98x128xf32>
    %c0_66 = arith.constant 0 : index
    %c14 = arith.constant 14 : index
    %c0_67 = arith.constant 0 : index
    %c0_68 = arith.constant 0 : index
    %c0_69 = arith.constant 0 : index
    %51 = vector.load %arg3[%c0_66, %c14, %c0_67, %c0_68, %c0_69] : memref<1x25x1x98x128xf32, #tpu.memory_space<vmem>>, vector<1x1x1x98x128xf32>
    %52 = vector.shape_cast %51 : vector<1x1x1x98x128xf32> to vector<98x128xf32>
    %53 = arith.maximumf %50, %52 : vector<98x128xf32>
    %c0_70 = arith.constant 0 : index
    %c15 = arith.constant 15 : index
    %c0_71 = arith.constant 0 : index
    %c0_72 = arith.constant 0 : index
    %c0_73 = arith.constant 0 : index
    %54 = vector.load %arg3[%c0_70, %c15, %c0_71, %c0_72, %c0_73] : memref<1x25x1x98x128xf32, #tpu.memory_space<vmem>>, vector<1x1x1x98x128xf32>
    %55 = vector.shape_cast %54 : vector<1x1x1x98x128xf32> to vector<98x128xf32>
    %56 = arith.maximumf %53, %55 : vector<98x128xf32>
    %c0_74 = arith.constant 0 : index
    %c16 = arith.constant 16 : index
    %c0_75 = arith.constant 0 : index
    %c0_76 = arith.constant 0 : index
    %c0_77 = arith.constant 0 : index
    %57 = vector.load %arg3[%c0_74, %c16, %c0_75, %c0_76, %c0_77] : memref<1x25x1x98x128xf32, #tpu.memory_space<vmem>>, vector<1x1x1x98x128xf32>
    %58 = vector.shape_cast %57 : vector<1x1x1x98x128xf32> to vector<98x128xf32>
    %59 = arith.maximumf %56, %58 : vector<98x128xf32>
    %c0_78 = arith.constant 0 : index
    %c17 = arith.constant 17 : index
    %c0_79 = arith.constant 0 : index
    %c0_80 = arith.constant 0 : index
    %c0_81 = arith.constant 0 : index
    %60 = vector.load %arg3[%c0_78, %c17, %c0_79, %c0_80, %c0_81] : memref<1x25x1x98x128xf32, #tpu.memory_space<vmem>>, vector<1x1x1x98x128xf32>
    %61 = vector.shape_cast %60 : vector<1x1x1x98x128xf32> to vector<98x128xf32>
    %62 = arith.maximumf %59, %61 : vector<98x128xf32>
    %c0_82 = arith.constant 0 : index
    %c18 = arith.constant 18 : index
    %c0_83 = arith.constant 0 : index
    %c0_84 = arith.constant 0 : index
    %c0_85 = arith.constant 0 : index
    %63 = vector.load %arg3[%c0_82, %c18, %c0_83, %c0_84, %c0_85] : memref<1x25x1x98x128xf32, #tpu.memory_space<vmem>>, vector<1x1x1x98x128xf32>
    %64 = vector.shape_cast %63 : vector<1x1x1x98x128xf32> to vector<98x128xf32>
    %65 = arith.maximumf %62, %64 : vector<98x128xf32>
    %c0_86 = arith.constant 0 : index
    %c19 = arith.constant 19 : index
    %c0_87 = arith.constant 0 : index
    %c0_88 = arith.constant 0 : index
    %c0_89 = arith.constant 0 : index
    %66 = vector.load %arg3[%c0_86, %c19, %c0_87, %c0_88, %c0_89] : memref<1x25x1x98x128xf32, #tpu.memory_space<vmem>>, vector<1x1x1x98x128xf32>
    %67 = vector.shape_cast %66 : vector<1x1x1x98x128xf32> to vector<98x128xf32>
    %68 = arith.maximumf %65, %67 : vector<98x128xf32>
    %c0_90 = arith.constant 0 : index
    %c20 = arith.constant 20 : index
    %c0_91 = arith.constant 0 : index
    %c0_92 = arith.constant 0 : index
    %c0_93 = arith.constant 0 : index
    %69 = vector.load %arg3[%c0_90, %c20, %c0_91, %c0_92, %c0_93] : memref<1x25x1x98x128xf32, #tpu.memory_space<vmem>>, vector<1x1x1x98x128xf32>
    %70 = vector.shape_cast %69 : vector<1x1x1x98x128xf32> to vector<98x128xf32>
    %71 = arith.maximumf %68, %70 : vector<98x128xf32>
    %c0_94 = arith.constant 0 : index
    %c21 = arith.constant 21 : index
    %c0_95 = arith.constant 0 : index
    %c0_96 = arith.constant 0 : index
    %c0_97 = arith.constant 0 : index
    %72 = vector.load %arg3[%c0_94, %c21, %c0_95, %c0_96, %c0_97] : memref<1x25x1x98x128xf32, #tpu.memory_space<vmem>>, vector<1x1x1x98x128xf32>
    %73 = vector.shape_cast %72 : vector<1x1x1x98x128xf32> to vector<98x128xf32>
    %74 = arith.maximumf %71, %73 : vector<98x128xf32>
    %c0_98 = arith.constant 0 : index
    %c22 = arith.constant 22 : index
    %c0_99 = arith.constant 0 : index
    %c0_100 = arith.constant 0 : index
    %c0_101 = arith.constant 0 : index
    %75 = vector.load %arg3[%c0_98, %c22, %c0_99, %c0_100, %c0_101] : memref<1x25x1x98x128xf32, #tpu.memory_space<vmem>>, vector<1x1x1x98x128xf32>
    %76 = vector.shape_cast %75 : vector<1x1x1x98x128xf32> to vector<98x128xf32>
    %77 = arith.maximumf %74, %76 : vector<98x128xf32>
    %c0_102 = arith.constant 0 : index
    %c23 = arith.constant 23 : index
    %c0_103 = arith.constant 0 : index
    %c0_104 = arith.constant 0 : index
    %c0_105 = arith.constant 0 : index
    %78 = vector.load %arg3[%c0_102, %c23, %c0_103, %c0_104, %c0_105] : memref<1x25x1x98x128xf32, #tpu.memory_space<vmem>>, vector<1x1x1x98x128xf32>
    %79 = vector.shape_cast %78 : vector<1x1x1x98x128xf32> to vector<98x128xf32>
    %80 = arith.maximumf %77, %79 : vector<98x128xf32>
    %c0_106 = arith.constant 0 : index
    %c24 = arith.constant 24 : index
    %c0_107 = arith.constant 0 : index
    %c0_108 = arith.constant 0 : index
    %c0_109 = arith.constant 0 : index
    %81 = vector.load %arg3[%c0_106, %c24, %c0_107, %c0_108, %c0_109] : memref<1x25x1x98x128xf32, #tpu.memory_space<vmem>>, vector<1x1x1x98x128xf32>
    %82 = vector.shape_cast %81 : vector<1x1x1x98x128xf32> to vector<98x128xf32>
    %83 = arith.maximumf %80, %82 : vector<98x128xf32>
    %c0_110 = arith.constant 0 : index
    %c0_111 = arith.constant 0 : index
    %c0_112 = arith.constant 0 : index
    %c0_113 = arith.constant 0 : index
    %c0_114 = arith.constant 0 : index
    %84 = vector.load %arg3[%c0_110, %c0_111, %c0_112, %c0_113, %c0_114] : memref<1x25x1x98x128xf32, #tpu.memory_space<vmem>>, vector<1x1x1x98x128xf32>
    %85 = vector.shape_cast %84 : vector<1x1x1x98x128xf32> to vector<98x128xf32>
    %86 = arith.subf %85, %83 : vector<98x128xf32>
    %87 = math.exp %86 : vector<98x128xf32>
    %c0_115 = arith.constant 0 : index
    %c1_116 = arith.constant 1 : index
    %c0_117 = arith.constant 0 : index
    %c0_118 = arith.constant 0 : index
    %c0_119 = arith.constant 0 : index
    %88 = vector.load %arg3[%c0_115, %c1_116, %c0_117, %c0_118, %c0_119] : memref<1x25x1x98x128xf32, #tpu.memory_space<vmem>>, vector<1x1x1x98x128xf32>
    %89 = vector.shape_cast %88 : vector<1x1x1x98x128xf32> to vector<98x128xf32>
    %90 = arith.subf %89, %83 : vector<98x128xf32>
    %91 = math.exp %90 : vector<98x128xf32>
    %92 = arith.addf %87, %91 : vector<98x128xf32>
    %c0_120 = arith.constant 0 : index
    %c2_121 = arith.constant 2 : index
    %c0_122 = arith.constant 0 : index
    %c0_123 = arith.constant 0 : index
    %c0_124 = arith.constant 0 : index
    %93 = vector.load %arg3[%c0_120, %c2_121, %c0_122, %c0_123, %c0_124] : memref<1x25x1x98x128xf32, #tpu.memory_space<vmem>>, vector<1x1x1x98x128xf32>
    %94 = vector.shape_cast %93 : vector<1x1x1x98x128xf32> to vector<98x128xf32>
    %95 = arith.subf %94, %83 : vector<98x128xf32>
    %96 = math.exp %95 : vector<98x128xf32>
    %97 = arith.addf %92, %96 : vector<98x128xf32>
    %c0_125 = arith.constant 0 : index
    %c3_126 = arith.constant 3 : index
    %c0_127 = arith.constant 0 : index
    %c0_128 = arith.constant 0 : index
    %c0_129 = arith.constant 0 : index
    %98 = vector.load %arg3[%c0_125, %c3_126, %c0_127, %c0_128, %c0_129] : memref<1x25x1x98x128xf32, #tpu.memory_space<vmem>>, vector<1x1x1x98x128xf32>
    %99 = vector.shape_cast %98 : vector<1x1x1x98x128xf32> to vector<98x128xf32>
    %100 = arith.subf %99, %83 : vector<98x128xf32>
    %101 = math.exp %100 : vector<98x128xf32>
    %102 = arith.addf %97, %101 : vector<98x128xf32>
    %c0_130 = arith.constant 0 : index
    %c4_131 = arith.constant 4 : index
    %c0_132 = arith.constant 0 : index
    %c0_133 = arith.constant 0 : index
    %c0_134 = arith.constant 0 : index
    %103 = vector.load %arg3[%c0_130, %c4_131, %c0_132, %c0_133, %c0_134] : memref<1x25x1x98x128xf32, #tpu.memory_space<vmem>>, vector<1x1x1x98x128xf32>
    %104 = vector.shape_cast %103 : vector<1x1x1x98x128xf32> to vector<98x128xf32>
    %105 = arith.subf %104, %83 : vector<98x128xf32>
    %106 = math.exp %105 : vector<98x128xf32>
    %107 = arith.addf %102, %106 : vector<98x128xf32>
    %c0_135 = arith.constant 0 : index
    %c5_136 = arith.constant 5 : index
    %c0_137 = arith.constant 0 : index
    %c0_138 = arith.constant 0 : index
    %c0_139 = arith.constant 0 : index
    %108 = vector.load %arg3[%c0_135, %c5_136, %c0_137, %c0_138, %c0_139] : memref<1x25x1x98x128xf32, #tpu.memory_space<vmem>>, vector<1x1x1x98x128xf32>
    %109 = vector.shape_cast %108 : vector<1x1x1x98x128xf32> to vector<98x128xf32>
    %110 = arith.subf %109, %83 : vector<98x128xf32>
    %111 = math.exp %110 : vector<98x128xf32>
    %112 = arith.addf %107, %111 : vector<98x128xf32>
    %c0_140 = arith.constant 0 : index
    %c6_141 = arith.constant 6 : index
    %c0_142 = arith.constant 0 : index
    %c0_143 = arith.constant 0 : index
    %c0_144 = arith.constant 0 : index
    %113 = vector.load %arg3[%c0_140, %c6_141, %c0_142, %c0_143, %c0_144] : memref<1x25x1x98x128xf32, #tpu.memory_space<vmem>>, vector<1x1x1x98x128xf32>
    %114 = vector.shape_cast %113 : vector<1x1x1x98x128xf32> to vector<98x128xf32>
    %115 = arith.subf %114, %83 : vector<98x128xf32>
    %116 = math.exp %115 : vector<98x128xf32>
    %117 = arith.addf %112, %116 : vector<98x128xf32>
    %c0_145 = arith.constant 0 : index
    %c7_146 = arith.constant 7 : index
    %c0_147 = arith.constant 0 : index
    %c0_148 = arith.constant 0 : index
    %c0_149 = arith.constant 0 : index
    %118 = vector.load %arg3[%c0_145, %c7_146, %c0_147, %c0_148, %c0_149] : memref<1x25x1x98x128xf32, #tpu.memory_space<vmem>>, vector<1x1x1x98x128xf32>
    %119 = vector.shape_cast %118 : vector<1x1x1x98x128xf32> to vector<98x128xf32>
    %120 = arith.subf %119, %83 : vector<98x128xf32>
    %121 = math.exp %120 : vector<98x128xf32>
    %122 = arith.addf %117, %121 : vector<98x128xf32>
    %c0_150 = arith.constant 0 : index
    %c8_151 = arith.constant 8 : index
    %c0_152 = arith.constant 0 : index
    %c0_153 = arith.constant 0 : index
    %c0_154 = arith.constant 0 : index
    %123 = vector.load %arg3[%c0_150, %c8_151, %c0_152, %c0_153, %c0_154] : memref<1x25x1x98x128xf32, #tpu.memory_space<vmem>>, vector<1x1x1x98x128xf32>
    %124 = vector.shape_cast %123 : vector<1x1x1x98x128xf32> to vector<98x128xf32>
    %125 = arith.subf %124, %83 : vector<98x128xf32>
    %126 = math.exp %125 : vector<98x128xf32>
    %127 = arith.addf %122, %126 : vector<98x128xf32>
    %c0_155 = arith.constant 0 : index
    %c9_156 = arith.constant 9 : index
    %c0_157 = arith.constant 0 : index
    %c0_158 = arith.constant 0 : index
    %c0_159 = arith.constant 0 : index
    %128 = vector.load %arg3[%c0_155, %c9_156, %c0_157, %c0_158, %c0_159] : memref<1x25x1x98x128xf32, #tpu.memory_space<vmem>>, vector<1x1x1x98x128xf32>
    %129 = vector.shape_cast %128 : vector<1x1x1x98x128xf32> to vector<98x128xf32>
    %130 = arith.subf %129, %83 : vector<98x128xf32>
    %131 = math.exp %130 : vector<98x128xf32>
    %132 = arith.addf %127, %131 : vector<98x128xf32>
    %c0_160 = arith.constant 0 : index
    %c10_161 = arith.constant 10 : index
    %c0_162 = arith.constant 0 : index
    %c0_163 = arith.constant 0 : index
    %c0_164 = arith.constant 0 : index
    %133 = vector.load %arg3[%c0_160, %c10_161, %c0_162, %c0_163, %c0_164] : memref<1x25x1x98x128xf32, #tpu.memory_space<vmem>>, vector<1x1x1x98x128xf32>
    %134 = vector.shape_cast %133 : vector<1x1x1x98x128xf32> to vector<98x128xf32>
    %135 = arith.subf %134, %83 : vector<98x128xf32>
    %136 = math.exp %135 : vector<98x128xf32>
    %137 = arith.addf %132, %136 : vector<98x128xf32>
    %c0_165 = arith.constant 0 : index
    %c11_166 = arith.constant 11 : index
    %c0_167 = arith.constant 0 : index
    %c0_168 = arith.constant 0 : index
    %c0_169 = arith.constant 0 : index
    %138 = vector.load %arg3[%c0_165, %c11_166, %c0_167, %c0_168, %c0_169] : memref<1x25x1x98x128xf32, #tpu.memory_space<vmem>>, vector<1x1x1x98x128xf32>
    %139 = vector.shape_cast %138 : vector<1x1x1x98x128xf32> to vector<98x128xf32>
    %140 = arith.subf %139, %83 : vector<98x128xf32>
    %141 = math.exp %140 : vector<98x128xf32>
    %142 = arith.addf %137, %141 : vector<98x128xf32>
    %c0_170 = arith.constant 0 : index
    %c12_171 = arith.constant 12 : index
    %c0_172 = arith.constant 0 : index
    %c0_173 = arith.constant 0 : index
    %c0_174 = arith.constant 0 : index
    %143 = vector.load %arg3[%c0_170, %c12_171, %c0_172, %c0_173, %c0_174] : memref<1x25x1x98x128xf32, #tpu.memory_space<vmem>>, vector<1x1x1x98x128xf32>
    %144 = vector.shape_cast %143 : vector<1x1x1x98x128xf32> to vector<98x128xf32>
    %145 = arith.subf %144, %83 : vector<98x128xf32>
    %146 = math.exp %145 : vector<98x128xf32>
    %147 = arith.addf %142, %146 : vector<98x128xf32>
    %c0_175 = arith.constant 0 : index
    %c13_176 = arith.constant 13 : index
    %c0_177 = arith.constant 0 : index
    %c0_178 = arith.constant 0 : index
    %c0_179 = arith.constant 0 : index
    %148 = vector.load %arg3[%c0_175, %c13_176, %c0_177, %c0_178, %c0_179] : memref<1x25x1x98x128xf32, #tpu.memory_space<vmem>>, vector<1x1x1x98x128xf32>
    %149 = vector.shape_cast %148 : vector<1x1x1x98x128xf32> to vector<98x128xf32>
    %150 = arith.subf %149, %83 : vector<98x128xf32>
    %151 = math.exp %150 : vector<98x128xf32>
    %152 = arith.addf %147, %151 : vector<98x128xf32>
    %c0_180 = arith.constant 0 : index
    %c14_181 = arith.constant 14 : index
    %c0_182 = arith.constant 0 : index
    %c0_183 = arith.constant 0 : index
    %c0_184 = arith.constant 0 : index
    %153 = vector.load %arg3[%c0_180, %c14_181, %c0_182, %c0_183, %c0_184] : memref<1x25x1x98x128xf32, #tpu.memory_space<vmem>>, vector<1x1x1x98x128xf32>
    %154 = vector.shape_cast %153 : vector<1x1x1x98x128xf32> to vector<98x128xf32>
    %155 = arith.subf %154, %83 : vector<98x128xf32>
    %156 = math.exp %155 : vector<98x128xf32>
    %157 = arith.addf %152, %156 : vector<98x128xf32>
    %c0_185 = arith.constant 0 : index
    %c15_186 = arith.constant 15 : index
    %c0_187 = arith.constant 0 : index
    %c0_188 = arith.constant 0 : index
    %c0_189 = arith.constant 0 : index
    %158 = vector.load %arg3[%c0_185, %c15_186, %c0_187, %c0_188, %c0_189] : memref<1x25x1x98x128xf32, #tpu.memory_space<vmem>>, vector<1x1x1x98x128xf32>
    %159 = vector.shape_cast %158 : vector<1x1x1x98x128xf32> to vector<98x128xf32>
    %160 = arith.subf %159, %83 : vector<98x128xf32>
    %161 = math.exp %160 : vector<98x128xf32>
    %162 = arith.addf %157, %161 : vector<98x128xf32>
    %c0_190 = arith.constant 0 : index
    %c16_191 = arith.constant 16 : index
    %c0_192 = arith.constant 0 : index
    %c0_193 = arith.constant 0 : index
    %c0_194 = arith.constant 0 : index
    %163 = vector.load %arg3[%c0_190, %c16_191, %c0_192, %c0_193, %c0_194] : memref<1x25x1x98x128xf32, #tpu.memory_space<vmem>>, vector<1x1x1x98x128xf32>
    %164 = vector.shape_cast %163 : vector<1x1x1x98x128xf32> to vector<98x128xf32>
    %165 = arith.subf %164, %83 : vector<98x128xf32>
    %166 = math.exp %165 : vector<98x128xf32>
    %167 = arith.addf %162, %166 : vector<98x128xf32>
    %c0_195 = arith.constant 0 : index
    %c17_196 = arith.constant 17 : index
    %c0_197 = arith.constant 0 : index
    %c0_198 = arith.constant 0 : index
    %c0_199 = arith.constant 0 : index
    %168 = vector.load %arg3[%c0_195, %c17_196, %c0_197, %c0_198, %c0_199] : memref<1x25x1x98x128xf32, #tpu.memory_space<vmem>>, vector<1x1x1x98x128xf32>
    %169 = vector.shape_cast %168 : vector<1x1x1x98x128xf32> to vector<98x128xf32>
    %170 = arith.subf %169, %83 : vector<98x128xf32>
    %171 = math.exp %170 : vector<98x128xf32>
    %172 = arith.addf %167, %171 : vector<98x128xf32>
    %c0_200 = arith.constant 0 : index
    %c18_201 = arith.constant 18 : index
    %c0_202 = arith.constant 0 : index
    %c0_203 = arith.constant 0 : index
    %c0_204 = arith.constant 0 : index
    %173 = vector.load %arg3[%c0_200, %c18_201, %c0_202, %c0_203, %c0_204] : memref<1x25x1x98x128xf32, #tpu.memory_space<vmem>>, vector<1x1x1x98x128xf32>
    %174 = vector.shape_cast %173 : vector<1x1x1x98x128xf32> to vector<98x128xf32>
    %175 = arith.subf %174, %83 : vector<98x128xf32>
    %176 = math.exp %175 : vector<98x128xf32>
    %177 = arith.addf %172, %176 : vector<98x128xf32>
    %c0_205 = arith.constant 0 : index
    %c19_206 = arith.constant 19 : index
    %c0_207 = arith.constant 0 : index
    %c0_208 = arith.constant 0 : index
    %c0_209 = arith.constant 0 : index
    %178 = vector.load %arg3[%c0_205, %c19_206, %c0_207, %c0_208, %c0_209] : memref<1x25x1x98x128xf32, #tpu.memory_space<vmem>>, vector<1x1x1x98x128xf32>
    %179 = vector.shape_cast %178 : vector<1x1x1x98x128xf32> to vector<98x128xf32>
    %180 = arith.subf %179, %83 : vector<98x128xf32>
    %181 = math.exp %180 : vector<98x128xf32>
    %182 = arith.addf %177, %181 : vector<98x128xf32>
    %c0_210 = arith.constant 0 : index
    %c20_211 = arith.constant 20 : index
    %c0_212 = arith.constant 0 : index
    %c0_213 = arith.constant 0 : index
    %c0_214 = arith.constant 0 : index
    %183 = vector.load %arg3[%c0_210, %c20_211, %c0_212, %c0_213, %c0_214] : memref<1x25x1x98x128xf32, #tpu.memory_space<vmem>>, vector<1x1x1x98x128xf32>
    %184 = vector.shape_cast %183 : vector<1x1x1x98x128xf32> to vector<98x128xf32>
    %185 = arith.subf %184, %83 : vector<98x128xf32>
    %186 = math.exp %185 : vector<98x128xf32>
    %187 = arith.addf %182, %186 : vector<98x128xf32>
    %c0_215 = arith.constant 0 : index
    %c21_216 = arith.constant 21 : index
    %c0_217 = arith.constant 0 : index
    %c0_218 = arith.constant 0 : index
    %c0_219 = arith.constant 0 : index
    %188 = vector.load %arg3[%c0_215, %c21_216, %c0_217, %c0_218, %c0_219] : memref<1x25x1x98x128xf32, #tpu.memory_space<vmem>>, vector<1x1x1x98x128xf32>
    %189 = vector.shape_cast %188 : vector<1x1x1x98x128xf32> to vector<98x128xf32>
    %190 = arith.subf %189, %83 : vector<98x128xf32>
    %191 = math.exp %190 : vector<98x128xf32>
    %192 = arith.addf %187, %191 : vector<98x128xf32>
    %c0_220 = arith.constant 0 : index
    %c22_221 = arith.constant 22 : index
    %c0_222 = arith.constant 0 : index
    %c0_223 = arith.constant 0 : index
    %c0_224 = arith.constant 0 : index
    %193 = vector.load %arg3[%c0_220, %c22_221, %c0_222, %c0_223, %c0_224] : memref<1x25x1x98x128xf32, #tpu.memory_space<vmem>>, vector<1x1x1x98x128xf32>
    %194 = vector.shape_cast %193 : vector<1x1x1x98x128xf32> to vector<98x128xf32>
    %195 = arith.subf %194, %83 : vector<98x128xf32>
    %196 = math.exp %195 : vector<98x128xf32>
    %197 = arith.addf %192, %196 : vector<98x128xf32>
    %c0_225 = arith.constant 0 : index
    %c23_226 = arith.constant 23 : index
    %c0_227 = arith.constant 0 : index
    %c0_228 = arith.constant 0 : index
    %c0_229 = arith.constant 0 : index
    %198 = vector.load %arg3[%c0_225, %c23_226, %c0_227, %c0_228, %c0_229] : memref<1x25x1x98x128xf32, #tpu.memory_space<vmem>>, vector<1x1x1x98x128xf32>
    %199 = vector.shape_cast %198 : vector<1x1x1x98x128xf32> to vector<98x128xf32>
    %200 = arith.subf %199, %83 : vector<98x128xf32>
    %201 = math.exp %200 : vector<98x128xf32>
    %202 = arith.addf %197, %201 : vector<98x128xf32>
    %c0_230 = arith.constant 0 : index
    %c24_231 = arith.constant 24 : index
    %c0_232 = arith.constant 0 : index
    %c0_233 = arith.constant 0 : index
    %c0_234 = arith.constant 0 : index
    %203 = vector.load %arg3[%c0_230, %c24_231, %c0_232, %c0_233, %c0_234] : memref<1x25x1x98x128xf32, #tpu.memory_space<vmem>>, vector<1x1x1x98x128xf32>
    %204 = vector.shape_cast %203 : vector<1x1x1x98x128xf32> to vector<98x128xf32>
    %205 = arith.subf %204, %83 : vector<98x128xf32>
    %206 = math.exp %205 : vector<98x128xf32>
    %207 = arith.addf %202, %206 : vector<98x128xf32>
    %208 = arith.mulf %9, %207 : vector<98x128xf32>
    %209 = tpu.reciprocal %208 {approx = true} : vector<98x128xf32> -> vector<98x128xf32>
    %210 = arith.mulf %208, %209 : vector<98x128xf32>
    %cst = arith.constant 2.000000e+00 : f32
    %211 = vector.broadcast %cst : f32 to vector<98x128xf32>
    %212 = arith.subf %211, %210 : vector<98x128xf32>
    %213 = arith.mulf %209, %212 : vector<98x128xf32>
    %214 = arith.mulf %8, %213 : vector<98x128xf32>
    %c0_235 = arith.constant 0 : index
    %c1_236 = arith.constant 1 : index
    %c0_237 = arith.constant 0 : index
    %c0_238 = arith.constant 0 : index
    %c0_239 = arith.constant 0 : index
    %215 = vector.load %arg3[%c0_235, %c1_236, %c0_237, %c0_238, %c0_239] : memref<1x25x1x98x128xf32, #tpu.memory_space<vmem>>, vector<1x1x1x98x128xf32>
    %216 = vector.shape_cast %215 : vector<1x1x1x98x128xf32> to vector<98x128xf32>
    %217 = arith.subf %216, %83 : vector<98x128xf32>
    %218 = math.exp %217 : vector<98x128xf32>
    %219 = arith.mulf %218, %214 : vector<98x128xf32>
    %c0_240 = arith.constant 0 : index
    %c0_241 = arith.constant 0 : index
    %c0_242 = arith.constant 0 : index
    %c0_243 = arith.constant 0 : index
    %c0_244 = arith.constant 0 : index
    %220 = vector.load %arg4[%c0_240, %c0_241, %c0_242, %c0_243, %c0_244] : memref<1x14x1x98x128xf32, #tpu.memory_space<vmem>>, vector<1x1x1x98x128xf32>
    %221 = vector.shape_cast %220 : vector<1x1x1x98x128xf32> to vector<98x128xf32>
    %222 = vector.shape_cast %219 : vector<98x128xf32> to vector<1x1x1x98x128xf32>
    tpu.vector_store %arg4[%c0_240, %c0_241, %c0_242, %c0_243, %c0_244], %222 {strides = array<i32>} : memref<1x14x1x98x128xf32, #tpu.memory_space<vmem>>, vector<1x1x1x98x128xf32>,
    %c0_245 = arith.constant 0 : index
    %c2_246 = arith.constant 2 : index
    %c0_247 = arith.constant 0 : index
    %c0_248 = arith.constant 0 : index
    %c0_249 = arith.constant 0 : index
    %223 = vector.load %arg3[%c0_245, %c2_246, %c0_247, %c0_248, %c0_249] : memref<1x25x1x98x128xf32, #tpu.memory_space<vmem>>, vector<1x1x1x98x128xf32>
    %224 = vector.shape_cast %223 : vector<1x1x1x98x128xf32> to vector<98x128xf32>
    %225 = arith.subf %224, %83 : vector<98x128xf32>
    %226 = math.exp %225 : vector<98x128xf32>
    %227 = arith.mulf %226, %214 : vector<98x128xf32>
    %c0_250 = arith.constant 0 : index
    %c1_251 = arith.constant 1 : index
    %c0_252 = arith.constant 0 : index
    %c0_253 = arith.constant 0 : index
    %c0_254 = arith.constant 0 : index
    %228 = vector.load %arg4[%c0_250, %c1_251, %c0_252, %c0_253, %c0_254] : memref<1x14x1x98x128xf32, #tpu.memory_space<vmem>>, vector<1x1x1x98x128xf32>
    %229 = vector.shape_cast %228 : vector<1x1x1x98x128xf32> to vector<98x128xf32>
    %230 = vector.shape_cast %227 : vector<98x128xf32> to vector<1x1x1x98x128xf32>
    tpu.vector_store %arg4[%c0_250, %c1_251, %c0_252, %c0_253, %c0_254], %230 {strides = array<i32>} : memref<1x14x1x98x128xf32, #tpu.memory_space<vmem>>, vector<1x1x1x98x128xf32>,
    %c0_255 = arith.constant 0 : index
    %c3_256 = arith.constant 3 : index
    %c0_257 = arith.constant 0 : index
    %c0_258 = arith.constant 0 : index
    %c0_259 = arith.constant 0 : index
    %231 = vector.load %arg3[%c0_255, %c3_256, %c0_257, %c0_258, %c0_259] : memref<1x25x1x98x128xf32, #tpu.memory_space<vmem>>, vector<1x1x1x98x128xf32>
    %232 = vector.shape_cast %231 : vector<1x1x1x98x128xf32> to vector<98x128xf32>
    %233 = arith.subf %232, %83 : vector<98x128xf32>
    %234 = math.exp %233 : vector<98x128xf32>
    %235 = arith.mulf %234, %214 : vector<98x128xf32>
    %c0_260 = arith.constant 0 : index
    %c2_261 = arith.constant 2 : index
    %c0_262 = arith.constant 0 : index
    %c0_263 = arith.constant 0 : index
    %c0_264 = arith.constant 0 : index
    %236 = vector.load %arg4[%c0_260, %c2_261, %c0_262, %c0_263, %c0_264] : memref<1x14x1x98x128xf32, #tpu.memory_space<vmem>>, vector<1x1x1x98x128xf32>
    %237 = vector.shape_cast %236 : vector<1x1x1x98x128xf32> to vector<98x128xf32>
    %238 = vector.shape_cast %235 : vector<98x128xf32> to vector<1x1x1x98x128xf32>
    tpu.vector_store %arg4[%c0_260, %c2_261, %c0_262, %c0_263, %c0_264], %238 {strides = array<i32>} : memref<1x14x1x98x128xf32, #tpu.memory_space<vmem>>, vector<1x1x1x98x128xf32>,
    %c0_265 = arith.constant 0 : index
    %c4_266 = arith.constant 4 : index
    %c0_267 = arith.constant 0 : index
    %c0_268 = arith.constant 0 : index
    %c0_269 = arith.constant 0 : index
    %239 = vector.load %arg3[%c0_265, %c4_266, %c0_267, %c0_268, %c0_269] : memref<1x25x1x98x128xf32, #tpu.memory_space<vmem>>, vector<1x1x1x98x128xf32>
    %240 = vector.shape_cast %239 : vector<1x1x1x98x128xf32> to vector<98x128xf32>
    %241 = arith.subf %240, %83 : vector<98x128xf32>
    %242 = math.exp %241 : vector<98x128xf32>
    %243 = arith.mulf %242, %214 : vector<98x128xf32>
    %c0_270 = arith.constant 0 : index
    %c3_271 = arith.constant 3 : index
    %c0_272 = arith.constant 0 : index
    %c0_273 = arith.constant 0 : index
    %c0_274 = arith.constant 0 : index
    %244 = vector.load %arg4[%c0_270, %c3_271, %c0_272, %c0_273, %c0_274] : memref<1x14x1x98x128xf32, #tpu.memory_space<vmem>>, vector<1x1x1x98x128xf32>
    %245 = vector.shape_cast %244 : vector<1x1x1x98x128xf32> to vector<98x128xf32>
    %246 = vector.shape_cast %243 : vector<98x128xf32> to vector<1x1x1x98x128xf32>
    tpu.vector_store %arg4[%c0_270, %c3_271, %c0_272, %c0_273, %c0_274], %246 {strides = array<i32>} : memref<1x14x1x98x128xf32, #tpu.memory_space<vmem>>, vector<1x1x1x98x128xf32>,
    %c0_275 = arith.constant 0 : index
    %c15_276 = arith.constant 15 : index
    %c0_277 = arith.constant 0 : index
    %c0_278 = arith.constant 0 : index
    %c0_279 = arith.constant 0 : index
    %247 = vector.load %arg3[%c0_275, %c15_276, %c0_277, %c0_278, %c0_279] : memref<1x25x1x98x128xf32, #tpu.memory_space<vmem>>, vector<1x1x1x98x128xf32>
    %248 = vector.shape_cast %247 : vector<1x1x1x98x128xf32> to vector<98x128xf32>
    %249 = arith.subf %248, %83 : vector<98x128xf32>
    %250 = math.exp %249 : vector<98x128xf32>
    %251 = arith.mulf %250, %214 : vector<98x128xf32>
    %c0_280 = arith.constant 0 : index
    %c4_281 = arith.constant 4 : index
    %c0_282 = arith.constant 0 : index
    %c0_283 = arith.constant 0 : index
    %c0_284 = arith.constant 0 : index
    %252 = vector.load %arg4[%c0_280, %c4_281, %c0_282, %c0_283, %c0_284] : memref<1x14x1x98x128xf32, #tpu.memory_space<vmem>>, vector<1x1x1x98x128xf32>
    %253 = vector.shape_cast %252 : vector<1x1x1x98x128xf32> to vector<98x128xf32>
    %254 = vector.shape_cast %251 : vector<98x128xf32> to vector<1x1x1x98x128xf32>
    tpu.vector_store %arg4[%c0_280, %c4_281, %c0_282, %c0_283, %c0_284], %254 {strides = array<i32>} : memref<1x14x1x98x128xf32, #tpu.memory_space<vmem>>, vector<1x1x1x98x128xf32>,
    %c0_285 = arith.constant 0 : index
    %c16_286 = arith.constant 16 : index
    %c0_287 = arith.constant 0 : index
    %c0_288 = arith.constant 0 : index
    %c0_289 = arith.constant 0 : index
    %255 = vector.load %arg3[%c0_285, %c16_286, %c0_287, %c0_288, %c0_289] : memref<1x25x1x98x128xf32, #tpu.memory_space<vmem>>, vector<1x1x1x98x128xf32>
    %256 = vector.shape_cast %255 : vector<1x1x1x98x128xf32> to vector<98x128xf32>
    %257 = arith.subf %256, %83 : vector<98x128xf32>
    %258 = math.exp %257 : vector<98x128xf32>
    %259 = arith.mulf %258, %214 : vector<98x128xf32>
    %c0_290 = arith.constant 0 : index
    %c5_291 = arith.constant 5 : index
    %c0_292 = arith.constant 0 : index
    %c0_293 = arith.constant 0 : index
    %c0_294 = arith.constant 0 : index
    %260 = vector.load %arg4[%c0_290, %c5_291, %c0_292, %c0_293, %c0_294] : memref<1x14x1x98x128xf32, #tpu.memory_space<vmem>>, vector<1x1x1x98x128xf32>
    %261 = vector.shape_cast %260 : vector<1x1x1x98x128xf32> to vector<98x128xf32>
    %262 = vector.shape_cast %259 : vector<98x128xf32> to vector<1x1x1x98x128xf32>
    tpu.vector_store %arg4[%c0_290, %c5_291, %c0_292, %c0_293, %c0_294], %262 {strides = array<i32>} : memref<1x14x1x98x128xf32, #tpu.memory_space<vmem>>, vector<1x1x1x98x128xf32>,
    %c0_295 = arith.constant 0 : index
    %c17_296 = arith.constant 17 : index
    %c0_297 = arith.constant 0 : index
    %c0_298 = arith.constant 0 : index
    %c0_299 = arith.constant 0 : index
    %263 = vector.load %arg3[%c0_295, %c17_296, %c0_297, %c0_298, %c0_299] : memref<1x25x1x98x128xf32, #tpu.memory_space<vmem>>, vector<1x1x1x98x128xf32>
    %264 = vector.shape_cast %263 : vector<1x1x1x98x128xf32> to vector<98x128xf32>
    %265 = arith.subf %264, %83 : vector<98x128xf32>
    %266 = math.exp %265 : vector<98x128xf32>
    %267 = arith.mulf %266, %214 : vector<98x128xf32>
    %c0_300 = arith.constant 0 : index
    %c6_301 = arith.constant 6 : index
    %c0_302 = arith.constant 0 : index
    %c0_303 = arith.constant 0 : index
    %c0_304 = arith.constant 0 : index
    %268 = vector.load %arg4[%c0_300, %c6_301, %c0_302, %c0_303, %c0_304] : memref<1x14x1x98x128xf32, #tpu.memory_space<vmem>>, vector<1x1x1x98x128xf32>
    %269 = vector.shape_cast %268 : vector<1x1x1x98x128xf32> to vector<98x128xf32>
    %270 = vector.shape_cast %267 : vector<98x128xf32> to vector<1x1x1x98x128xf32>
    tpu.vector_store %arg4[%c0_300, %c6_301, %c0_302, %c0_303, %c0_304], %270 {strides = array<i32>} : memref<1x14x1x98x128xf32, #tpu.memory_space<vmem>>, vector<1x1x1x98x128xf32>,
    %c0_305 = arith.constant 0 : index
    %c18_306 = arith.constant 18 : index
    %c0_307 = arith.constant 0 : index
    %c0_308 = arith.constant 0 : index
    %c0_309 = arith.constant 0 : index
    %271 = vector.load %arg3[%c0_305, %c18_306, %c0_307, %c0_308, %c0_309] : memref<1x25x1x98x128xf32, #tpu.memory_space<vmem>>, vector<1x1x1x98x128xf32>
    %272 = vector.shape_cast %271 : vector<1x1x1x98x128xf32> to vector<98x128xf32>
    %273 = arith.subf %272, %83 : vector<98x128xf32>
    %274 = math.exp %273 : vector<98x128xf32>
    %275 = arith.mulf %274, %214 : vector<98x128xf32>
    %c0_310 = arith.constant 0 : index
    %c7_311 = arith.constant 7 : index
    %c0_312 = arith.constant 0 : index
    %c0_313 = arith.constant 0 : index
    %c0_314 = arith.constant 0 : index
    %276 = vector.load %arg4[%c0_310, %c7_311, %c0_312, %c0_313, %c0_314] : memref<1x14x1x98x128xf32, #tpu.memory_space<vmem>>, vector<1x1x1x98x128xf32>
    %277 = vector.shape_cast %276 : vector<1x1x1x98x128xf32> to vector<98x128xf32>
    %278 = vector.shape_cast %275 : vector<98x128xf32> to vector<1x1x1x98x128xf32>
    tpu.vector_store %arg4[%c0_310, %c7_311, %c0_312, %c0_313, %c0_314], %278 {strides = array<i32>} : memref<1x14x1x98x128xf32, #tpu.memory_space<vmem>>, vector<1x1x1x98x128xf32>,
    %c0_315 = arith.constant 0 : index
    %c19_316 = arith.constant 19 : index
    %c0_317 = arith.constant 0 : index
    %c0_318 = arith.constant 0 : index
    %c0_319 = arith.constant 0 : index
    %279 = vector.load %arg3[%c0_315, %c19_316, %c0_317, %c0_318, %c0_319] : memref<1x25x1x98x128xf32, #tpu.memory_space<vmem>>, vector<1x1x1x98x128xf32>
    %280 = vector.shape_cast %279 : vector<1x1x1x98x128xf32> to vector<98x128xf32>
    %281 = arith.subf %280, %83 : vector<98x128xf32>
    %282 = math.exp %281 : vector<98x128xf32>
    %283 = arith.mulf %282, %214 : vector<98x128xf32>
    %c0_320 = arith.constant 0 : index
    %c8_321 = arith.constant 8 : index
    %c0_322 = arith.constant 0 : index
    %c0_323 = arith.constant 0 : index
    %c0_324 = arith.constant 0 : index
    %284 = vector.load %arg4[%c0_320, %c8_321, %c0_322, %c0_323, %c0_324] : memref<1x14x1x98x128xf32, #tpu.memory_space<vmem>>, vector<1x1x1x98x128xf32>
    %285 = vector.shape_cast %284 : vector<1x1x1x98x128xf32> to vector<98x128xf32>
    %286 = vector.shape_cast %283 : vector<98x128xf32> to vector<1x1x1x98x128xf32>
    tpu.vector_store %arg4[%c0_320, %c8_321, %c0_322, %c0_323, %c0_324], %286 {strides = array<i32>} : memref<1x14x1x98x128xf32, #tpu.memory_space<vmem>>, vector<1x1x1x98x128xf32>,
    %c0_325 = arith.constant 0 : index
    %c20_326 = arith.constant 20 : index
    %c0_327 = arith.constant 0 : index
    %c0_328 = arith.constant 0 : index
    %c0_329 = arith.constant 0 : index
    %287 = vector.load %arg3[%c0_325, %c20_326, %c0_327, %c0_328, %c0_329] : memref<1x25x1x98x128xf32, #tpu.memory_space<vmem>>, vector<1x1x1x98x128xf32>
    %288 = vector.shape_cast %287 : vector<1x1x1x98x128xf32> to vector<98x128xf32>
    %289 = arith.subf %288, %83 : vector<98x128xf32>
    %290 = math.exp %289 : vector<98x128xf32>
    %291 = arith.mulf %290, %214 : vector<98x128xf32>
    %c0_330 = arith.constant 0 : index
    %c9_331 = arith.constant 9 : index
    %c0_332 = arith.constant 0 : index
    %c0_333 = arith.constant 0 : index
    %c0_334 = arith.constant 0 : index
    %292 = vector.load %arg4[%c0_330, %c9_331, %c0_332, %c0_333, %c0_334] : memref<1x14x1x98x128xf32, #tpu.memory_space<vmem>>, vector<1x1x1x98x128xf32>
    %293 = vector.shape_cast %292 : vector<1x1x1x98x128xf32> to vector<98x128xf32>
    %294 = vector.shape_cast %291 : vector<98x128xf32> to vector<1x1x1x98x128xf32>
    tpu.vector_store %arg4[%c0_330, %c9_331, %c0_332, %c0_333, %c0_334], %294 {strides = array<i32>} : memref<1x14x1x98x128xf32, #tpu.memory_space<vmem>>, vector<1x1x1x98x128xf32>,
    %c0_335 = arith.constant 0 : index
    %c21_336 = arith.constant 21 : index
    %c0_337 = arith.constant 0 : index
    %c0_338 = arith.constant 0 : index
    %c0_339 = arith.constant 0 : index
    %295 = vector.load %arg3[%c0_335, %c21_336, %c0_337, %c0_338, %c0_339] : memref<1x25x1x98x128xf32, #tpu.memory_space<vmem>>, vector<1x1x1x98x128xf32>
    %296 = vector.shape_cast %295 : vector<1x1x1x98x128xf32> to vector<98x128xf32>
    %297 = arith.subf %296, %83 : vector<98x128xf32>
    %298 = math.exp %297 : vector<98x128xf32>
    %299 = arith.mulf %298, %214 : vector<98x128xf32>
    %c0_340 = arith.constant 0 : index
    %c10_341 = arith.constant 10 : index
    %c0_342 = arith.constant 0 : index
    %c0_343 = arith.constant 0 : index
    %c0_344 = arith.constant 0 : index
    %300 = vector.load %arg4[%c0_340, %c10_341, %c0_342, %c0_343, %c0_344] : memref<1x14x1x98x128xf32, #tpu.memory_space<vmem>>, vector<1x1x1x98x128xf32>
    %301 = vector.shape_cast %300 : vector<1x1x1x98x128xf32> to vector<98x128xf32>
    %302 = vector.shape_cast %299 : vector<98x128xf32> to vector<1x1x1x98x128xf32>
    tpu.vector_store %arg4[%c0_340, %c10_341, %c0_342, %c0_343, %c0_344], %302 {strides = array<i32>} : memref<1x14x1x98x128xf32, #tpu.memory_space<vmem>>, vector<1x1x1x98x128xf32>,
    %c0_345 = arith.constant 0 : index
    %c22_346 = arith.constant 22 : index
    %c0_347 = arith.constant 0 : index
    %c0_348 = arith.constant 0 : index
    %c0_349 = arith.constant 0 : index
    %303 = vector.load %arg3[%c0_345, %c22_346, %c0_347, %c0_348, %c0_349] : memref<1x25x1x98x128xf32, #tpu.memory_space<vmem>>, vector<1x1x1x98x128xf32>
    %304 = vector.shape_cast %303 : vector<1x1x1x98x128xf32> to vector<98x128xf32>
    %305 = arith.subf %304, %83 : vector<98x128xf32>
    %306 = math.exp %305 : vector<98x128xf32>
    %307 = arith.mulf %306, %214 : vector<98x128xf32>
    %c0_350 = arith.constant 0 : index
    %c11_351 = arith.constant 11 : index
    %c0_352 = arith.constant 0 : index
    %c0_353 = arith.constant 0 : index
    %c0_354 = arith.constant 0 : index
    %308 = vector.load %arg4[%c0_350, %c11_351, %c0_352, %c0_353, %c0_354] : memref<1x14x1x98x128xf32, #tpu.memory_space<vmem>>, vector<1x1x1x98x128xf32>
    %309 = vector.shape_cast %308 : vector<1x1x1x98x128xf32> to vector<98x128xf32>
    %310 = vector.shape_cast %307 : vector<98x128xf32> to vector<1x1x1x98x128xf32>
    tpu.vector_store %arg4[%c0_350, %c11_351, %c0_352, %c0_353, %c0_354], %310 {strides = array<i32>} : memref<1x14x1x98x128xf32, #tpu.memory_space<vmem>>, vector<1x1x1x98x128xf32>,
    %c0_355 = arith.constant 0 : index
    %c23_356 = arith.constant 23 : index
    %c0_357 = arith.constant 0 : index
    %c0_358 = arith.constant 0 : index
    %c0_359 = arith.constant 0 : index
    %311 = vector.load %arg3[%c0_355, %c23_356, %c0_357, %c0_358, %c0_359] : memref<1x25x1x98x128xf32, #tpu.memory_space<vmem>>, vector<1x1x1x98x128xf32>
    %312 = vector.shape_cast %311 : vector<1x1x1x98x128xf32> to vector<98x128xf32>
    %313 = arith.subf %312, %83 : vector<98x128xf32>
    %314 = math.exp %313 : vector<98x128xf32>
    %315 = arith.mulf %314, %214 : vector<98x128xf32>
    %c0_360 = arith.constant 0 : index
    %c12_361 = arith.constant 12 : index
    %c0_362 = arith.constant 0 : index
    %c0_363 = arith.constant 0 : index
    %c0_364 = arith.constant 0 : index
    %316 = vector.load %arg4[%c0_360, %c12_361, %c0_362, %c0_363, %c0_364] : memref<1x14x1x98x128xf32, #tpu.memory_space<vmem>>, vector<1x1x1x98x128xf32>
    %317 = vector.shape_cast %316 : vector<1x1x1x98x128xf32> to vector<98x128xf32>
    %318 = vector.shape_cast %315 : vector<98x128xf32> to vector<1x1x1x98x128xf32>
    tpu.vector_store %arg4[%c0_360, %c12_361, %c0_362, %c0_363, %c0_364], %318 {strides = array<i32>} : memref<1x14x1x98x128xf32, #tpu.memory_space<vmem>>, vector<1x1x1x98x128xf32>,
    %c0_365 = arith.constant 0 : index
    %c24_366 = arith.constant 24 : index
    %c0_367 = arith.constant 0 : index
    %c0_368 = arith.constant 0 : index
    %c0_369 = arith.constant 0 : index
    %319 = vector.load %arg3[%c0_365, %c24_366, %c0_367, %c0_368, %c0_369] : memref<1x25x1x98x128xf32, #tpu.memory_space<vmem>>, vector<1x1x1x98x128xf32>
    %320 = vector.shape_cast %319 : vector<1x1x1x98x128xf32> to vector<98x128xf32>
    %321 = arith.subf %320, %83 : vector<98x128xf32>
    %322 = math.exp %321 : vector<98x128xf32>
    %323 = arith.mulf %322, %214 : vector<98x128xf32>
    %c0_370 = arith.constant 0 : index
    %c13_371 = arith.constant 13 : index
    %c0_372 = arith.constant 0 : index
    %c0_373 = arith.constant 0 : index
    %c0_374 = arith.constant 0 : index
    %324 = vector.load %arg4[%c0_370, %c13_371, %c0_372, %c0_373, %c0_374] : memref<1x14x1x98x128xf32, #tpu.memory_space<vmem>>, vector<1x1x1x98x128xf32>
    %325 = vector.shape_cast %324 : vector<1x1x1x98x128xf32> to vector<98x128xf32>
    %326 = vector.shape_cast %323 : vector<98x128xf32> to vector<1x1x1x98x128xf32>
    tpu.vector_store %arg4[%c0_370, %c13_371, %c0_372, %c0_373, %c0_374], %326 {strides = array<i32>} : memref<1x14x1x98x128xf32, #tpu.memory_space<vmem>>, vector<1x1x1x98x128xf32>,
    return
  }
  func.func @transform_0(%arg0: i32, %arg1: i32) -> (i32, i32, i32, i32, i32) {
    %c0_i32 = arith.constant 0 : i32
    %c0_i32_0 = arith.constant 0 : i32
    %c0_i32_1 = arith.constant 0 : i32
    %c0_i32_2 = arith.constant 0 : i32
    return %arg0, %c0_i32, %arg1, %c0_i32_0, %c0_i32_1 : i32, i32, i32, i32, i32
  }
  func.func @transform_1(%arg0: i32, %arg1: i32) -> (i32, i32, i32, i32, i32) {
    %c0_i32 = arith.constant 0 : i32
    %c0_i32_0 = arith.constant 0 : i32
    %c0_i32_1 = arith.constant 0 : i32
    %c0_i32_2 = arith.constant 0 : i32
    return %arg0, %c0_i32, %arg1, %c0_i32_0, %c0_i32_1 : i32, i32, i32, i32, i32
  }
  func.func @transform_2(%arg0: i32, %arg1: i32) -> (i32, i32, i32, i32, i32) {
    %c0_i32 = arith.constant 0 : i32
    %c0_i32_0 = arith.constant 0 : i32
    %c0_i32_1 = arith.constant 0 : i32
    %c0_i32_2 = arith.constant 0 : i32
    return %arg0, %c0_i32, %arg1, %c0_i32_0, %c0_i32_1 : i32, i32, i32, i32, i32
  }
}

</mosaic_0001>

<llo_original>
// kernel: tpu_custom_call.1
$region0: #{tpu_custom_call.1}
  #allocation0 [shape = 'u32[]', space=smem, size = 0x4, offset = 0x4, fixed_abs, tag = 'smem constant byte address 0x4 - core index']
  #allocation1 [shape = 'u32[72,128]{1,0:T(1,128)}', space=vmem, size = 0x9000, scoped, tag = 'internal scratch']
  %s0 = inlined_call_operand.vmem [shape: f32[2,2,1,98,128], index: 0, kind: input, shape index: {}]
  %s1 = inlined_call_operand.vmem [shape: f32[2,25,1,98,128], index: 1, kind: input, shape index: {}]
  %s2 = inlined_call_operand.vmem [shape: f32[2,14,1,98,128], index: 2, kind: output, shape index: {}]
  %s3 = sld [smem:[#allocation0]]
  $region41: #{tpu_custom_call.1} parent=0
    _
  %s5 = ssub.s32 1, %s3
  %s6 = scalar_select 0, %s5, %s3
  loop: start=0, step=1, limit=4
  $region2: #{tpu_custom_call.1} parent=0 // loop_pre_header
    _
  $region3: #{tpu_custom_call.1} parent=0 // loop_header
    %s8 = sphi 0, %s12
    %p9 = scmp.ge.s32.totalorder %s8, 4
    %s15 = sphi 0, %s27
    %s16 = sphi 0, %s23
    %s17 = sphi 0, %s15
    %s18 = sphi 0, %s16
    %s19 = sphi 0, %s17
    %s20 = sphi 0, %s18
    %s32 = sphi 0, %s34
    %s35 = sphi 0, %s32
    %s36 = sphi 0, %s35
    %s52 = sphi 0, %s36
    %s60 = sphi 0, %s62
    %s63 = sphi 0, %s60
    %s64 = sphi 0, %s63
    %s80 = sphi 0, %s64
    %s88 = sphi 0, %s90
    %s91 = sphi 0, %s88
    %s92 = sphi 0, %s91
    %s108 = sphi 0, %s92
  $region4: #{tpu_custom_call.1} parent=0 // loop_header_branch
    %11 = sbr.rel (%p9) target = $region8
  $region5: #{tpu_custom_call.1} parent=0 // loop_body
    %s13 = ssub.s32 %s8, 1
    %s14 = ssub.s32 %s8, 2
    %s21 = sadd.s32 1, %s16
    %p22 = scmp.ge.s32.totalorder %s21, 1
    %s23 = scalar_select %p22, 0, %s21
    %s24 = sadd.s32 1, %s15
    %s25 = scalar_select %p22, %s24, %s15
    %p26 = scmp.ge.s32.totalorder %s25, 2
    %s27 = scalar_select %p26, 0, %s25
    %s28 = ssub.s32 %s15, %s27
    %s29 = ssub.s32 %s16, %s23
    %s30 = sor.u32 %s28, %s29
    %p31 = scmp.eq.s32.totalorder %s30, 0
    %s33 = sadd.s32 %s32, 1
    %s34 = scalar_select %p31, %s32, %s33
    %p37 = pneg %p31
    %p38 = scmp.eq.s32.totalorder %s8, 1
    %p39 = por %p37, %p38
    %p40 = scmp.ne.s32.totalorder %s32, %s35
    %p41 = scmp.eq.s32.totalorder %s8, 0
    %p42 = por %p40, %p41
    %p43 = scmp.ne.s32.totalorder %s32, %s35
    %p44 = scmp.eq.s32.totalorder %s13, 1
    %p45 = por %p43, %p44
    %p46 = scmp.ne.s32.totalorder %s35, %s36
    %p47 = scmp.eq.s32.totalorder %s13, 0
    %p48 = por %p46, %p47
    %p49 = scmp.ne.s32.totalorder %s35, %s36
    %p50 = scmp.eq.s32.totalorder %s14, 1
    %p51 = por %p49, %p50
    %p53 = scmp.ne.s32.totalorder %s36, %s52
    %p54 = scmp.eq.s32.totalorder %s14, 0
    %p55 = por %p53, %p54
    %s56 = ssub.s32 %s15, %s27
    %s57 = ssub.s32 %s16, %s23
    %s58 = sor.u32 %s56, %s57
    %p59 = scmp.eq.s32.totalorder %s58, 0
    %s61 = sadd.s32 %s60, 1
    %s62 = scalar_select %p59, %s60, %s61
    %p65 = pneg %p59
    %p66 = scmp.eq.s32.totalorder %s8, 1
    %p67 = por %p65, %p66
    %p68 = scmp.ne.s32.totalorder %s60, %s63
    %p69 = scmp.eq.s32.totalorder %s8, 0
    %p70 = por %p68, %p69
    %p71 = scmp.ne.s32.totalorder %s60, %s63
    %p72 = scmp.eq.s32.totalorder %s13, 1
    %p73 = por %p71, %p72
    %p74 = scmp.ne.s32.totalorder %s63, %s64
    %p75 = scmp.eq.s32.totalorder %s13, 0
    %p76 = por %p74, %p75
    %p77 = scmp.ne.s32.totalorder %s63, %s64
    %p78 = scmp.eq.s32.totalorder %s14, 1
    %p79 = por %p77, %p78
    %p81 = scmp.ne.s32.totalorder %s64, %s80
    %p82 = scmp.eq.s32.totalorder %s14, 0
    %p83 = por %p81, %p82
    %s84 = ssub.s32 %s15, %s27
    %s85 = ssub.s32 %s16, %s23
    %s86 = sor.u32 %s84, %s85
    %p87 = scmp.eq.s32.totalorder %s86, 0
    %s89 = sadd.s32 %s88, 1
    %s90 = scalar_select %p87, %s88, %s89
    %p93 = pneg %p87
    %p94 = scmp.eq.s32.totalorder %s8, 1
    %p95 = por %p93, %p94
    %p96 = scmp.ne.s32.totalorder %s88, %s91
    %p97 = scmp.eq.s32.totalorder %s8, 0
    %p98 = por %p96, %p97
    %p99 = scmp.ne.s32.totalorder %s88, %s91
    %p100 = scmp.eq.s32.totalorder %s13, 1
    %p101 = por %p99, %p100
    %p102 = scmp.ne.s32.totalorder %s91, %s92
    %p103 = scmp.eq.s32.totalorder %s13, 0
    %p104 = por %p102, %p103
    %p105 = scmp.ne.s32.totalorder %s91, %s92
    %p106 = scmp.eq.s32.totalorder %s14, 1
    %p107 = por %p105, %p106
    %p109 = scmp.ne.s32.totalorder %s92, %s108
    %p110 = scmp.eq.s32.totalorder %s14, 0
    %p111 = por %p109, %p110
    %p112 = scmp.le.s32.totalorder 1, %s8
    %p113 = scmp.lt.s32.totalorder %s8, 3
    %p114 = pnand %p112, %p113
    %p115 = pneg %p114
    // Predicated region
    $region9: #{tpu_custom_call.1} parent=5 // pred_check
      _
    $region10: #{tpu_custom_call.1} parent=5 // pred_check_branch
      %117 = sbr.rel (%p114) target = $region12
    $region11: #{tpu_custom_call.1} parent=5 // pred_region
      %s118 = ssub.s32 %s8, 1
    $region12: #{tpu_custom_call.1} parent=5 // pred_fallthru
      _
    %p119 = scmp.lt.s32.totalorder %s8, 2
    // Predicated region
    $region13: #{tpu_custom_call.1} parent=5 // pred_check
      %p120 = pneg %p119
    $region14: #{tpu_custom_call.1} parent=5 // pred_check_branch
      %122 = sbr.rel (%p120) target = $region16
    $region15: #{tpu_custom_call.1} parent=5 // pred_region
      // Predicated region
      $region17: #{tpu_custom_call.1} parent=15 // pred_check
        %p123 = pneg %p42
      $region18: #{tpu_custom_call.1} parent=15 // pred_check_branch
        %125 = sbr.rel (%p123) target = $region20
      $region19: #{tpu_custom_call.1} parent=15 // pred_region
        %p126 = scmp.lt.s32.totalorder %s15, 1
        %s127 = scalar_select %p126, %s15, 1
        %p128 = scmp.lt.s32.totalorder %s16, 0
        %s129 = scalar_select %p128, %s16, 0
        %s130 = smul.addr %s129, 13
        %s131 = smul.addr %s127, 26
        %s132 = sadd.s32 %s130, %s131
        %s133 = smul.addr %s132, 8
        %s134 = scalar_lea.vmem %s0, %s133
      $region20: #{tpu_custom_call.1} parent=15 // pred_fallthru
        _
      // Predicated region
      $region21: #{tpu_custom_call.1} parent=15 // pred_check
        %p135 = pneg %p70
      $region22: #{tpu_custom_call.1} parent=15 // pred_check_branch
        %137 = sbr.rel (%p135) target = $region24
      $region23: #{tpu_custom_call.1} parent=15 // pred_region
        %p138 = scmp.lt.s32.totalorder %s15, 1
        %s139 = scalar_select %p138, %s15, 1
        %p140 = scmp.lt.s32.totalorder %s16, 0
        %s141 = scalar_select %p140, %s16, 0
        %s142 = smul.addr %s141, 13
        %s143 = smul.addr %s139, 325
        %s144 = sadd.s32 %s142, %s143
        %s145 = smul.addr %s144, 8
        %s146 = scalar_lea.vmem %s1, %s145
      $region24: #{tpu_custom_call.1} parent=15 // pred_fallthru
        _
    $region16: #{tpu_custom_call.1} parent=5 // pred_fallthru
      _
    %p147 = scmp.le.s32.totalorder 1, %s8
    %p148 = scmp.lt.s32.totalorder %s8, 3
    %p149 = pnand %p147, %p148
    %p150 = pneg %p149
    // Predicated region
    $region25: #{tpu_custom_call.1} parent=5 // pred_check
      _
    $region26: #{tpu_custom_call.1} parent=5 // pred_check_branch
      %152 = sbr.rel (%p149) target = $region28
    $region27: #{tpu_custom_call.1} parent=5 // pred_region
      %s153 = ssub.s32 %s8, 1
      %p154 = scmp.lt.s32.totalorder %s17, 1
      %s155 = scalar_select %p154, %s17, 1
      %p156 = scmp.lt.s32.totalorder %s18, 0
      %s157 = scalar_select %p156, %s18, 0
      %s158 = smul.addr %s157, 13
      %s159 = smul.addr %s155, 26
      %s160 = sadd.s32 %s158, %s159
      %s161 = smul.addr %s160, 8
      %s162 = scalar_lea.vmem %s0, %s161
      %p163 = pneg %p48
      %p164 = pneg %p45
      %p165 = scmp.lt.s32.totalorder %s17, 1
      %s166 = scalar_select %p165, %s17, 1
      %p167 = scmp.lt.s32.totalorder %s18, 0
      %s168 = scalar_select %p167, %s18, 0
      %s169 = smul.addr %s168, 13
      %s170 = smul.addr %s166, 325
      %s171 = sadd.s32 %s169, %s170
      %s172 = smul.addr %s171, 8
      %s173 = scalar_lea.vmem %s1, %s172
      %p174 = pneg %p76
      %p175 = pneg %p73
      %p176 = pneg %p104
      %p177 = pneg %p101
      %p178 = scmp.lt.s32.totalorder %s17, 1
      %s179 = scalar_select %p178, %s17, 1
      %p180 = scmp.lt.s32.totalorder %s18, 0
      %s181 = scalar_select %p180, %s18, 0
      %s182 = smul.addr %s181, 13
      %s183 = smul.addr %s179, 182
      %s184 = sadd.s32 %s182, %s183
      %s185 = smul.addr %s184, 8
      %s186 = scalar_lea.vmem %s2, %s185
      %p187 = scmp.lt.s32.totalorder %s17, 1
      %s188 = scalar_select %p187, %s17, 1
      %p189 = scmp.lt.s32.totalorder %s18, 0
      %s190 = scalar_select %p189, %s18, 0
      %s191 = smul.addr %s190, 13
      %s192 = smul.addr %s188, 26
      %s193 = sadd.s32 %s191, %s192
      %s194 = smul.addr %s193, 8
      %s195 = scalar_lea.vmem %s0, %s194
      %p196 = scmp.lt.s32.totalorder %s17, 1
      %s197 = scalar_select %p196, %s17, 1
      %p198 = scmp.lt.s32.totalorder %s18, 0
      %s199 = scalar_select %p198, %s18, 0
      %s200 = smul.addr %s199, 13
      %s201 = smul.addr %s197, 325
      %s202 = sadd.s32 %s200, %s201
      %s203 = smul.addr %s202, 8
      %s204 = scalar_lea.vmem %s1, %s203
      %p205 = scmp.lt.s32.totalorder %s17, 1
      %s206 = scalar_select %p205, %s17, 1
      %p207 = scmp.lt.s32.totalorder %s18, 0
      %s208 = scalar_select %p207, %s18, 0
      %s209 = smul.addr %s208, 13
      %s210 = smul.addr %s206, 182
      %s211 = sadd.s32 %s209, %s210
      %s212 = smul.addr %s211, 8
      %s213 = scalar_lea.vmem %s2, %s212
      %v214 = vld [vmem:[%s195] sm:$0xff]
      %v215 = vld [vmem:[%s195 + $0x8] sm:$0xff]
      %v216 = vld [vmem:[%s195 + $0x10] sm:$0xff]
      %v217 = vld [vmem:[%s195 + $0x18] sm:$0xff]
      %v218 = vld [vmem:[%s195 + $0x20] sm:$0xff]
      %v219 = vld [vmem:[%s195 + $0x28] sm:$0xff]
      %v220 = vld [vmem:[%s195 + $0x30] sm:$0xff]
      %v221 = vld [vmem:[%s195 + $0x38] sm:$0xff]
      %v222 = vld [vmem:[%s195 + $0x40] sm:$0xff]
      %v223 = vld [vmem:[%s195 + $0x48] sm:$0xff]
      %v224 = vld [vmem:[%s195 + $0x50] sm:$0xff]
      %v225 = vld [vmem:[%s195 + $0x58] sm:$0xff]
      %v226 = vld [vmem:[%s195 + $0x60] sm:$0x3]
      %s227 = scalar_lea.vmem %s195, 104
      %v228 = vld [vmem:[%s227] sm:$0xff]
      %v229 = vld [vmem:[%s227 + $0x8] sm:$0xff]
      %v230 = vld [vmem:[%s227 + $0x10] sm:$0xff]
      %v231 = vld [vmem:[%s227 + $0x18] sm:$0xff]
      %v232 = vld [vmem:[%s227 + $0x20] sm:$0xff]
      %v233 = vld [vmem:[%s227 + $0x28] sm:$0xff]
      %v234 = vld [vmem:[%s227 + $0x30] sm:$0xff]
      %v235 = vld [vmem:[%s227 + $0x38] sm:$0xff]
      %v236 = vld [vmem:[%s227 + $0x40] sm:$0xff]
      %v237 = vld [vmem:[%s227 + $0x48] sm:$0xff]
      %v238 = vld [vmem:[%s227 + $0x50] sm:$0xff]
      %v239 = vld [vmem:[%s227 + $0x58] sm:$0xff]
      %v240 = vld [vmem:[%s227 + $0x60] sm:$0x3]
      %v241 = vmax.f32 %v214, %v228
      %v242 = vmax.f32 %v215, %v229
      %v243 = vmax.f32 %v216, %v230
      %v244 = vmax.f32 %v217, %v231
      %v245 = vmax.f32 %v218, %v232
      %v246 = vmax.f32 %v219, %v233
      %v247 = vmax.f32 %v220, %v234
      %v248 = vmax.f32 %v221, %v235
      %v249 = vmax.f32 %v222, %v236
      %v250 = vmax.f32 %v223, %v237
      %v251 = vmax.f32 %v224, %v238
      %v252 = vmax.f32 %v225, %v239
      %v253 = vmax.f32 %v226, %v240
      %v254 = vsub.f32 %v214, %v241
      %v255 = vsub.f32 %v215, %v242
      %v256 = vsub.f32 %v216, %v243
      %v257 = vsub.f32 %v217, %v244
      %v258 = vsub.f32 %v218, %v245
      %v259 = vsub.f32 %v219, %v246
      %v260 = vsub.f32 %v220, %v247
      %v261 = vsub.f32 %v221, %v248
      %v262 = vsub.f32 %v222, %v249
      %v263 = vsub.f32 %v223, %v250
      %v264 = vsub.f32 %v224, %v251
      %v265 = vsub.f32 %v225, %v252
      %v266 = vsub.f32 %v226, %v253
      %v267 = vmul.f32 %v254, 1.442695
      %v268 = vpow.pop %v267
      %v269 = vmul.f32 %v255, 1.442695
      %v270 = vpow.pop %v269
      %v271 = vmul.f32 %v256, 1.442695
      %v272 = vpow.pop %v271
      %v273 = vmul.f32 %v257, 1.442695
      %v274 = vpow.pop %v273
      %v275 = vmul.f32 %v258, 1.442695
      %v276 = vpow.pop %v275
      %v277 = vmul.f32 %v259, 1.442695
      %v278 = vpow.pop %v277
      %v279 = vmul.f32 %v260, 1.442695
      %v280 = vpow.pop %v279
      %v281 = vmul.f32 %v261, 1.442695
      %v282 = vpow.pop %v281
      %v283 = vmul.f32 %v262, 1.442695
      %v284 = vpow.pop %v283
      %v285 = vmul.f32 %v263, 1.442695
      %v286 = vpow.pop %v285
      %v287 = vmul.f32 %v264, 1.442695
      %v288 = vpow.pop %v287
      %v289 = vmul.f32 %v265, 1.442695
      %v290 = vpow.pop %v289
      %v291 = vmul.f32 %v266, 1.442695
      %v292 = vpow.pop %v291
      %v293 = vsub.f32 %v228, %v241
      %v294 = vsub.f32 %v229, %v242
      %v295 = vsub.f32 %v230, %v243
      %v296 = vsub.f32 %v231, %v244
      %v297 = vsub.f32 %v232, %v245
      %v298 = vsub.f32 %v233, %v246
      %v299 = vsub.f32 %v234, %v247
      %v300 = vsub.f32 %v235, %v248
      %v301 = vsub.f32 %v236, %v249
      %v302 = vsub.f32 %v237, %v250
      %v303 = vsub.f32 %v238, %v251
      %v304 = vsub.f32 %v239, %v252
      %v305 = vsub.f32 %v240, %v253
      %v306 = vmul.f32 %v293, 1.442695
      %v307 = vpow.pop %v306
      %v308 = vmul.f32 %v294, 1.442695
      %v309 = vpow.pop %v308
      %v310 = vmul.f32 %v295, 1.442695
      %v311 = vpow.pop %v310
      %v312 = vmul.f32 %v296, 1.442695
      %v313 = vpow.pop %v312
      %v314 = vmul.f32 %v297, 1.442695
      %v315 = vpow.pop %v314
      %v316 = vmul.f32 %v298, 1.442695
      %v317 = vpow.pop %v316
      %v318 = vmul.f32 %v299, 1.442695
      %v319 = vpow.pop %v318
      %v320 = vmul.f32 %v300, 1.442695
      %v321 = vpow.pop %v320
      %v322 = vmul.f32 %v301, 1.442695
      %v323 = vpow.pop %v322
      %v324 = vmul.f32 %v302, 1.442695
      %v325 = vpow.pop %v324
      %v326 = vmul.f32 %v303, 1.442695
      %v327 = vpow.pop %v326
      %v328 = vmul.f32 %v304, 1.442695
      %v329 = vpow.pop %v328
      %v330 = vmul.f32 %v305, 1.442695
      %v331 = vpow.pop %v330
      %v332 = vadd.f32 %v268, %v307
      %v333 = vadd.f32 %v270, %v309
      %v334 = vadd.f32 %v272, %v311
      %v335 = vadd.f32 %v274, %v313
      %v336 = vadd.f32 %v276, %v315
      %v337 = vadd.f32 %v278, %v317
      %v338 = vadd.f32 %v280, %v319
      %v339 = vadd.f32 %v282, %v321
      %v340 = vadd.f32 %v284, %v323
      %v341 = vadd.f32 %v286, %v325
      %v342 = vadd.f32 %v288, %v327
      %v343 = vadd.f32 %v290, %v329
      %v344 = vadd.f32 %v292, %v331
      %v345 = vld [vmem:[%s204] sm:$0xff]
      %v346 = vld [vmem:[%s204 + $0x8] sm:$0xff]
      %v347 = vld [vmem:[%s204 + $0x10] sm:$0xff]
      %v348 = vld [vmem:[%s204 + $0x18] sm:$0xff]
      %v349 = vld [vmem:[%s204 + $0x20] sm:$0xff]
      %v350 = vld [vmem:[%s204 + $0x28] sm:$0xff]
      %v351 = vld [vmem:[%s204 + $0x30] sm:$0xff]
      %v352 = vld [vmem:[%s204 + $0x38] sm:$0xff]
      %v353 = vld [vmem:[%s204 + $0x40] sm:$0xff]
      %v354 = vld [vmem:[%s204 + $0x48] sm:$0xff]
      %v355 = vld [vmem:[%s204 + $0x50] sm:$0xff]
      %v356 = vld [vmem:[%s204 + $0x58] sm:$0xff]
      %v357 = vld [vmem:[%s204 + $0x60] sm:$0x3]
      %s358 = scalar_lea.vmem %s204, 104
      %v359 = vld [vmem:[%s358] sm:$0xff]
      %v360 = vld [vmem:[%s358 + $0x8] sm:$0xff]
      %v361 = vld [vmem:[%s358 + $0x10] sm:$0xff]
      %v362 = vld [vmem:[%s358 + $0x18] sm:$0xff]
      %v363 = vld [vmem:[%s358 + $0x20] sm:$0xff]
      %v364 = vld [vmem:[%s358 + $0x28] sm:$0xff]
      %v365 = vld [vmem:[%s358 + $0x30] sm:$0xff]
      %v366 = vld [vmem:[%s358 + $0x38] sm:$0xff]
      %v367 = vld [vmem:[%s358 + $0x40] sm:$0xff]
      %v368 = vld [vmem:[%s358 + $0x48] sm:$0xff]
      %v369 = vld [vmem:[%s358 + $0x50] sm:$0xff]
      %v370 = vld [vmem:[%s358 + $0x58] sm:$0xff]
      %v371 = vld [vmem:[%s358 + $0x60] sm:$0x3]
      %v372 = vmax.f32 %v345, %v359
      %v373 = vmax.f32 %v346, %v360
      %v374 = vmax.f32 %v347, %v361
      %v375 = vmax.f32 %v348, %v362
      %v376 = vmax.f32 %v349, %v363
      %v377 = vmax.f32 %v350, %v364
      %v378 = vmax.f32 %v351, %v365
      %v379 = vmax.f32 %v352, %v366
      %v380 = vmax.f32 %v353, %v367
      %v381 = vmax.f32 %v354, %v368
      %v382 = vmax.f32 %v355, %v369
      %v383 = vmax.f32 %v356, %v370
      %v384 = vmax.f32 %v357, %v371
      %s385 = scalar_lea.vmem %s204, 208
      %v386 = vld [vmem:[%s385] sm:$0xff]
      %v387 = vld [vmem:[%s385 + $0x8] sm:$0xff]
      %v388 = vld [vmem:[%s385 + $0x10] sm:$0xff]
      %v389 = vld [vmem:[%s385 + $0x18] sm:$0xff]
      %v390 = vld [vmem:[%s385 + $0x20] sm:$0xff]
      %v391 = vld [vmem:[%s385 + $0x28] sm:$0xff]
      %v392 = vld [vmem:[%s385 + $0x30] sm:$0xff]
      %v393 = vld [vmem:[%s385 + $0x38] sm:$0xff]
      %v394 = vld [vmem:[%s385 + $0x40] sm:$0xff]
      %v395 = vld [vmem:[%s385 + $0x48] sm:$0xff]
      %v396 = vld [vmem:[%s385 + $0x50] sm:$0xff]
      %v397 = vld [vmem:[%s385 + $0x58] sm:$0xff]
      %v398 = vld [vmem:[%s385 + $0x60] sm:$0x3]
      %v399 = vmax.f32 %v372, %v386
      %v400 = vmax.f32 %v373, %v387
      %v401 = vmax.f32 %v374, %v388
      %v402 = vmax.f32 %v375, %v389
      %v403 = vmax.f32 %v376, %v390
      %v404 = vmax.f32 %v377, %v391
      %v405 = vmax.f32 %v378, %v392
      %v406 = vmax.f32 %v379, %v393
      %v407 = vmax.f32 %v380, %v394
      %v408 = vmax.f32 %v381, %v395
      %v409 = vmax.f32 %v382, %v396
      %v410 = vmax.f32 %v383, %v397
      %v411 = vmax.f32 %v384, %v398
      %s412 = scalar_lea.vmem %s204, 312
      %v413 = vld [vmem:[%s412] sm:$0xff]
      %v414 = vld [vmem:[%s412 + $0x8] sm:$0xff]
      %v415 = vld [vmem:[%s412 + $0x10] sm:$0xff]
      %v416 = vld [vmem:[%s412 + $0x18] sm:$0xff]
      %v417 = vld [vmem:[%s412 + $0x20] sm:$0xff]
      %v418 = vld [vmem:[%s412 + $0x28] sm:$0xff]
      %v419 = vld [vmem:[%s412 + $0x30] sm:$0xff]
      %v420 = vld [vmem:[%s412 + $0x38] sm:$0xff]
      %v421 = vld [vmem:[%s412 + $0x40] sm:$0xff]
      %v422 = vld [vmem:[%s412 + $0x48] sm:$0xff]
      %v423 = vld [vmem:[%s412 + $0x50] sm:$0xff]
      %v424 = vld [vmem:[%s412 + $0x58] sm:$0xff]
      %v425 = vld [vmem:[%s412 + $0x60] sm:$0x3]
      %v426 = vmax.f32 %v399, %v413
      %v427 = vmax.f32 %v400, %v414
      %v428 = vmax.f32 %v401, %v415
      %v429 = vmax.f32 %v402, %v416
      %v430 = vmax.f32 %v403, %v417
      %v431 = vmax.f32 %v404, %v418
      %v432 = vmax.f32 %v405, %v419
      %v433 = vmax.f32 %v406, %v420
      %v434 = vmax.f32 %v407, %v421
      %v435 = vmax.f32 %v408, %v422
      %v436 = vmax.f32 %v409, %v423
      %v437 = vmax.f32 %v410, %v424
      %v438 = vmax.f32 %v411, %v425
      %s439 = scalar_lea.vmem %s204, 416
      %v440 = vld [vmem:[%s439] sm:$0xff]
      %v441 = vld [vmem:[%s439 + $0x8] sm:$0xff]
      %v442 = vld [vmem:[%s439 + $0x10] sm:$0xff]
      %v443 = vld [vmem:[%s439 + $0x18] sm:$0xff]
      %v444 = vld [vmem:[%s439 + $0x20] sm:$0xff]
      %v445 = vld [vmem:[%s439 + $0x28] sm:$0xff]
      %v446 = vld [vmem:[%s439 + $0x30] sm:$0xff]
      %v447 = vld [vmem:[%s439 + $0x38] sm:$0xff]
      %v448 = vld [vmem:[%s439 + $0x40] sm:$0xff]
      %v449 = vld [vmem:[%s439 + $0x48] sm:$0xff]
      %v450 = vld [vmem:[%s439 + $0x50] sm:$0xff]
      %v451 = vld [vmem:[%s439 + $0x58] sm:$0xff]
      %v452 = vld [vmem:[%s439 + $0x60] sm:$0x3]
      %v453 = vmax.f32 %v426, %v440
      %v454 = vmax.f32 %v427, %v441
      %v455 = vmax.f32 %v428, %v442
      %v456 = vmax.f32 %v429, %v443
      %v457 = vmax.f32 %v430, %v444
      %v458 = vmax.f32 %v431, %v445
      %v459 = vmax.f32 %v432, %v446
      %v460 = vmax.f32 %v433, %v447
      %v461 = vmax.f32 %v434, %v448
      %v462 = vmax.f32 %v435, %v449
      %v463 = vmax.f32 %v436, %v450
      %v464 = vmax.f32 %v437, %v451
      %v465 = vmax.f32 %v438, %v452
      %s466 = scalar_lea.vmem %s204, 520
      %v467 = vld [vmem:[%s466] sm:$0xff]
      %v468 = vld [vmem:[%s466 + $0x8] sm:$0xff]
      %v469 = vld [vmem:[%s466 + $0x10] sm:$0xff]
      %v470 = vld [vmem:[%s466 + $0x18] sm:$0xff]
      %v471 = vld [vmem:[%s466 + $0x20] sm:$0xff]
      %v472 = vld [vmem:[%s466 + $0x28] sm:$0xff]
      %v473 = vld [vmem:[%s466 + $0x30] sm:$0xff]
      %v474 = vld [vmem:[%s466 + $0x38] sm:$0xff]
      %v475 = vld [vmem:[%s466 + $0x40] sm:$0xff]
      %v476 = vld [vmem:[%s466 + $0x48] sm:$0xff]
      %v477 = vld [vmem:[%s466 + $0x50] sm:$0xff]
      %v478 = vld [vmem:[%s466 + $0x58] sm:$0xff]
      %v479 = vld [vmem:[%s466 + $0x60] sm:$0x3]
      %v480 = vmax.f32 %v453, %v467
      %v481 = vmax.f32 %v454, %v468
      %v482 = vmax.f32 %v455, %v469
      %v483 = vmax.f32 %v456, %v470
      %v484 = vmax.f32 %v457, %v471
      %v485 = vmax.f32 %v458, %v472
      %v486 = vmax.f32 %v459, %v473
      %v487 = vmax.f32 %v460, %v474
      %v488 = vmax.f32 %v461, %v475
      %v489 = vmax.f32 %v462, %v476
      %v490 = vmax.f32 %v463, %v477
      %v491 = vmax.f32 %v464, %v478
      %v492 = vmax.f32 %v465, %v479
      %s493 = scalar_lea.vmem %s204, 624
      %v494 = vld [vmem:[%s493] sm:$0xff]
      %v495 = vld [vmem:[%s493 + $0x8] sm:$0xff]
      %v496 = vld [vmem:[%s493 + $0x10] sm:$0xff]
      %v497 = vld [vmem:[%s493 + $0x18] sm:$0xff]
      %v498 = vld [vmem:[%s493 + $0x20] sm:$0xff]
      %v499 = vld [vmem:[%s493 + $0x28] sm:$0xff]
      %v500 = vld [vmem:[%s493 + $0x30] sm:$0xff]
      %v501 = vld [vmem:[%s493 + $0x38] sm:$0xff]
      %v502 = vld [vmem:[%s493 + $0x40] sm:$0xff]
      %v503 = vld [vmem:[%s493 + $0x48] sm:$0xff]
      %v504 = vld [vmem:[%s493 + $0x50] sm:$0xff]
      %v505 = vld [vmem:[%s493 + $0x58] sm:$0xff]
      %v506 = vld [vmem:[%s493 + $0x60] sm:$0x3]
      %v507 = vmax.f32 %v480, %v494
      %v508 = vmax.f32 %v481, %v495
      %v509 = vmax.f32 %v482, %v496
      %v510 = vmax.f32 %v483, %v497
      %v511 = vmax.f32 %v484, %v498
      %v512 = vmax.f32 %v485, %v499
      %v513 = vmax.f32 %v486, %v500
      %v514 = vmax.f32 %v487, %v501
      %v515 = vmax.f32 %v488, %v502
      %v516 = vmax.f32 %v489, %v503
      %v517 = vmax.f32 %v490, %v504
      %v518 = vmax.f32 %v491, %v505
      %v519 = vmax.f32 %v492, %v506
      %s520 = scalar_lea.vmem %s204, 728
      %v521 = vld [vmem:[%s520] sm:$0xff]
      %v522 = vld [vmem:[%s520 + $0x8] sm:$0xff]
      %v523 = vld [vmem:[%s520 + $0x10] sm:$0xff]
      %v524 = vld [vmem:[%s520 + $0x18] sm:$0xff]
      %v525 = vld [vmem:[%s520 + $0x20] sm:$0xff]
      %v526 = vld [vmem:[%s520 + $0x28] sm:$0xff]
      %v527 = vld [vmem:[%s520 + $0x30] sm:$0xff]
      %v528 = vld [vmem:[%s520 + $0x38] sm:$0xff]
      %v529 = vld [vmem:[%s520 + $0x40] sm:$0xff]
      %v530 = vld [vmem:[%s520 + $0x48] sm:$0xff]
      %v531 = vld [vmem:[%s520 + $0x50] sm:$0xff]
      %v532 = vld [vmem:[%s520 + $0x58] sm:$0xff]
      %v533 = vld [vmem:[%s520 + $0x60] sm:$0x3]
      %v534 = vmax.f32 %v507, %v521
      %v535 = vmax.f32 %v508, %v522
      %v536 = vmax.f32 %v509, %v523
      %v537 = vmax.f32 %v510, %v524
      %v538 = vmax.f32 %v511, %v525
      %v539 = vmax.f32 %v512, %v526
      %v540 = vmax.f32 %v513, %v527
      %v541 = vmax.f32 %v514, %v528
      %v542 = vmax.f32 %v515, %v529
      %v543 = vmax.f32 %v516, %v530
      %v544 = vmax.f32 %v517, %v531
      %v545 = vmax.f32 %v518, %v532
      %v546 = vmax.f32 %v519, %v533
      %s547 = scalar_lea.vmem %s204, 832
      %v548 = vld [vmem:[%s547] sm:$0xff]
      %v549 = vld [vmem:[%s547 + $0x8] sm:$0xff]
      %v550 = vld [vmem:[%s547 + $0x10] sm:$0xff]
      %v551 = vld [vmem:[%s547 + $0x18] sm:$0xff]
      %v552 = vld [vmem:[%s547 + $0x20] sm:$0xff]
      %v553 = vld [vmem:[%s547 + $0x28] sm:$0xff]
      %v554 = vld [vmem:[%s547 + $0x30] sm:$0xff]
      %v555 = vld [vmem:[%s547 + $0x38] sm:$0xff]
      %v556 = vld [vmem:[%s547 + $0x40] sm:$0xff]
      %v557 = vld [vmem:[%s547 + $0x48] sm:$0xff]
      %v558 = vld [vmem:[%s547 + $0x50] sm:$0xff]
      %v559 = vld [vmem:[%s547 + $0x58] sm:$0xff]
      %v560 = vld [vmem:[%s547 + $0x60] sm:$0x3]
      %v561 = vmax.f32 %v534, %v548
      %v562 = vmax.f32 %v535, %v549
      %v563 = vmax.f32 %v536, %v550
      %v564 = vmax.f32 %v537, %v551
      %v565 = vmax.f32 %v538, %v552
      %v566 = vmax.f32 %v539, %v553
      %v567 = vmax.f32 %v540, %v554
      %v568 = vmax.f32 %v541, %v555
      %v569 = vmax.f32 %v542, %v556
      %v570 = vmax.f32 %v543, %v557
      %v571 = vmax.f32 %v544, %v558
      %v572 = vmax.f32 %v545, %v559
      %v573 = vmax.f32 %v546, %v560
      %s574 = scalar_lea.vmem %s204, 936
      %v575 = vld [vmem:[%s574] sm:$0xff]
      %v576 = vld [vmem:[%s574 + $0x8] sm:$0xff]
      %v577 = vld [vmem:[%s574 + $0x10] sm:$0xff]
      %v578 = vld [vmem:[%s574 + $0x18] sm:$0xff]
      %v579 = vld [vmem:[%s574 + $0x20] sm:$0xff]
      %v580 = vld [vmem:[%s574 + $0x28] sm:$0xff]
      %v581 = vld [vmem:[%s574 + $0x30] sm:$0xff]
      %v582 = vld [vmem:[%s574 + $0x38] sm:$0xff]
      %v583 = vld [vmem:[%s574 + $0x40] sm:$0xff]
      %v584 = vld [vmem:[%s574 + $0x48] sm:$0xff]
      %v585 = vld [vmem:[%s574 + $0x50] sm:$0xff]
      %v586 = vld [vmem:[%s574 + $0x58] sm:$0xff]
      %v587 = vld [vmem:[%s574 + $0x60] sm:$0x3]
      %v588 = vmax.f32 %v561, %v575
      %v589 = vmax.f32 %v562, %v576
      %v590 = vmax.f32 %v563, %v577
      %v591 = vmax.f32 %v564, %v578
      %v592 = vmax.f32 %v565, %v579
      %v593 = vmax.f32 %v566, %v580
      %v594 = vmax.f32 %v567, %v581
      %v595 = vmax.f32 %v568, %v582
      %v596 = vmax.f32 %v569, %v583
      %v597 = vmax.f32 %v570, %v584
      %v598 = vmax.f32 %v571, %v585
      %v599 = vmax.f32 %v572, %v586
      %v600 = vmax.f32 %v573, %v587
      %s601 = scalar_lea.vmem %s204, 1040
      %v602 = vld [vmem:[%s601] sm:$0xff]
      %v603 = vld [vmem:[%s601 + $0x8] sm:$0xff]
      %v604 = vld [vmem:[%s601 + $0x10] sm:$0xff]
      %v605 = vld [vmem:[%s601 + $0x18] sm:$0xff]
      %v606 = vld [vmem:[%s601 + $0x20] sm:$0xff]
      %v607 = vld [vmem:[%s601 + $0x28] sm:$0xff]
      %v608 = vld [vmem:[%s601 + $0x30] sm:$0xff]
      %v609 = vld [vmem:[%s601 + $0x38] sm:$0xff]
      %v610 = vld [vmem:[%s601 + $0x40] sm:$0xff]
      %v611 = vld [vmem:[%s601 + $0x48] sm:$0xff]
      %v612 = vld [vmem:[%s601 + $0x50] sm:$0xff]
      %v613 = vld [vmem:[%s601 + $0x58] sm:$0xff]
      %v614 = vld [vmem:[%s601 + $0x60] sm:$0x3]
      %v615 = vmax.f32 %v588, %v602
      %v616 = vmax.f32 %v589, %v603
      %v617 = vmax.f32 %v590, %v604
      %v618 = vmax.f32 %v591, %v605
      %v619 = vmax.f32 %v592, %v606
      %v620 = vmax.f32 %v593, %v607
      %v621 = vmax.f32 %v594, %v608
      %v622 = vmax.f32 %v595, %v609
      %v623 = vmax.f32 %v596, %v610
      %v624 = vmax.f32 %v597, %v611
      %v625 = vmax.f32 %v598, %v612
      %v626 = vmax.f32 %v599, %v613
      %v627 = vmax.f32 %v600, %v614
      %s628 = scalar_lea.vmem %s204, 1144
      %v629 = vld [vmem:[%s628] sm:$0xff]
      %v630 = vld [vmem:[%s628 + $0x8] sm:$0xff]
      %v631 = vld [vmem:[%s628 + $0x10] sm:$0xff]
      %v632 = vld [vmem:[%s628 + $0x18] sm:$0xff]
      %v633 = vld [vmem:[%s628 + $0x20] sm:$0xff]
      %v634 = vld [vmem:[%s628 + $0x28] sm:$0xff]
      %v635 = vld [vmem:[%s628 + $0x30] sm:$0xff]
      %v636 = vld [vmem:[%s628 + $0x38] sm:$0xff]
      %v637 = vld [vmem:[%s628 + $0x40] sm:$0xff]
      %v638 = vld [vmem:[%s628 + $0x48] sm:$0xff]
      %v639 = vld [vmem:[%s628 + $0x50] sm:$0xff]
      %v640 = vld [vmem:[%s628 + $0x58] sm:$0xff]
      %v641 = vld [vmem:[%s628 + $0x60] sm:$0x3]
      %v642 = vmax.f32 %v615, %v629
      %v643 = vmax.f32 %v616, %v630
      %v644 = vmax.f32 %v617, %v631
      %v645 = vmax.f32 %v618, %v632
      %v646 = vmax.f32 %v619, %v633
      %v647 = vmax.f32 %v620, %v634
      %v648 = vmax.f32 %v621, %v635
      %v649 = vmax.f32 %v622, %v636
      %v650 = vmax.f32 %v623, %v637
      %v651 = vmax.f32 %v624, %v638
      %v652 = vmax.f32 %v625, %v639
      %v653 = vmax.f32 %v626, %v640
      %v654 = vmax.f32 %v627, %v641
      %s655 = scalar_lea.vmem %s204, 1248
      %v656 = vld [vmem:[%s655] sm:$0xff]
      %v657 = vld [vmem:[%s655 + $0x8] sm:$0xff]
      %v658 = vld [vmem:[%s655 + $0x10] sm:$0xff]
      %v659 = vld [vmem:[%s655 + $0x18] sm:$0xff]
      %v660 = vld [vmem:[%s655 + $0x20] sm:$0xff]
      %v661 = vld [vmem:[%s655 + $0x28] sm:$0xff]
      %v662 = vld [vmem:[%s655 + $0x30] sm:$0xff]
      %v663 = vld [vmem:[%s655 + $0x38] sm:$0xff]
      %v664 = vld [vmem:[%s655 + $0x40] sm:$0xff]
      %v665 = vld [vmem:[%s655 + $0x48] sm:$0xff]
      %v666 = vld [vmem:[%s655 + $0x50] sm:$0xff]
      %v667 = vld [vmem:[%s655 + $0x58] sm:$0xff]
      %v668 = vld [vmem:[%s655 + $0x60] sm:$0x3]
      %v669 = vmax.f32 %v642, %v656
      %v670 = vmax.f32 %v643, %v657
      %v671 = vmax.f32 %v644, %v658
      %v672 = vmax.f32 %v645, %v659
      %v673 = vmax.f32 %v646, %v660
      %v674 = vmax.f32 %v647, %v661
      %v675 = vmax.f32 %v648, %v662
      %v676 = vmax.f32 %v649, %v663
      %v677 = vmax.f32 %v650, %v664
      %v678 = vmax.f32 %v651, %v665
      %v679 = vmax.f32 %v652, %v666
      %v680 = vmax.f32 %v653, %v667
      %v681 = vmax.f32 %v654, %v668
      %s682 = scalar_lea.vmem %s204, 1352
      %v683 = vld [vmem:[%s682] sm:$0xff]
      %v684 = vld [vmem:[%s682 + $0x8] sm:$0xff]
      %v685 = vld [vmem:[%s682 + $0x10] sm:$0xff]
      %v686 = vld [vmem:[%s682 + $0x18] sm:$0xff]
      %v687 = vld [vmem:[%s682 + $0x20] sm:$0xff]
      %v688 = vld [vmem:[%s682 + $0x28] sm:$0xff]
      %v689 = vld [vmem:[%s682 + $0x30] sm:$0xff]
      %v690 = vld [vmem:[%s682 + $0x38] sm:$0xff]
      %v691 = vld [vmem:[%s682 + $0x40] sm:$0xff]
      %v692 = vld [vmem:[%s682 + $0x48] sm:$0xff]
      %v693 = vld [vmem:[%s682 + $0x50] sm:$0xff]
      %v694 = vld [vmem:[%s682 + $0x58] sm:$0xff]
      %v695 = vld [vmem:[%s682 + $0x60] sm:$0x3]
      %v696 = vmax.f32 %v669, %v683
      %v697 = vmax.f32 %v670, %v684
      %v698 = vmax.f32 %v671, %v685
      %v699 = vmax.f32 %v672, %v686
      %v700 = vmax.f32 %v673, %v687
      %v701 = vmax.f32 %v674, %v688
      %v702 = vmax.f32 %v675, %v689
      %v703 = vmax.f32 %v676, %v690
      %v704 = vmax.f32 %v677, %v691
      %v705 = vmax.f32 %v678, %v692
      %v706 = vmax.f32 %v679, %v693
      %v707 = vmax.f32 %v680, %v694
      %v708 = vmax.f32 %v681, %v695
      %s709 = scalar_lea.vmem %s204, 1456
      %v710 = vld [vmem:[%s709] sm:$0xff]
      %v711 = vld [vmem:[%s709 + $0x8] sm:$0xff]
      %v712 = vld [vmem:[%s709 + $0x10] sm:$0xff]
      %v713 = vld [vmem:[%s709 + $0x18] sm:$0xff]
      %v714 = vld [vmem:[%s709 + $0x20] sm:$0xff]
      %v715 = vld [vmem:[%s709 + $0x28] sm:$0xff]
      %v716 = vld [vmem:[%s709 + $0x30] sm:$0xff]
      %v717 = vld [vmem:[%s709 + $0x38] sm:$0xff]
      %v718 = vld [vmem:[%s709 + $0x40] sm:$0xff]
      %v719 = vld [vmem:[%s709 + $0x48] sm:$0xff]
      %v720 = vld [vmem:[%s709 + $0x50] sm:$0xff]
      %v721 = vld [vmem:[%s709 + $0x58] sm:$0xff]
      %v722 = vld [vmem:[%s709 + $0x60] sm:$0x3]
      %v723 = vmax.f32 %v696, %v710
      %v724 = vmax.f32 %v697, %v711
      %v725 = vmax.f32 %v698, %v712
      %v726 = vmax.f32 %v699, %v713
      %v727 = vmax.f32 %v700, %v714
      %v728 = vmax.f32 %v701, %v715
      %v729 = vmax.f32 %v702, %v716
      %v730 = vmax.f32 %v703, %v717
      %v731 = vmax.f32 %v704, %v718
      %v732 = vmax.f32 %v705, %v719
      %v733 = vmax.f32 %v706, %v720
      %v734 = vmax.f32 %v707, %v721
      %v735 = vmax.f32 %v708, %v722
      %s736 = scalar_lea.vmem %s204, 1560
      %v737 = vld [vmem:[%s736] sm:$0xff]
      %v738 = vld [vmem:[%s736 + $0x8] sm:$0xff]
      %v739 = vld [vmem:[%s736 + $0x10] sm:$0xff]
      %v740 = vld [vmem:[%s736 + $0x18] sm:$0xff]
      %v741 = vld [vmem:[%s736 + $0x20] sm:$0xff]
      %v742 = vld [vmem:[%s736 + $0x28] sm:$0xff]
      %v743 = vld [vmem:[%s736 + $0x30] sm:$0xff]
      %v744 = vld [vmem:[%s736 + $0x38] sm:$0xff]
      %v745 = vld [vmem:[%s736 + $0x40] sm:$0xff]
      %v746 = vld [vmem:[%s736 + $0x48] sm:$0xff]
      %v747 = vld [vmem:[%s736 + $0x50] sm:$0xff]
      %v748 = vld [vmem:[%s736 + $0x58] sm:$0xff]
      %v749 = vld [vmem:[%s736 + $0x60] sm:$0x3]
      %v750 = vmax.f32 %v723, %v737
      %v751 = vmax.f32 %v724, %v738
      %v752 = vmax.f32 %v725, %v739
      %v753 = vmax.f32 %v726, %v740
      %v754 = vmax.f32 %v727, %v741
      %v755 = vmax.f32 %v728, %v742
      %v756 = vmax.f32 %v729, %v743
      %v757 = vmax.f32 %v730, %v744
      %v758 = vmax.f32 %v731, %v745
      %v759 = vmax.f32 %v732, %v746
      %v760 = vmax.f32 %v733, %v747
      %v761 = vmax.f32 %v734, %v748
      %v762 = vmax.f32 %v735, %v749
      %s763 = scalar_lea.vmem %s204, 1664
      %v764 = vld [vmem:[%s763] sm:$0xff]
      %v765 = vld [vmem:[%s763 + $0x8] sm:$0xff]
      %v766 = vld [vmem:[%s763 + $0x10] sm:$0xff]
      %v767 = vld [vmem:[%s763 + $0x18] sm:$0xff]
      %v768 = vld [vmem:[%s763 + $0x20] sm:$0xff]
      %v769 = vld [vmem:[%s763 + $0x28] sm:$0xff]
      %v770 = vld [vmem:[%s763 + $0x30] sm:$0xff]
      %v771 = vld [vmem:[%s763 + $0x38] sm:$0xff]
      %v772 = vld [vmem:[%s763 + $0x40] sm:$0xff]
      %v773 = vld [vmem:[%s763 + $0x48] sm:$0xff]
      %v774 = vld [vmem:[%s763 + $0x50] sm:$0xff]
      %v775 = vld [vmem:[%s763 + $0x58] sm:$0xff]
      %v776 = vld [vmem:[%s763 + $0x60] sm:$0x3]
      %v777 = vmax.f32 %v750, %v764
      %v778 = vmax.f32 %v751, %v765
      %v779 = vmax.f32 %v752, %v766
      %v780 = vmax.f32 %v753, %v767
      %v781 = vmax.f32 %v754, %v768
      %v782 = vmax.f32 %v755, %v769
      %v783 = vmax.f32 %v756, %v770
      %v784 = vmax.f32 %v757, %v771
      %v785 = vmax.f32 %v758, %v772
      %v786 = vmax.f32 %v759, %v773
      %v787 = vmax.f32 %v760, %v774
      %v788 = vmax.f32 %v761, %v775
      %v789 = vmax.f32 %v762, %v776
      %s790 = scalar_lea.vmem %s204, 1768
      %v791 = vld [vmem:[%s790] sm:$0xff]
      %v792 = vld [vmem:[%s790 + $0x8] sm:$0xff]
      %v793 = vld [vmem:[%s790 + $0x10] sm:$0xff]
      %v794 = vld [vmem:[%s790 + $0x18] sm:$0xff]
      %v795 = vld [vmem:[%s790 + $0x20] sm:$0xff]
      %v796 = vld [vmem:[%s790 + $0x28] sm:$0xff]
      %v797 = vld [vmem:[%s790 + $0x30] sm:$0xff]
      %v798 = vld [vmem:[%s790 + $0x38] sm:$0xff]
      %v799 = vld [vmem:[%s790 + $0x40] sm:$0xff]
      %v800 = vld [vmem:[%s790 + $0x48] sm:$0xff]
      %v801 = vld [vmem:[%s790 + $0x50] sm:$0xff]
      %v802 = vld [vmem:[%s790 + $0x58] sm:$0xff]
      %v803 = vld [vmem:[%s790 + $0x60] sm:$0x3]
      %v804 = vmax.f32 %v777, %v791
      %v805 = vmax.f32 %v778, %v792
      %v806 = vmax.f32 %v779, %v793
      %v807 = vmax.f32 %v780, %v794
      %v808 = vmax.f32 %v781, %v795
      %v809 = vmax.f32 %v782, %v796
      %v810 = vmax.f32 %v783, %v797
      %v811 = vmax.f32 %v784, %v798
      %v812 = vmax.f32 %v785, %v799
      %v813 = vmax.f32 %v786, %v800
      %v814 = vmax.f32 %v787, %v801
      %v815 = vmax.f32 %v788, %v802
      %v816 = vmax.f32 %v789, %v803
      %s817 = scalar_lea.vmem %s204, 1872
      %v818 = vld [vmem:[%s817] sm:$0xff]
      %v819 = vld [vmem:[%s817 + $0x8] sm:$0xff]
      %v820 = vld [vmem:[%s817 + $0x10] sm:$0xff]
      %v821 = vld [vmem:[%s817 + $0x18] sm:$0xff]
      %v822 = vld [vmem:[%s817 + $0x20] sm:$0xff]
      %v823 = vld [vmem:[%s817 + $0x28] sm:$0xff]
      %v824 = vld [vmem:[%s817 + $0x30] sm:$0xff]
      %v825 = vld [vmem:[%s817 + $0x38] sm:$0xff]
      %v826 = vld [vmem:[%s817 + $0x40] sm:$0xff]
      %v827 = vld [vmem:[%s817 + $0x48] sm:$0xff]
      %v828 = vld [vmem:[%s817 + $0x50] sm:$0xff]
      %v829 = vld [vmem:[%s817 + $0x58] sm:$0xff]
      %v830 = vld [vmem:[%s817 + $0x60] sm:$0x3]
      %v831 = vmax.f32 %v804, %v818
      %v832 = vmax.f32 %v805, %v819
      %v833 = vmax.f32 %v806, %v820
      %v834 = vmax.f32 %v807, %v821
      %v835 = vmax.f32 %v808, %v822
      %v836 = vmax.f32 %v809, %v823
      %v837 = vmax.f32 %v810, %v824
      %v838 = vmax.f32 %v811, %v825
      %v839 = vmax.f32 %v812, %v826
      %v840 = vmax.f32 %v813, %v827
      %v841 = vmax.f32 %v814, %v828
      %v842 = vmax.f32 %v815, %v829
      %v843 = vmax.f32 %v816, %v830
      %s844 = scalar_lea.vmem %s204, 1976
      %v845 = vld [vmem:[%s844] sm:$0xff]
      %v846 = vld [vmem:[%s844 + $0x8] sm:$0xff]
      %v847 = vld [vmem:[%s844 + $0x10] sm:$0xff]
      %v848 = vld [vmem:[%s844 + $0x18] sm:$0xff]
      %v849 = vld [vmem:[%s844 + $0x20] sm:$0xff]
      %v850 = vld [vmem:[%s844 + $0x28] sm:$0xff]
      %v851 = vld [vmem:[%s844 + $0x30] sm:$0xff]
      %v852 = vld [vmem:[%s844 + $0x38] sm:$0xff]
      %v853 = vld [vmem:[%s844 + $0x40] sm:$0xff]
      %v854 = vld [vmem:[%s844 + $0x48] sm:$0xff]
      %v855 = vld [vmem:[%s844 + $0x50] sm:$0xff]
      %v856 = vld [vmem:[%s844 + $0x58] sm:$0xff]
      %v857 = vld [vmem:[%s844 + $0x60] sm:$0x3]
      %v858 = vmax.f32 %v831, %v845
      %v859 = vmax.f32 %v832, %v846
      %v860 = vmax.f32 %v833, %v847
      %v861 = vmax.f32 %v834, %v848
      %v862 = vmax.f32 %v835, %v849
      %v863 = vmax.f32 %v836, %v850
      %v864 = vmax.f32 %v837, %v851
      %v865 = vmax.f32 %v838, %v852
      %v866 = vmax.f32 %v839, %v853
      %v867 = vmax.f32 %v840, %v854
      %v868 = vmax.f32 %v841, %v855
      %v869 = vmax.f32 %v842, %v856
      %v870 = vmax.f32 %v843, %v857
      %s871 = scalar_lea.vmem %s204, 2080
      %v872 = vld [vmem:[%s871] sm:$0xff]
      %v873 = vld [vmem:[%s871 + $0x8] sm:$0xff]
      %v874 = vld [vmem:[%s871 + $0x10] sm:$0xff]
      %v875 = vld [vmem:[%s871 + $0x18] sm:$0xff]
      %v876 = vld [vmem:[%s871 + $0x20] sm:$0xff]
      %v877 = vld [vmem:[%s871 + $0x28] sm:$0xff]
      %v878 = vld [vmem:[%s871 + $0x30] sm:$0xff]
      %v879 = vld [vmem:[%s871 + $0x38] sm:$0xff]
      %v880 = vld [vmem:[%s871 + $0x40] sm:$0xff]
      %v881 = vld [vmem:[%s871 + $0x48] sm:$0xff]
      %v882 = vld [vmem:[%s871 + $0x50] sm:$0xff]
      %v883 = vld [vmem:[%s871 + $0x58] sm:$0xff]
      %v884 = vld [vmem:[%s871 + $0x60] sm:$0x3]
      %v885 = vmax.f32 %v858, %v872
      %v886 = vmax.f32 %v859, %v873
      %v887 = vmax.f32 %v860, %v874
      %v888 = vmax.f32 %v861, %v875
      %v889 = vmax.f32 %v862, %v876
      %v890 = vmax.f32 %v863, %v877
      %v891 = vmax.f32 %v864, %v878
      %v892 = vmax.f32 %v865, %v879
      %v893 = vmax.f32 %v866, %v880
      %v894 = vmax.f32 %v867, %v881
      %v895 = vmax.f32 %v868, %v882
      %v896 = vmax.f32 %v869, %v883
      %v897 = vmax.f32 %v870, %v884
      %s898 = scalar_lea.vmem %s204, 2184
      %v899 = vld [vmem:[%s898] sm:$0xff]
      %v900 = vld [vmem:[%s898 + $0x8] sm:$0xff]
      %v901 = vld [vmem:[%s898 + $0x10] sm:$0xff]
      %v902 = vld [vmem:[%s898 + $0x18] sm:$0xff]
      %v903 = vld [vmem:[%s898 + $0x20] sm:$0xff]
      %v904 = vld [vmem:[%s898 + $0x28] sm:$0xff]
      %v905 = vld [vmem:[%s898 + $0x30] sm:$0xff]
      %v906 = vld [vmem:[%s898 + $0x38] sm:$0xff]
      %v907 = vld [vmem:[%s898 + $0x40] sm:$0xff]
      %v908 = vld [vmem:[%s898 + $0x48] sm:$0xff]
      %v909 = vld [vmem:[%s898 + $0x50] sm:$0xff]
      %v910 = vld [vmem:[%s898 + $0x58] sm:$0xff]
      %v911 = vld [vmem:[%s898 + $0x60] sm:$0x3]
      %v912 = vmax.f32 %v885, %v899
      %v913 = vmax.f32 %v886, %v900
      %v914 = vmax.f32 %v887, %v901
      %v915 = vmax.f32 %v888, %v902
      %v916 = vmax.f32 %v889, %v903
      %v917 = vmax.f32 %v890, %v904
      %v918 = vmax.f32 %v891, %v905
      %v919 = vmax.f32 %v892, %v906
      %v920 = vmax.f32 %v893, %v907
      %v921 = vmax.f32 %v894, %v908
      %v922 = vmax.f32 %v895, %v909
      %v923 = vmax.f32 %v896, %v910
      %v924 = vmax.f32 %v897, %v911
      %s925 = scalar_lea.vmem %s204, 2288
      %v926 = vld [vmem:[%s925] sm:$0xff]
      %v927 = vld [vmem:[%s925 + $0x8] sm:$0xff]
      %v928 = vld [vmem:[%s925 + $0x10] sm:$0xff]
      %v929 = vld [vmem:[%s925 + $0x18] sm:$0xff]
      %v930 = vld [vmem:[%s925 + $0x20] sm:$0xff]
      %v931 = vld [vmem:[%s925 + $0x28] sm:$0xff]
      %v932 = vld [vmem:[%s925 + $0x30] sm:$0xff]
      %v933 = vld [vmem:[%s925 + $0x38] sm:$0xff]
      %v934 = vld [vmem:[%s925 + $0x40] sm:$0xff]
      %v935 = vld [vmem:[%s925 + $0x48] sm:$0xff]
      %v936 = vld [vmem:[%s925 + $0x50] sm:$0xff]
      %v937 = vld [vmem:[%s925 + $0x58] sm:$0xff]
      %v938 = vld [vmem:[%s925 + $0x60] sm:$0x3]
      %v939 = vmax.f32 %v912, %v926
      %v940 = vmax.f32 %v913, %v927
      %v941 = vmax.f32 %v914, %v928
      %v942 = vmax.f32 %v915, %v929
      %v943 = vmax.f32 %v916, %v930
      %v944 = vmax.f32 %v917, %v931
      %v945 = vmax.f32 %v918, %v932
      %v946 = vmax.f32 %v919, %v933
      %v947 = vmax.f32 %v920, %v934
      %v948 = vmax.f32 %v921, %v935
      %v949 = vmax.f32 %v922, %v936
      %v950 = vmax.f32 %v923, %v937
      %v951 = vmax.f32 %v924, %v938
      %s952 = scalar_lea.vmem %s204, 2392
      %v953 = vld [vmem:[%s952] sm:$0xff]
      %v954 = vld [vmem:[%s952 + $0x8] sm:$0xff]
      %v955 = vld [vmem:[%s952 + $0x10] sm:$0xff]
      %v956 = vld [vmem:[%s952 + $0x18] sm:$0xff]
      %v957 = vld [vmem:[%s952 + $0x20] sm:$0xff]
      %v958 = vld [vmem:[%s952 + $0x28] sm:$0xff]
      %v959 = vld [vmem:[%s952 + $0x30] sm:$0xff]
      %v960 = vld [vmem:[%s952 + $0x38] sm:$0xff]
      %v961 = vld [vmem:[%s952 + $0x40] sm:$0xff]
      %v962 = vld [vmem:[%s952 + $0x48] sm:$0xff]
      %v963 = vld [vmem:[%s952 + $0x50] sm:$0xff]
      %v964 = vld [vmem:[%s952 + $0x58] sm:$0xff]
      %v965 = vld [vmem:[%s952 + $0x60] sm:$0x3]
      %v966 = vmax.f32 %v939, %v953
      %v967 = vmax.f32 %v940, %v954
      %v968 = vmax.f32 %v941, %v955
      %v969 = vmax.f32 %v942, %v956
      %v970 = vmax.f32 %v943, %v957
      %v971 = vmax.f32 %v944, %v958
      %v972 = vmax.f32 %v945, %v959
      %v973 = vmax.f32 %v946, %v960
      %v974 = vmax.f32 %v947, %v961
      %v975 = vmax.f32 %v948, %v962
      %v976 = vmax.f32 %v949, %v963
      %v977 = vmax.f32 %v950, %v964
      %v978 = vmax.f32 %v951, %v965
      %s979 = scalar_lea.vmem %s204, 2496
      %v980 = vld [vmem:[%s979] sm:$0xff]
      %v981 = vld [vmem:[%s979 + $0x8] sm:$0xff]
      %v982 = vld [vmem:[%s979 + $0x10] sm:$0xff]
      %v983 = vld [vmem:[%s979 + $0x18] sm:$0xff]
      %v984 = vld [vmem:[%s979 + $0x20] sm:$0xff]
      %v985 = vld [vmem:[%s979 + $0x28] sm:$0xff]
      %v986 = vld [vmem:[%s979 + $0x30] sm:$0xff]
      %v987 = vld [vmem:[%s979 + $0x38] sm:$0xff]
      %v988 = vld [vmem:[%s979 + $0x40] sm:$0xff]
      %v989 = vld [vmem:[%s979 + $0x48] sm:$0xff]
      %v990 = vld [vmem:[%s979 + $0x50] sm:$0xff]
      %v991 = vld [vmem:[%s979 + $0x58] sm:$0xff]
      %v992 = vld [vmem:[%s979 + $0x60] sm:$0x3]
      %v993 = vmax.f32 %v966, %v980
      %v994 = vmax.f32 %v967, %v981
      %v995 = vmax.f32 %v968, %v982
      %v996 = vmax.f32 %v969, %v983
      %v997 = vmax.f32 %v970, %v984
      %v998 = vmax.f32 %v971, %v985
      %v999 = vmax.f32 %v972, %v986
      %v1000 = vmax.f32 %v973, %v987
      %v1001 = vmax.f32 %v974, %v988
      %v1002 = vmax.f32 %v975, %v989
      %v1003 = vmax.f32 %v976, %v990
      %v1004 = vmax.f32 %v977, %v991
      %v1005 = vmax.f32 %v978, %v992
      %v1006 = vsub.f32 %v345, %v993
      %v1007 = vsub.f32 %v346, %v994
      %v1008 = vsub.f32 %v347, %v995
      %v1009 = vsub.f32 %v348, %v996
      %v1010 = vsub.f32 %v349, %v997
      %v1011 = vsub.f32 %v350, %v998
      %v1012 = vsub.f32 %v351, %v999
      %v1013 = vsub.f32 %v352, %v1000
      %v1014 = vsub.f32 %v353, %v1001
      %v1015 = vsub.f32 %v354, %v1002
      %v1016 = vsub.f32 %v355, %v1003
      %v1017 = vsub.f32 %v356, %v1004
      %v1018 = vsub.f32 %v357, %v1005
      %v1019 = vmul.f32 %v1006, 1.442695
      %v1020 = vpow.pop %v1019
      %v1021 = vmul.f32 %v1007, 1.442695
      %v1022 = vpow.pop %v1021
      %v1023 = vmul.f32 %v1008, 1.442695
      %v1024 = vpow.pop %v1023
      %v1025 = vmul.f32 %v1009, 1.442695
      %v1026 = vpow.pop %v1025
      %v1027 = vmul.f32 %v1010, 1.442695
      %v1028 = vpow.pop %v1027
      %v1029 = vmul.f32 %v1011, 1.442695
      %v1030 = vpow.pop %v1029
      %v1031 = vmul.f32 %v1012, 1.442695
      %v1032 = vpow.pop %v1031
      %v1033 = vmul.f32 %v1013, 1.442695
      %v1034 = vpow.pop %v1033
      %v1035 = vmul.f32 %v1014, 1.442695
      %v1036 = vpow.pop %v1035
      %v1037 = vmul.f32 %v1015, 1.442695
      %v1038 = vpow.pop %v1037
      %v1039 = vmul.f32 %v1016, 1.442695
      %v1040 = vpow.pop %v1039
      %v1041 = vmul.f32 %v1017, 1.442695
      %v1042 = vpow.pop %v1041
      %v1043 = vmul.f32 %v1018, 1.442695
      %v1044 = vpow.pop %v1043
      %v1045 = vsub.f32 %v359, %v993
      %v1046 = vsub.f32 %v360, %v994
      %v1047 = vsub.f32 %v361, %v995
      %v1048 = vsub.f32 %v362, %v996
      %v1049 = vsub.f32 %v363, %v997
      %v1050 = vsub.f32 %v364, %v998
      %v1051 = vsub.f32 %v365, %v999
      %v1052 = vsub.f32 %v366, %v1000
      %v1053 = vsub.f32 %v367, %v1001
      %v1054 = vsub.f32 %v368, %v1002
      %v1055 = vsub.f32 %v369, %v1003
      %v1056 = vsub.f32 %v370, %v1004
      %v1057 = vsub.f32 %v371, %v1005
      %v1058 = vmul.f32 %v1045, 1.442695
      %v1059 = vpow.pop %v1058
      %v1060 = vmul.f32 %v1046, 1.442695
      %v1061 = vpow.pop %v1060
      %v1062 = vmul.f32 %v1047, 1.442695
      %v1063 = vpow.pop %v1062
      %v1064 = vmul.f32 %v1048, 1.442695
      %v1065 = vpow.pop %v1064
      %v1066 = vmul.f32 %v1049, 1.442695
      %v1067 = vpow.pop %v1066
      %v1068 = vmul.f32 %v1050, 1.442695
      %v1069 = vpow.pop %v1068
      %v1070 = vmul.f32 %v1051, 1.442695
      %v1071 = vpow.pop %v1070
      %v1072 = vmul.f32 %v1052, 1.442695
      %v1073 = vpow.pop %v1072
      %v1074 = vmul.f32 %v1053, 1.442695
      %v1075 = vpow.pop %v1074
      %v1076 = vmul.f32 %v1054, 1.442695
      %v1077 = vpow.pop %v1076
      %v1078 = vmul.f32 %v1055, 1.442695
      %v1079 = vpow.pop %v1078
      %v1080 = vmul.f32 %v1056, 1.442695
      %v1081 = vpow.pop %v1080
      %v1082 = vmul.f32 %v1057, 1.442695
      %v1083 = vpow.pop %v1082
      %v1084 = vadd.f32 %v1020, %v1059
      %v1085 = vadd.f32 %v1022, %v1061
      %v1086 = vadd.f32 %v1024, %v1063
      %v1087 = vadd.f32 %v1026, %v1065
      %v1088 = vadd.f32 %v1028, %v1067
      %v1089 = vadd.f32 %v1030, %v1069
      %v1090 = vadd.f32 %v1032, %v1071
      %v1091 = vadd.f32 %v1034, %v1073
      %v1092 = vadd.f32 %v1036, %v1075
      %v1093 = vadd.f32 %v1038, %v1077
      %v1094 = vadd.f32 %v1040, %v1079
      %v1095 = vadd.f32 %v1042, %v1081
      %v1096 = vadd.f32 %v1044, %v1083
      %v1097 = vsub.f32 %v386, %v993
      %v1098 = vsub.f32 %v387, %v994
      %v1099 = vsub.f32 %v388, %v995
      %v1100 = vsub.f32 %v389, %v996
      %v1101 = vsub.f32 %v390, %v997
      %v1102 = vsub.f32 %v391, %v998
      %v1103 = vsub.f32 %v392, %v999
      %v1104 = vsub.f32 %v393, %v1000
      %v1105 = vsub.f32 %v394, %v1001
      %v1106 = vsub.f32 %v395, %v1002
      %v1107 = vsub.f32 %v396, %v1003
      %v1108 = vsub.f32 %v397, %v1004
      %v1109 = vsub.f32 %v398, %v1005
      %v1110 = vmul.f32 %v1097, 1.442695
      %v1111 = vpow.pop %v1110
      %v1112 = vmul.f32 %v1098, 1.442695
      %v1113 = vpow.pop %v1112
      %v1114 = vmul.f32 %v1099, 1.442695
      %v1115 = vpow.pop %v1114
      %v1116 = vmul.f32 %v1100, 1.442695
      %v1117 = vpow.pop %v1116
      %v1118 = vmul.f32 %v1101, 1.442695
      %v1119 = vpow.pop %v1118
      %v1120 = vmul.f32 %v1102, 1.442695
      %v1121 = vpow.pop %v1120
      %v1122 = vmul.f32 %v1103, 1.442695
      %v1123 = vpow.pop %v1122
      %v1124 = vmul.f32 %v1104, 1.442695
      %v1125 = vpow.pop %v1124
      %v1126 = vmul.f32 %v1105, 1.442695
      %v1127 = vpow.pop %v1126
      %v1128 = vmul.f32 %v1106, 1.442695
      %v1129 = vpow.pop %v1128
      %v1130 = vmul.f32 %v1107, 1.442695
      %v1131 = vpow.pop %v1130
      %v1132 = vmul.f32 %v1108, 1.442695
      %v1133 = vpow.pop %v1132
      %v1134 = vmul.f32 %v1109, 1.442695
      %v1135 = vpow.pop %v1134
      %v1136 = vadd.f32 %v1084, %v1111
      %v1137 = vadd.f32 %v1085, %v1113
      %v1138 = vadd.f32 %v1086, %v1115
      %v1139 = vadd.f32 %v1087, %v1117
      %v1140 = vadd.f32 %v1088, %v1119
      %v1141 = vadd.f32 %v1089, %v1121
      %v1142 = vadd.f32 %v1090, %v1123
      %v1143 = vadd.f32 %v1091, %v1125
      %v1144 = vadd.f32 %v1092, %v1127
      %v1145 = vadd.f32 %v1093, %v1129
      %v1146 = vadd.f32 %v1094, %v1131
      %v1147 = vadd.f32 %v1095, %v1133
      %v1148 = vadd.f32 %v1096, %v1135
      %v1149 = vsub.f32 %v413, %v993
      %v1150 = vsub.f32 %v414, %v994
      %v1151 = vsub.f32 %v415, %v995
      %v1152 = vsub.f32 %v416, %v996
      %v1153 = vsub.f32 %v417, %v997
      %v1154 = vsub.f32 %v418, %v998
      %v1155 = vsub.f32 %v419, %v999
      %v1156 = vsub.f32 %v420, %v1000
      %v1157 = vsub.f32 %v421, %v1001
      %v1158 = vsub.f32 %v422, %v1002
      %v1159 = vsub.f32 %v423, %v1003
      %v1160 = vsub.f32 %v424, %v1004
      %v1161 = vsub.f32 %v425, %v1005
      %v1162 = vmul.f32 %v1149, 1.442695
      %v1163 = vpow.pop %v1162
      %v1164 = vmul.f32 %v1150, 1.442695
      %v1165 = vpow.pop %v1164
      %v1166 = vmul.f32 %v1151, 1.442695
      %v1167 = vpow.pop %v1166
      %v1168 = vmul.f32 %v1152, 1.442695
      %v1169 = vpow.pop %v1168
      %v1170 = vmul.f32 %v1153, 1.442695
      %v1171 = vpow.pop %v1170
      %v1172 = vmul.f32 %v1154, 1.442695
      %v1173 = vpow.pop %v1172
      %v1174 = vmul.f32 %v1155, 1.442695
      %v1175 = vpow.pop %v1174
      %v1176 = vmul.f32 %v1156, 1.442695
      %v1177 = vpow.pop %v1176
      %v1178 = vmul.f32 %v1157, 1.442695
      %v1179 = vpow.pop %v1178
      %v1180 = vmul.f32 %v1158, 1.442695
      %v1181 = vpow.pop %v1180
      %v1182 = vmul.f32 %v1159, 1.442695
      %v1183 = vpow.pop %v1182
      %v1184 = vmul.f32 %v1160, 1.442695
      %v1185 = vpow.pop %v1184
      %v1186 = vmul.f32 %v1161, 1.442695
      %v1187 = vpow.pop %v1186
      %v1188 = vadd.f32 %v1136, %v1163
      %v1189 = vadd.f32 %v1137, %v1165
      %v1190 = vadd.f32 %v1138, %v1167
      %v1191 = vadd.f32 %v1139, %v1169
      %v1192 = vadd.f32 %v1140, %v1171
      %v1193 = vadd.f32 %v1141, %v1173
      %v1194 = vadd.f32 %v1142, %v1175
      %v1195 = vadd.f32 %v1143, %v1177
      %v1196 = vadd.f32 %v1144, %v1179
      %v1197 = vadd.f32 %v1145, %v1181
      %v1198 = vadd.f32 %v1146, %v1183
      %v1199 = vadd.f32 %v1147, %v1185
      %v1200 = vadd.f32 %v1148, %v1187
      %v1201 = vsub.f32 %v440, %v993
      %v1202 = vsub.f32 %v441, %v994
      %v1203 = vsub.f32 %v442, %v995
      %v1204 = vsub.f32 %v443, %v996
      %v1205 = vsub.f32 %v444, %v997
      %v1206 = vsub.f32 %v445, %v998
      %v1207 = vsub.f32 %v446, %v999
      %v1208 = vsub.f32 %v447, %v1000
      %v1209 = vsub.f32 %v448, %v1001
      %v1210 = vsub.f32 %v449, %v1002
      %v1211 = vsub.f32 %v450, %v1003
      %v1212 = vsub.f32 %v451, %v1004
      %v1213 = vsub.f32 %v452, %v1005
      %v1214 = vmul.f32 %v1201, 1.442695
      %v1215 = vpow.pop %v1214
      %v1216 = vmul.f32 %v1202, 1.442695
      %v1217 = vpow.pop %v1216
      %v1218 = vmul.f32 %v1203, 1.442695
      %v1219 = vpow.pop %v1218
      %v1220 = vmul.f32 %v1204, 1.442695
      %v1221 = vpow.pop %v1220
      %v1222 = vmul.f32 %v1205, 1.442695
      %v1223 = vpow.pop %v1222
      %v1224 = vmul.f32 %v1206, 1.442695
      %v1225 = vpow.pop %v1224
      %v1226 = vmul.f32 %v1207, 1.442695
      %v1227 = vpow.pop %v1226
      %v1228 = vmul.f32 %v1208, 1.442695
      %v1229 = vpow.pop %v1228
      %v1230 = vmul.f32 %v1209, 1.442695
      %v1231 = vpow.pop %v1230
      %v1232 = vmul.f32 %v1210, 1.442695
      %v1233 = vpow.pop %v1232
      %v1234 = vmul.f32 %v1211, 1.442695
      %v1235 = vpow.pop %v1234
      %v1236 = vmul.f32 %v1212, 1.442695
      %v1237 = vpow.pop %v1236
      %v1238 = vmul.f32 %v1213, 1.442695
      %v1239 = vpow.pop %v1238
      %v1240 = vadd.f32 %v1188, %v1215
      %v1241 = vadd.f32 %v1189, %v1217
      %v1242 = vadd.f32 %v1190, %v1219
      %v1243 = vadd.f32 %v1191, %v1221
      %v1244 = vadd.f32 %v1192, %v1223
      %v1245 = vadd.f32 %v1193, %v1225
      %v1246 = vadd.f32 %v1194, %v1227
      %v1247 = vadd.f32 %v1195, %v1229
      %v1248 = vadd.f32 %v1196, %v1231
      %v1249 = vadd.f32 %v1197, %v1233
      %v1250 = vadd.f32 %v1198, %v1235
      %v1251 = vadd.f32 %v1199, %v1237
      %v1252 = vadd.f32 %v1200, %v1239
      %v1253 = vsub.f32 %v467, %v993
      %v1254 = vsub.f32 %v468, %v994
      %v1255 = vsub.f32 %v469, %v995
      %v1256 = vsub.f32 %v470, %v996
      %v1257 = vsub.f32 %v471, %v997
      %v1258 = vsub.f32 %v472, %v998
      %v1259 = vsub.f32 %v473, %v999
      %v1260 = vsub.f32 %v474, %v1000
      %v1261 = vsub.f32 %v475, %v1001
      %v1262 = vsub.f32 %v476, %v1002
      %v1263 = vsub.f32 %v477, %v1003
      %v1264 = vsub.f32 %v478, %v1004
      %v1265 = vsub.f32 %v479, %v1005
      %v1266 = vmul.f32 %v1253, 1.442695
      %v1267 = vpow.pop %v1266
      %v1268 = vmul.f32 %v1254, 1.442695
      %v1269 = vpow.pop %v1268
      %v1270 = vmul.f32 %v1255, 1.442695
      %v1271 = vpow.pop %v1270
      %v1272 = vmul.f32 %v1256, 1.442695
      %v1273 = vpow.pop %v1272
      %v1274 = vmul.f32 %v1257, 1.442695
      %v1275 = vpow.pop %v1274
      %v1276 = vmul.f32 %v1258, 1.442695
      %v1277 = vpow.pop %v1276
      %v1278 = vmul.f32 %v1259, 1.442695
      %v1279 = vpow.pop %v1278
      %v1280 = vmul.f32 %v1260, 1.442695
      %v1281 = vpow.pop %v1280
      %v1282 = vmul.f32 %v1261, 1.442695
      %v1283 = vpow.pop %v1282
      %v1284 = vmul.f32 %v1262, 1.442695
      %v1285 = vpow.pop %v1284
      %v1286 = vmul.f32 %v1263, 1.442695
      %v1287 = vpow.pop %v1286
      %v1288 = vmul.f32 %v1264, 1.442695
      %v1289 = vpow.pop %v1288
      %v1290 = vmul.f32 %v1265, 1.442695
      %v1291 = vpow.pop %v1290
      %v1292 = vadd.f32 %v1240, %v1267
      %v1293 = vadd.f32 %v1241, %v1269
      %v1294 = vadd.f32 %v1242, %v1271
      %v1295 = vadd.f32 %v1243, %v1273
      %v1296 = vadd.f32 %v1244, %v1275
      %v1297 = vadd.f32 %v1245, %v1277
      %v1298 = vadd.f32 %v1246, %v1279
      %v1299 = vadd.f32 %v1247, %v1281
      %v1300 = vadd.f32 %v1248, %v1283
      %v1301 = vadd.f32 %v1249, %v1285
      %v1302 = vadd.f32 %v1250, %v1287
      %v1303 = vadd.f32 %v1251, %v1289
      %v1304 = vadd.f32 %v1252, %v1291
      %v1305 = vsub.f32 %v494, %v993
      %v1306 = vsub.f32 %v495, %v994
      %v1307 = vsub.f32 %v496, %v995
      %v1308 = vsub.f32 %v497, %v996
      %v1309 = vsub.f32 %v498, %v997
      %v1310 = vsub.f32 %v499, %v998
      %v1311 = vsub.f32 %v500, %v999
      %v1312 = vsub.f32 %v501, %v1000
      %v1313 = vsub.f32 %v502, %v1001
      %v1314 = vsub.f32 %v503, %v1002
      %v1315 = vsub.f32 %v504, %v1003
      %v1316 = vsub.f32 %v505, %v1004
      %v1317 = vsub.f32 %v506, %v1005
      %v1318 = vmul.f32 %v1305, 1.442695
      %v1319 = vpow.pop %v1318
      %v1320 = vmul.f32 %v1306, 1.442695
      %v1321 = vpow.pop %v1320
      %v1322 = vmul.f32 %v1307, 1.442695
      %v1323 = vpow.pop %v1322
      %v1324 = vmul.f32 %v1308, 1.442695
      %v1325 = vpow.pop %v1324
      %v1326 = vmul.f32 %v1309, 1.442695
      %v1327 = vpow.pop %v1326
      %v1328 = vmul.f32 %v1310, 1.442695
      %v1329 = vpow.pop %v1328
      %v1330 = vmul.f32 %v1311, 1.442695
      %v1331 = vpow.pop %v1330
      %v1332 = vmul.f32 %v1312, 1.442695
      %v1333 = vpow.pop %v1332
      %v1334 = vmul.f32 %v1313, 1.442695
      %v1335 = vpow.pop %v1334
      %v1336 = vmul.f32 %v1314, 1.442695
      %v1337 = vpow.pop %v1336
      %v1338 = vmul.f32 %v1315, 1.442695
      %v1339 = vpow.pop %v1338
      %v1340 = vmul.f32 %v1316, 1.442695
      %v1341 = vpow.pop %v1340
      %v1342 = vmul.f32 %v1317, 1.442695
      %v1343 = vpow.pop %v1342
      %v1344 = vadd.f32 %v1292, %v1319
      %v1345 = vadd.f32 %v1293, %v1321
      %v1346 = vadd.f32 %v1294, %v1323
      %v1347 = vadd.f32 %v1295, %v1325
      %v1348 = vadd.f32 %v1296, %v1327
      %v1349 = vadd.f32 %v1297, %v1329
      %v1350 = vadd.f32 %v1298, %v1331
      %v1351 = vadd.f32 %v1299, %v1333
      %v1352 = vadd.f32 %v1300, %v1335
      %v1353 = vadd.f32 %v1301, %v1337
      %v1354 = vadd.f32 %v1302, %v1339
      %v1355 = vadd.f32 %v1303, %v1341
      %v1356 = vadd.f32 %v1304, %v1343
      %v1357 = vsub.f32 %v521, %v993
      %v1358 = vsub.f32 %v522, %v994
      %v1359 = vsub.f32 %v523, %v995
      %v1360 = vsub.f32 %v524, %v996
      %v1361 = vsub.f32 %v525, %v997
      %v1362 = vsub.f32 %v526, %v998
      %v1363 = vsub.f32 %v527, %v999
      %v1364 = vsub.f32 %v528, %v1000
      %v1365 = vsub.f32 %v529, %v1001
      %v1366 = vsub.f32 %v530, %v1002
      %v1367 = vsub.f32 %v531, %v1003
      %v1368 = vsub.f32 %v532, %v1004
      %v1369 = vsub.f32 %v533, %v1005
      %v1370 = vmul.f32 %v1357, 1.442695
      %v1371 = vpow.pop %v1370
      %v1372 = vmul.f32 %v1358, 1.442695
      %v1373 = vpow.pop %v1372
      %v1374 = vmul.f32 %v1359, 1.442695
      %v1375 = vpow.pop %v1374
      %v1376 = vmul.f32 %v1360, 1.442695
      %v1377 = vpow.pop %v1376
      %v1378 = vmul.f32 %v1361, 1.442695
      %v1379 = vpow.pop %v1378
      %v1380 = vmul.f32 %v1362, 1.442695
      %v1381 = vpow.pop %v1380
      %v1382 = vmul.f32 %v1363, 1.442695
      %v1383 = vpow.pop %v1382
      %v1384 = vmul.f32 %v1364, 1.442695
      %v1385 = vpow.pop %v1384
      %v1386 = vmul.f32 %v1365, 1.442695
      %v1387 = vpow.pop %v1386
      %v1388 = vmul.f32 %v1366, 1.442695
      %v1389 = vpow.pop %v1388
      %v1390 = vmul.f32 %v1367, 1.442695
      %v1391 = vpow.pop %v1390
      %v1392 = vmul.f32 %v1368, 1.442695
      %v1393 = vpow.pop %v1392
      %v1394 = vmul.f32 %v1369, 1.442695
      %v1395 = vpow.pop %v1394
      %v1396 = vadd.f32 %v1344, %v1371
      %v1397 = vadd.f32 %v1345, %v1373
      %v1398 = vadd.f32 %v1346, %v1375
      %v1399 = vadd.f32 %v1347, %v1377
      %v1400 = vadd.f32 %v1348, %v1379
      %v1401 = vadd.f32 %v1349, %v1381
      %v1402 = vadd.f32 %v1350, %v1383
      %v1403 = vadd.f32 %v1351, %v1385
      %v1404 = vadd.f32 %v1352, %v1387
      %v1405 = vadd.f32 %v1353, %v1389
      %v1406 = vadd.f32 %v1354, %v1391
      %v1407 = vadd.f32 %v1355, %v1393
      %v1408 = vadd.f32 %v1356, %v1395
      %v1409 = vsub.f32 %v548, %v993
      %v1410 = vsub.f32 %v549, %v994
      %v1411 = vsub.f32 %v550, %v995
      %v1412 = vsub.f32 %v551, %v996
      %v1413 = vsub.f32 %v552, %v997
      %v1414 = vsub.f32 %v553, %v998
      %v1415 = vsub.f32 %v554, %v999
      %v1416 = vsub.f32 %v555, %v1000
      %v1417 = vsub.f32 %v556, %v1001
      %v1418 = vsub.f32 %v557, %v1002
      %v1419 = vsub.f32 %v558, %v1003
      %v1420 = vsub.f32 %v559, %v1004
      %v1421 = vsub.f32 %v560, %v1005
      %v1422 = vmul.f32 %v1409, 1.442695
      %v1423 = vpow.pop %v1422
      %v1424 = vmul.f32 %v1410, 1.442695
      %v1425 = vpow.pop %v1424
      %v1426 = vmul.f32 %v1411, 1.442695
      %v1427 = vpow.pop %v1426
      %v1428 = vmul.f32 %v1412, 1.442695
      %v1429 = vpow.pop %v1428
      %v1430 = vmul.f32 %v1413, 1.442695
      %v1431 = vpow.pop %v1430
      %v1432 = vmul.f32 %v1414, 1.442695
      %v1433 = vpow.pop %v1432
      %v1434 = vmul.f32 %v1415, 1.442695
      %v1435 = vpow.pop %v1434
      %v1436 = vmul.f32 %v1416, 1.442695
      %v1437 = vpow.pop %v1436
      %v1438 = vmul.f32 %v1417, 1.442695
      %v1439 = vpow.pop %v1438
      %v1440 = vmul.f32 %v1418, 1.442695
      %v1441 = vpow.pop %v1440
      %v1442 = vmul.f32 %v1419, 1.442695
      %v1443 = vpow.pop %v1442
      %v1444 = vmul.f32 %v1420, 1.442695
      %v1445 = vpow.pop %v1444
      %v1446 = vmul.f32 %v1421, 1.442695
      %v1447 = vpow.pop %v1446
      %v1448 = vadd.f32 %v1396, %v1423
      %v1449 = vadd.f32 %v1397, %v1425
      %v1450 = vadd.f32 %v1398, %v1427
      %v1451 = vadd.f32 %v1399, %v1429
      %v1452 = vadd.f32 %v1400, %v1431
      %v1453 = vadd.f32 %v1401, %v1433
      %v1454 = vadd.f32 %v1402, %v1435
      %v1455 = vadd.f32 %v1403, %v1437
      %v1456 = vadd.f32 %v1404, %v1439
      %v1457 = vadd.f32 %v1405, %v1441
      %v1458 = vadd.f32 %v1406, %v1443
      %v1459 = vadd.f32 %v1407, %v1445
      %v1460 = vadd.f32 %v1408, %v1447
      %v1461 = vsub.f32 %v575, %v993
      %v1462 = vsub.f32 %v576, %v994
      %v1463 = vsub.f32 %v577, %v995
      %v1464 = vsub.f32 %v578, %v996
      %v1465 = vsub.f32 %v579, %v997
      %v1466 = vsub.f32 %v580, %v998
      %v1467 = vsub.f32 %v581, %v999
      %v1468 = vsub.f32 %v582, %v1000
      %v1469 = vsub.f32 %v583, %v1001
      %v1470 = vsub.f32 %v584, %v1002
      %v1471 = vsub.f32 %v585, %v1003
      %v1472 = vsub.f32 %v586, %v1004
      %v1473 = vsub.f32 %v587, %v1005
      %v1474 = vmul.f32 %v1461, 1.442695
      %v1475 = vpow.pop %v1474
      %v1476 = vmul.f32 %v1462, 1.442695
      %v1477 = vpow.pop %v1476
      %v1478 = vmul.f32 %v1463, 1.442695
      %v1479 = vpow.pop %v1478
      %v1480 = vmul.f32 %v1464, 1.442695
      %v1481 = vpow.pop %v1480
      %v1482 = vmul.f32 %v1465, 1.442695
      %v1483 = vpow.pop %v1482
      %v1484 = vmul.f32 %v1466, 1.442695
      %v1485 = vpow.pop %v1484
      %v1486 = vmul.f32 %v1467, 1.442695
      %v1487 = vpow.pop %v1486
      %v1488 = vmul.f32 %v1468, 1.442695
      %v1489 = vpow.pop %v1488
      %v1490 = vmul.f32 %v1469, 1.442695
      %v1491 = vpow.pop %v1490
      %v1492 = vmul.f32 %v1470, 1.442695
      %v1493 = vpow.pop %v1492
      %v1494 = vmul.f32 %v1471, 1.442695
      %v1495 = vpow.pop %v1494
      %v1496 = vmul.f32 %v1472, 1.442695
      %v1497 = vpow.pop %v1496
      %v1498 = vmul.f32 %v1473, 1.442695
      %v1499 = vpow.pop %v1498
      %v1500 = vadd.f32 %v1448, %v1475
      %v1501 = vadd.f32 %v1449, %v1477
      %v1502 = vadd.f32 %v1450, %v1479
      %v1503 = vadd.f32 %v1451, %v1481
      %v1504 = vadd.f32 %v1452, %v1483
      %v1505 = vadd.f32 %v1453, %v1485
      %v1506 = vadd.f32 %v1454, %v1487
      %v1507 = vadd.f32 %v1455, %v1489
      %v1508 = vadd.f32 %v1456, %v1491
      %v1509 = vadd.f32 %v1457, %v1493
      %v1510 = vadd.f32 %v1458, %v1495
      %v1511 = vadd.f32 %v1459, %v1497
      %v1512 = vadd.f32 %v1460, %v1499
      %v1513 = vsub.f32 %v602, %v993
      %v1514 = vsub.f32 %v603, %v994
      %v1515 = vsub.f32 %v604, %v995
      %v1516 = vsub.f32 %v605, %v996
      %v1517 = vsub.f32 %v606, %v997
      %v1518 = vsub.f32 %v607, %v998
      %v1519 = vsub.f32 %v608, %v999
      %v1520 = vsub.f32 %v609, %v1000
      %v1521 = vsub.f32 %v610, %v1001
      %v1522 = vsub.f32 %v611, %v1002
      %v1523 = vsub.f32 %v612, %v1003
      %v1524 = vsub.f32 %v613, %v1004
      %v1525 = vsub.f32 %v614, %v1005
      %v1526 = vmul.f32 %v1513, 1.442695
      %v1527 = vpow.pop %v1526
      %v1528 = vmul.f32 %v1514, 1.442695
      %v1529 = vpow.pop %v1528
      %v1530 = vmul.f32 %v1515, 1.442695
      %v1531 = vpow.pop %v1530
      %v1532 = vmul.f32 %v1516, 1.442695
      %v1533 = vpow.pop %v1532
      %v1534 = vmul.f32 %v1517, 1.442695
      %v1535 = vpow.pop %v1534
      %v1536 = vmul.f32 %v1518, 1.442695
      %v1537 = vpow.pop %v1536
      %v1538 = vmul.f32 %v1519, 1.442695
      %v1539 = vpow.pop %v1538
      %v1540 = vmul.f32 %v1520, 1.442695
      %v1541 = vpow.pop %v1540
      %v1542 = vmul.f32 %v1521, 1.442695
      %v1543 = vpow.pop %v1542
      %v1544 = vmul.f32 %v1522, 1.442695
      %v1545 = vpow.pop %v1544
      %v1546 = vmul.f32 %v1523, 1.442695
      %v1547 = vpow.pop %v1546
      %v1548 = vmul.f32 %v1524, 1.442695
      %v1549 = vpow.pop %v1548
      %v1550 = vmul.f32 %v1525, 1.442695
      %v1551 = vpow.pop %v1550
      %v1552 = vadd.f32 %v1500, %v1527
      %v1553 = vadd.f32 %v1501, %v1529
      %v1554 = vadd.f32 %v1502, %v1531
      %v1555 = vadd.f32 %v1503, %v1533
      %v1556 = vadd.f32 %v1504, %v1535
      %v1557 = vadd.f32 %v1505, %v1537
      %v1558 = vadd.f32 %v1506, %v1539
      %v1559 = vadd.f32 %v1507, %v1541
      %v1560 = vadd.f32 %v1508, %v1543
      %v1561 = vadd.f32 %v1509, %v1545
      %v1562 = vadd.f32 %v1510, %v1547
      %v1563 = vadd.f32 %v1511, %v1549
      %v1564 = vadd.f32 %v1512, %v1551
      %v1565 = vsub.f32 %v629, %v993
      %v1566 = vsub.f32 %v630, %v994
      %v1567 = vsub.f32 %v631, %v995
      %v1568 = vsub.f32 %v632, %v996
      %v1569 = vsub.f32 %v633, %v997
      %v1570 = vsub.f32 %v634, %v998
      %v1571 = vsub.f32 %v635, %v999
      %v1572 = vsub.f32 %v636, %v1000
      %v1573 = vsub.f32 %v637, %v1001
      %v1574 = vsub.f32 %v638, %v1002
      %v1575 = vsub.f32 %v639, %v1003
      %v1576 = vsub.f32 %v640, %v1004
      %v1577 = vsub.f32 %v641, %v1005
      %v1578 = vmul.f32 %v1565, 1.442695
      %v1579 = vpow.pop %v1578
      %v1580 = vmul.f32 %v1566, 1.442695
      %v1581 = vpow.pop %v1580
      %v1582 = vmul.f32 %v1567, 1.442695
      %v1583 = vpow.pop %v1582
      %v1584 = vmul.f32 %v1568, 1.442695
      %v1585 = vpow.pop %v1584
      %v1586 = vmul.f32 %v1569, 1.442695
      %v1587 = vpow.pop %v1586
      %v1588 = vmul.f32 %v1570, 1.442695
      %v1589 = vpow.pop %v1588
      %v1590 = vmul.f32 %v1571, 1.442695
      %v1591 = vpow.pop %v1590
      %v1592 = vmul.f32 %v1572, 1.442695
      %v1593 = vpow.pop %v1592
      %v1594 = vmul.f32 %v1573, 1.442695
      %v1595 = vpow.pop %v1594
      %v1596 = vmul.f32 %v1574, 1.442695
      %v1597 = vpow.pop %v1596
      %v1598 = vmul.f32 %v1575, 1.442695
      %v1599 = vpow.pop %v1598
      %v1600 = vmul.f32 %v1576, 1.442695
      %v1601 = vpow.pop %v1600
      %v1602 = vmul.f32 %v1577, 1.442695
      %v1603 = vpow.pop %v1602
      %v1604 = vadd.f32 %v1552, %v1579
      %v1605 = vadd.f32 %v1553, %v1581
      %v1606 = vadd.f32 %v1554, %v1583
      %v1607 = vadd.f32 %v1555, %v1585
      %v1608 = vadd.f32 %v1556, %v1587
      %v1609 = vadd.f32 %v1557, %v1589
      %v1610 = vadd.f32 %v1558, %v1591
      %v1611 = vadd.f32 %v1559, %v1593
      %v1612 = vadd.f32 %v1560, %v1595
      %v1613 = vadd.f32 %v1561, %v1597
      %v1614 = vadd.f32 %v1562, %v1599
      %v1615 = vadd.f32 %v1563, %v1601
      %v1616 = vadd.f32 %v1564, %v1603
      %v1617 = vsub.f32 %v656, %v993
      %v1618 = vsub.f32 %v657, %v994
      %v1619 = vsub.f32 %v658, %v995
      %v1620 = vsub.f32 %v659, %v996
      %v1621 = vsub.f32 %v660, %v997
      %v1622 = vsub.f32 %v661, %v998
      %v1623 = vsub.f32 %v662, %v999
      %v1624 = vsub.f32 %v663, %v1000
      %v1625 = vsub.f32 %v664, %v1001
      %v1626 = vsub.f32 %v665, %v1002
      %v1627 = vsub.f32 %v666, %v1003
      %v1628 = vsub.f32 %v667, %v1004
      %v1629 = vsub.f32 %v668, %v1005
      %v1630 = vmul.f32 %v1617, 1.442695
      %v1631 = vpow.pop %v1630
      %v1632 = vmul.f32 %v1618, 1.442695
      %v1633 = vpow.pop %v1632
      %v1634 = vmul.f32 %v1619, 1.442695
      %v1635 = vpow.pop %v1634
      %v1636 = vmul.f32 %v1620, 1.442695
      %v1637 = vpow.pop %v1636
      %v1638 = vmul.f32 %v1621, 1.442695
      %v1639 = vpow.pop %v1638
      %v1640 = vmul.f32 %v1622, 1.442695
      %v1641 = vpow.pop %v1640
      %v1642 = vmul.f32 %v1623, 1.442695
      %v1643 = vpow.pop %v1642
      %v1644 = vmul.f32 %v1624, 1.442695
      %v1645 = vpow.pop %v1644
      %v1646 = vmul.f32 %v1625, 1.442695
      %v1647 = vpow.pop %v1646
      %v1648 = vmul.f32 %v1626, 1.442695
      %v1649 = vpow.pop %v1648
      %v1650 = vmul.f32 %v1627, 1.442695
      %v1651 = vpow.pop %v1650
      %v1652 = vmul.f32 %v1628, 1.442695
      %v1653 = vpow.pop %v1652
      %v1654 = vmul.f32 %v1629, 1.442695
      %v1655 = vpow.pop %v1654
      %v1656 = vadd.f32 %v1604, %v1631
      %v1657 = vadd.f32 %v1605, %v1633
      %v1658 = vadd.f32 %v1606, %v1635
      %v1659 = vadd.f32 %v1607, %v1637
      %v1660 = vadd.f32 %v1608, %v1639
      %v1661 = vadd.f32 %v1609, %v1641
      %v1662 = vadd.f32 %v1610, %v1643
      %v1663 = vadd.f32 %v1611, %v1645
      %v1664 = vadd.f32 %v1612, %v1647
      %v1665 = vadd.f32 %v1613, %v1649
      %v1666 = vadd.f32 %v1614, %v1651
      %v1667 = vadd.f32 %v1615, %v1653
      %v1668 = vadd.f32 %v1616, %v1655
      %v1669 = vsub.f32 %v683, %v993
      %v1670 = vsub.f32 %v684, %v994
      %v1671 = vsub.f32 %v685, %v995
      %v1672 = vsub.f32 %v686, %v996
      %v1673 = vsub.f32 %v687, %v997
      %v1674 = vsub.f32 %v688, %v998
      %v1675 = vsub.f32 %v689, %v999
      %v1676 = vsub.f32 %v690, %v1000
      %v1677 = vsub.f32 %v691, %v1001
      %v1678 = vsub.f32 %v692, %v1002
      %v1679 = vsub.f32 %v693, %v1003
      %v1680 = vsub.f32 %v694, %v1004
      %v1681 = vsub.f32 %v695, %v1005
      %v1682 = vmul.f32 %v1669, 1.442695
      %v1683 = vpow.pop %v1682
      %v1684 = vmul.f32 %v1670, 1.442695
      %v1685 = vpow.pop %v1684
      %v1686 = vmul.f32 %v1671, 1.442695
      %v1687 = vpow.pop %v1686
      %v1688 = vmul.f32 %v1672, 1.442695
      %v1689 = vpow.pop %v1688
      %v1690 = vmul.f32 %v1673, 1.442695
      %v1691 = vpow.pop %v1690
      %v1692 = vmul.f32 %v1674, 1.442695
      %v1693 = vpow.pop %v1692
      %v1694 = vmul.f32 %v1675, 1.442695
      %v1695 = vpow.pop %v1694
      %v1696 = vmul.f32 %v1676, 1.442695
      %v1697 = vpow.pop %v1696
      %v1698 = vmul.f32 %v1677, 1.442695
      %v1699 = vpow.pop %v1698
      %v1700 = vmul.f32 %v1678, 1.442695
      %v1701 = vpow.pop %v1700
      %v1702 = vmul.f32 %v1679, 1.442695
      %v1703 = vpow.pop %v1702
      %v1704 = vmul.f32 %v1680, 1.442695
      %v1705 = vpow.pop %v1704
      %v1706 = vmul.f32 %v1681, 1.442695
      %v1707 = vpow.pop %v1706
      %v1708 = vadd.f32 %v1656, %v1683
      %v1709 = vadd.f32 %v1657, %v1685
      %v1710 = vadd.f32 %v1658, %v1687
      %v1711 = vadd.f32 %v1659, %v1689
      %v1712 = vadd.f32 %v1660, %v1691
      %v1713 = vadd.f32 %v1661, %v1693
      %v1714 = vadd.f32 %v1662, %v1695
      %v1715 = vadd.f32 %v1663, %v1697
      %v1716 = vadd.f32 %v1664, %v1699
      %v1717 = vadd.f32 %v1665, %v1701
      %v1718 = vadd.f32 %v1666, %v1703
      %v1719 = vadd.f32 %v1667, %v1705
      %v1720 = vadd.f32 %v1668, %v1707
      %v1721 = vsub.f32 %v710, %v993
      %v1722 = vsub.f32 %v711, %v994
      %v1723 = vsub.f32 %v712, %v995
      %v1724 = vsub.f32 %v713, %v996
      %v1725 = vsub.f32 %v714, %v997
      %v1726 = vsub.f32 %v715, %v998
      %v1727 = vsub.f32 %v716, %v999
      %v1728 = vsub.f32 %v717, %v1000
      %v1729 = vsub.f32 %v718, %v1001
      %v1730 = vsub.f32 %v719, %v1002
      %v1731 = vsub.f32 %v720, %v1003
      %v1732 = vsub.f32 %v721, %v1004
      %v1733 = vsub.f32 %v722, %v1005
      %v1734 = vmul.f32 %v1721, 1.442695
      %v1735 = vpow.pop %v1734
      %v1736 = vmul.f32 %v1722, 1.442695
      %v1737 = vpow.pop %v1736
      %v1738 = vmul.f32 %v1723, 1.442695
      %v1739 = vpow.pop %v1738
      %v1740 = vmul.f32 %v1724, 1.442695
      %v1741 = vpow.pop %v1740
      %v1742 = vmul.f32 %v1725, 1.442695
      %v1743 = vpow.pop %v1742
      %v1744 = vmul.f32 %v1726, 1.442695
      %v1745 = vpow.pop %v1744
      %v1746 = vmul.f32 %v1727, 1.442695
      %v1747 = vpow.pop %v1746
      %v1748 = vmul.f32 %v1728, 1.442695
      %v1749 = vpow.pop %v1748
      %v1750 = vmul.f32 %v1729, 1.442695
      %v1751 = vpow.pop %v1750
      %v1752 = vmul.f32 %v1730, 1.442695
      %v1753 = vpow.pop %v1752
      %v1754 = vmul.f32 %v1731, 1.442695
      %v1755 = vpow.pop %v1754
      %v1756 = vmul.f32 %v1732, 1.442695
      %v1757 = vpow.pop %v1756
      %v1758 = vmul.f32 %v1733, 1.442695
      %v1759 = vpow.pop %v1758
      %v1760 = vadd.f32 %v1708, %v1735
      %v1761 = vadd.f32 %v1709, %v1737
      %v1762 = vadd.f32 %v1710, %v1739
      %v1763 = vadd.f32 %v1711, %v1741
      %v1764 = vadd.f32 %v1712, %v1743
      %v1765 = vadd.f32 %v1713, %v1745
      %v1766 = vadd.f32 %v1714, %v1747
      %v1767 = vadd.f32 %v1715, %v1749
      %v1768 = vadd.f32 %v1716, %v1751
      %v1769 = vadd.f32 %v1717, %v1753
      %v1770 = vadd.f32 %v1718, %v1755
      %v1771 = vadd.f32 %v1719, %v1757
      %v1772 = vadd.f32 %v1720, %v1759
      %v1773 = vsub.f32 %v737, %v993
      %v1774 = vsub.f32 %v738, %v994
      %v1775 = vsub.f32 %v739, %v995
      %v1776 = vsub.f32 %v740, %v996
      %v1777 = vsub.f32 %v741, %v997
      %v1778 = vsub.f32 %v742, %v998
      %v1779 = vsub.f32 %v743, %v999
      %v1780 = vsub.f32 %v744, %v1000
      %v1781 = vsub.f32 %v745, %v1001
      %v1782 = vsub.f32 %v746, %v1002
      %v1783 = vsub.f32 %v747, %v1003
      %v1784 = vsub.f32 %v748, %v1004
      %v1785 = vsub.f32 %v749, %v1005
      %v1786 = vmul.f32 %v1773, 1.442695
      %v1787 = vpow.pop %v1786
      %v1788 = vmul.f32 %v1774, 1.442695
      %v1789 = vpow.pop %v1788
      %v1790 = vmul.f32 %v1775, 1.442695
      %v1791 = vpow.pop %v1790
      %v1792 = vmul.f32 %v1776, 1.442695
      %v1793 = vpow.pop %v1792
      %v1794 = vmul.f32 %v1777, 1.442695
      %v1795 = vpow.pop %v1794
      %v1796 = vmul.f32 %v1778, 1.442695
      %v1797 = vpow.pop %v1796
      %v1798 = vmul.f32 %v1779, 1.442695
      %v1799 = vpow.pop %v1798
      %v1800 = vmul.f32 %v1780, 1.442695
      %v1801 = vpow.pop %v1800
      %v1802 = vmul.f32 %v1781, 1.442695
      %v1803 = vpow.pop %v1802
      %v1804 = vmul.f32 %v1782, 1.442695
      %v1805 = vpow.pop %v1804
      %v1806 = vmul.f32 %v1783, 1.442695
      %v1807 = vpow.pop %v1806
      %v1808 = vmul.f32 %v1784, 1.442695
      %v1809 = vpow.pop %v1808
      %v1810 = vmul.f32 %v1785, 1.442695
      %v1811 = vpow.pop %v1810
      %v1812 = vadd.f32 %v1760, %v1787
      %v1813 = vadd.f32 %v1761, %v1789
      %v1814 = vadd.f32 %v1762, %v1791
      %v1815 = vadd.f32 %v1763, %v1793
      %v1816 = vadd.f32 %v1764, %v1795
      %v1817 = vadd.f32 %v1765, %v1797
      %v1818 = vadd.f32 %v1766, %v1799
      %v1819 = vadd.f32 %v1767, %v1801
      %v1820 = vadd.f32 %v1768, %v1803
      %v1821 = vadd.f32 %v1769, %v1805
      %v1822 = vadd.f32 %v1770, %v1807
      %v1823 = vadd.f32 %v1771, %v1809
      %v1824 = vadd.f32 %v1772, %v1811
      %v1825 = vsub.f32 %v764, %v993
      %v1826 = vsub.f32 %v765, %v994
      %v1827 = vsub.f32 %v766, %v995
      %v1828 = vsub.f32 %v767, %v996
      %v1829 = vsub.f32 %v768, %v997
      %v1830 = vsub.f32 %v769, %v998
      %v1831 = vsub.f32 %v770, %v999
      %v1832 = vsub.f32 %v771, %v1000
      %v1833 = vsub.f32 %v772, %v1001
      %v1834 = vsub.f32 %v773, %v1002
      %v1835 = vsub.f32 %v774, %v1003
      %v1836 = vsub.f32 %v775, %v1004
      %v1837 = vsub.f32 %v776, %v1005
      %v1838 = vmul.f32 %v1825, 1.442695
      %v1839 = vpow.pop %v1838
      %v1840 = vmul.f32 %v1826, 1.442695
      %v1841 = vpow.pop %v1840
      %v1842 = vmul.f32 %v1827, 1.442695
      %v1843 = vpow.pop %v1842
      %v1844 = vmul.f32 %v1828, 1.442695
      %v1845 = vpow.pop %v1844
      %v1846 = vmul.f32 %v1829, 1.442695
      %v1847 = vpow.pop %v1846
      %v1848 = vmul.f32 %v1830, 1.442695
      %v1849 = vpow.pop %v1848
      %v1850 = vmul.f32 %v1831, 1.442695
      %v1851 = vpow.pop %v1850
      %v1852 = vmul.f32 %v1832, 1.442695
      %v1853 = vpow.pop %v1852
      %v1854 = vmul.f32 %v1833, 1.442695
      %v1855 = vpow.pop %v1854
      %v1856 = vmul.f32 %v1834, 1.442695
      %v1857 = vpow.pop %v1856
      %v1858 = vmul.f32 %v1835, 1.442695
      %v1859 = vpow.pop %v1858
      %v1860 = vmul.f32 %v1836, 1.442695
      %v1861 = vpow.pop %v1860
      %v1862 = vmul.f32 %v1837, 1.442695
      %v1863 = vpow.pop %v1862
      %v1864 = vadd.f32 %v1812, %v1839
      %v1865 = vadd.f32 %v1813, %v1841
      %v1866 = vadd.f32 %v1814, %v1843
      %v1867 = vadd.f32 %v1815, %v1845
      %v1868 = vadd.f32 %v1816, %v1847
      %v1869 = vadd.f32 %v1817, %v1849
      %v1870 = vadd.f32 %v1818, %v1851
      %v1871 = vadd.f32 %v1819, %v1853
      %v1872 = vadd.f32 %v1820, %v1855
      %v1873 = vadd.f32 %v1821, %v1857
      %v1874 = vadd.f32 %v1822, %v1859
      %v1875 = vadd.f32 %v1823, %v1861
      %v1876 = vadd.f32 %v1824, %v1863
      %v1877 = vsub.f32 %v791, %v993
      %v1878 = vsub.f32 %v792, %v994
      %v1879 = vsub.f32 %v793, %v995
      %v1880 = vsub.f32 %v794, %v996
      %v1881 = vsub.f32 %v795, %v997
      %v1882 = vsub.f32 %v796, %v998
      %v1883 = vsub.f32 %v797, %v999
      %v1884 = vsub.f32 %v798, %v1000
      %v1885 = vsub.f32 %v799, %v1001
      %v1886 = vsub.f32 %v800, %v1002
      %v1887 = vsub.f32 %v801, %v1003
      %v1888 = vsub.f32 %v802, %v1004
      %v1889 = vsub.f32 %v803, %v1005
      %v1890 = vmul.f32 %v1877, 1.442695
      %v1891 = vpow.pop %v1890
      %v1892 = vmul.f32 %v1878, 1.442695
      %v1893 = vpow.pop %v1892
      %v1894 = vmul.f32 %v1879, 1.442695
      %v1895 = vpow.pop %v1894
      %v1896 = vmul.f32 %v1880, 1.442695
      %v1897 = vpow.pop %v1896
      %v1898 = vmul.f32 %v1881, 1.442695
      %v1899 = vpow.pop %v1898
      %v1900 = vmul.f32 %v1882, 1.442695
      %v1901 = vpow.pop %v1900
      %v1902 = vmul.f32 %v1883, 1.442695
      %v1903 = vpow.pop %v1902
      %v1904 = vmul.f32 %v1884, 1.442695
      %v1905 = vpow.pop %v1904
      %v1906 = vmul.f32 %v1885, 1.442695
      %v1907 = vpow.pop %v1906
      %v1908 = vmul.f32 %v1886, 1.442695
      %v1909 = vpow.pop %v1908
      %v1910 = vmul.f32 %v1887, 1.442695
      %v1911 = vpow.pop %v1910
      %v1912 = vmul.f32 %v1888, 1.442695
      %v1913 = vpow.pop %v1912
      %v1914 = vmul.f32 %v1889, 1.442695
      %v1915 = vpow.pop %v1914
      %v1916 = vadd.f32 %v1864, %v1891
      %v1917 = vadd.f32 %v1865, %v1893
      %v1918 = vadd.f32 %v1866, %v1895
      %v1919 = vadd.f32 %v1867, %v1897
      %v1920 = vadd.f32 %v1868, %v1899
      %v1921 = vadd.f32 %v1869, %v1901
      %v1922 = vadd.f32 %v1870, %v1903
      %v1923 = vadd.f32 %v1871, %v1905
      %v1924 = vadd.f32 %v1872, %v1907
      %v1925 = vadd.f32 %v1873, %v1909
      %v1926 = vadd.f32 %v1874, %v1911
      %v1927 = vadd.f32 %v1875, %v1913
      %v1928 = vadd.f32 %v1876, %v1915
      %v1929 = vsub.f32 %v818, %v993
      %v1930 = vsub.f32 %v819, %v994
      %v1931 = vsub.f32 %v820, %v995
      %v1932 = vsub.f32 %v821, %v996
      %v1933 = vsub.f32 %v822, %v997
      %v1934 = vsub.f32 %v823, %v998
      %v1935 = vsub.f32 %v824, %v999
      %v1936 = vsub.f32 %v825, %v1000
      %v1937 = vsub.f32 %v826, %v1001
      %v1938 = vsub.f32 %v827, %v1002
      %v1939 = vsub.f32 %v828, %v1003
      %v1940 = vsub.f32 %v829, %v1004
      %v1941 = vsub.f32 %v830, %v1005
      %v1942 = vmul.f32 %v1929, 1.442695
      %v1943 = vpow.pop %v1942
      %v1944 = vmul.f32 %v1930, 1.442695
      %v1945 = vpow.pop %v1944
      %v1946 = vmul.f32 %v1931, 1.442695
      %v1947 = vpow.pop %v1946
      %v1948 = vmul.f32 %v1932, 1.442695
      %v1949 = vpow.pop %v1948
      %v1950 = vmul.f32 %v1933, 1.442695
      %v1951 = vpow.pop %v1950
      %v1952 = vmul.f32 %v1934, 1.442695
      %v1953 = vpow.pop %v1952
      %v1954 = vmul.f32 %v1935, 1.442695
      %v1955 = vpow.pop %v1954
      %v1956 = vmul.f32 %v1936, 1.442695
      %v1957 = vpow.pop %v1956
      %v1958 = vmul.f32 %v1937, 1.442695
      %v1959 = vpow.pop %v1958
      %v1960 = vmul.f32 %v1938, 1.442695
      %v1961 = vpow.pop %v1960
      %v1962 = vmul.f32 %v1939, 1.442695
      %v1963 = vpow.pop %v1962
      %v1964 = vmul.f32 %v1940, 1.442695
      %v1965 = vpow.pop %v1964
      %v1966 = vmul.f32 %v1941, 1.442695
      %v1967 = vpow.pop %v1966
      %v1968 = vadd.f32 %v1916, %v1943
      %v1969 = vadd.f32 %v1917, %v1945
      %v1970 = vadd.f32 %v1918, %v1947
      %v1971 = vadd.f32 %v1919, %v1949
      %v1972 = vadd.f32 %v1920, %v1951
      %v1973 = vadd.f32 %v1921, %v1953
      %v1974 = vadd.f32 %v1922, %v1955
      %v1975 = vadd.f32 %v1923, %v1957
      %v1976 = vadd.f32 %v1924, %v1959
      %v1977 = vadd.f32 %v1925, %v1961
      %v1978 = vadd.f32 %v1926, %v1963
      %v1979 = vadd.f32 %v1927, %v1965
      %v1980 = vadd.f32 %v1928, %v1967
      %v1981 = vsub.f32 %v845, %v993
      %v1982 = vsub.f32 %v846, %v994
      %v1983 = vsub.f32 %v847, %v995
      %v1984 = vsub.f32 %v848, %v996
      %v1985 = vsub.f32 %v849, %v997
      %v1986 = vsub.f32 %v850, %v998
      %v1987 = vsub.f32 %v851, %v999
      %v1988 = vsub.f32 %v852, %v1000
      %v1989 = vsub.f32 %v853, %v1001
      %v1990 = vsub.f32 %v854, %v1002
      %v1991 = vsub.f32 %v855, %v1003
      %v1992 = vsub.f32 %v856, %v1004
      %v1993 = vsub.f32 %v857, %v1005
      %v1994 = vmul.f32 %v1981, 1.442695
      %v1995 = vpow.pop %v1994
      %v1996 = vmul.f32 %v1982, 1.442695
      %v1997 = vpow.pop %v1996
      %v1998 = vmul.f32 %v1983, 1.442695
      %v1999 = vpow.pop %v1998
      %v2000 = vmul.f32 %v1984, 1.442695
      %v2001 = vpow.pop %v2000
      %v2002 = vmul.f32 %v1985, 1.442695
      %v2003 = vpow.pop %v2002
      %v2004 = vmul.f32 %v1986, 1.442695
      %v2005 = vpow.pop %v2004
      %v2006 = vmul.f32 %v1987, 1.442695
      %v2007 = vpow.pop %v2006
      %v2008 = vmul.f32 %v1988, 1.442695
      %v2009 = vpow.pop %v2008
      %v2010 = vmul.f32 %v1989, 1.442695
      %v2011 = vpow.pop %v2010
      %v2012 = vmul.f32 %v1990, 1.442695
      %v2013 = vpow.pop %v2012
      %v2014 = vmul.f32 %v1991, 1.442695
      %v2015 = vpow.pop %v2014
      %v2016 = vmul.f32 %v1992, 1.442695
      %v2017 = vpow.pop %v2016
      %v2018 = vmul.f32 %v1993, 1.442695
      %v2019 = vpow.pop %v2018
      %v2020 = vadd.f32 %v1968, %v1995
      %v2021 = vadd.f32 %v1969, %v1997
      %v2022 = vadd.f32 %v1970, %v1999
      %v2023 = vadd.f32 %v1971, %v2001
      %v2024 = vadd.f32 %v1972, %v2003
      %v2025 = vadd.f32 %v1973, %v2005
      %v2026 = vadd.f32 %v1974, %v2007
      %v2027 = vadd.f32 %v1975, %v2009
      %v2028 = vadd.f32 %v1976, %v2011
      %v2029 = vadd.f32 %v1977, %v2013
      %v2030 = vadd.f32 %v1978, %v2015
      %v2031 = vadd.f32 %v1979, %v2017
      %v2032 = vadd.f32 %v1980, %v2019
      %v2033 = vsub.f32 %v872, %v993
      %v2034 = vsub.f32 %v873, %v994
      %v2035 = vsub.f32 %v874, %v995
      %v2036 = vsub.f32 %v875, %v996
      %v2037 = vsub.f32 %v876, %v997
      %v2038 = vsub.f32 %v877, %v998
      %v2039 = vsub.f32 %v878, %v999
      %v2040 = vsub.f32 %v879, %v1000
      %v2041 = vsub.f32 %v880, %v1001
      %v2042 = vsub.f32 %v881, %v1002
      %v2043 = vsub.f32 %v882, %v1003
      %v2044 = vsub.f32 %v883, %v1004
      %v2045 = vsub.f32 %v884, %v1005
      %v2046 = vmul.f32 %v2033, 1.442695
      %v2047 = vpow.pop %v2046
      %v2048 = vmul.f32 %v2034, 1.442695
      %v2049 = vpow.pop %v2048
      %v2050 = vmul.f32 %v2035, 1.442695
      %v2051 = vpow.pop %v2050
      %v2052 = vmul.f32 %v2036, 1.442695
      %v2053 = vpow.pop %v2052
      %v2054 = vmul.f32 %v2037, 1.442695
      %v2055 = vpow.pop %v2054
      %v2056 = vmul.f32 %v2038, 1.442695
      %v2057 = vpow.pop %v2056
      %v2058 = vmul.f32 %v2039, 1.442695
      %v2059 = vpow.pop %v2058
      %v2060 = vmul.f32 %v2040, 1.442695
      %v2061 = vpow.pop %v2060
      %v2062 = vmul.f32 %v2041, 1.442695
      %v2063 = vpow.pop %v2062
      %v2064 = vmul.f32 %v2042, 1.442695
      %v2065 = vpow.pop %v2064
      %v2066 = vmul.f32 %v2043, 1.442695
      %v2067 = vpow.pop %v2066
      %v2068 = vmul.f32 %v2044, 1.442695
      %v2069 = vpow.pop %v2068
      %v2070 = vmul.f32 %v2045, 1.442695
      %v2071 = vpow.pop %v2070
      %v2072 = vadd.f32 %v2020, %v2047
      %v2073 = vadd.f32 %v2021, %v2049
      %v2074 = vadd.f32 %v2022, %v2051
      %v2075 = vadd.f32 %v2023, %v2053
      %v2076 = vadd.f32 %v2024, %v2055
      %v2077 = vadd.f32 %v2025, %v2057
      %v2078 = vadd.f32 %v2026, %v2059
      %v2079 = vadd.f32 %v2027, %v2061
      %v2080 = vadd.f32 %v2028, %v2063
      %v2081 = vadd.f32 %v2029, %v2065
      %v2082 = vadd.f32 %v2030, %v2067
      %v2083 = vadd.f32 %v2031, %v2069
      %v2084 = vadd.f32 %v2032, %v2071
      %v2085 = vsub.f32 %v899, %v993
      %v2086 = vsub.f32 %v900, %v994
      %v2087 = vsub.f32 %v901, %v995
      %v2088 = vsub.f32 %v902, %v996
      %v2089 = vsub.f32 %v903, %v997
      %v2090 = vsub.f32 %v904, %v998
      %v2091 = vsub.f32 %v905, %v999
      %v2092 = vsub.f32 %v906, %v1000
      %v2093 = vsub.f32 %v907, %v1001
      %v2094 = vsub.f32 %v908, %v1002
      %v2095 = vsub.f32 %v909, %v1003
      %v2096 = vsub.f32 %v910, %v1004
      %v2097 = vsub.f32 %v911, %v1005
      %v2098 = vmul.f32 %v2085, 1.442695
      %v2099 = vpow.pop %v2098
      %v2100 = vmul.f32 %v2086, 1.442695
      %v2101 = vpow.pop %v2100
      %v2102 = vmul.f32 %v2087, 1.442695
      %v2103 = vpow.pop %v2102
      %v2104 = vmul.f32 %v2088, 1.442695
      %v2105 = vpow.pop %v2104
      %v2106 = vmul.f32 %v2089, 1.442695
      %v2107 = vpow.pop %v2106
      %v2108 = vmul.f32 %v2090, 1.442695
      %v2109 = vpow.pop %v2108
      %v2110 = vmul.f32 %v2091, 1.442695
      %v2111 = vpow.pop %v2110
      %v2112 = vmul.f32 %v2092, 1.442695
      %v2113 = vpow.pop %v2112
      %v2114 = vmul.f32 %v2093, 1.442695
      %v2115 = vpow.pop %v2114
      %v2116 = vmul.f32 %v2094, 1.442695
      %v2117 = vpow.pop %v2116
      %v2118 = vmul.f32 %v2095, 1.442695
      %v2119 = vpow.pop %v2118
      %v2120 = vmul.f32 %v2096, 1.442695
      %v2121 = vpow.pop %v2120
      %v2122 = vmul.f32 %v2097, 1.442695
      %v2123 = vpow.pop %v2122
      %v2124 = vadd.f32 %v2072, %v2099
      %v2125 = vadd.f32 %v2073, %v2101
      %v2126 = vadd.f32 %v2074, %v2103
      %v2127 = vadd.f32 %v2075, %v2105
      %v2128 = vadd.f32 %v2076, %v2107
      %v2129 = vadd.f32 %v2077, %v2109
      %v2130 = vadd.f32 %v2078, %v2111
      %v2131 = vadd.f32 %v2079, %v2113
      %v2132 = vadd.f32 %v2080, %v2115
      %v2133 = vadd.f32 %v2081, %v2117
      %v2134 = vadd.f32 %v2082, %v2119
      %v2135 = vadd.f32 %v2083, %v2121
      %v2136 = vadd.f32 %v2084, %v2123
      %v2137 = vsub.f32 %v926, %v993
      %v2138 = vsub.f32 %v927, %v994
      %v2139 = vsub.f32 %v928, %v995
      %v2140 = vsub.f32 %v929, %v996
      %v2141 = vsub.f32 %v930, %v997
      %v2142 = vsub.f32 %v931, %v998
      %v2143 = vsub.f32 %v932, %v999
      %v2144 = vsub.f32 %v933, %v1000
      %v2145 = vsub.f32 %v934, %v1001
      %v2146 = vsub.f32 %v935, %v1002
      %v2147 = vsub.f32 %v936, %v1003
      %v2148 = vsub.f32 %v937, %v1004
      %v2149 = vsub.f32 %v938, %v1005
      %v2150 = vmul.f32 %v2137, 1.442695
      %v2151 = vpow.pop %v2150
      %v2152 = vmul.f32 %v2138, 1.442695
      %v2153 = vpow.pop %v2152
      %v2154 = vmul.f32 %v2139, 1.442695
      %v2155 = vpow.pop %v2154
      %v2156 = vmul.f32 %v2140, 1.442695
      %v2157 = vpow.pop %v2156
      %v2158 = vmul.f32 %v2141, 1.442695
      %v2159 = vpow.pop %v2158
      %v2160 = vmul.f32 %v2142, 1.442695
      %v2161 = vpow.pop %v2160
      %v2162 = vmul.f32 %v2143, 1.442695
      %v2163 = vpow.pop %v2162
      %v2164 = vmul.f32 %v2144, 1.442695
      %v2165 = vpow.pop %v2164
      %v2166 = vmul.f32 %v2145, 1.442695
      %v2167 = vpow.pop %v2166
      %v2168 = vmul.f32 %v2146, 1.442695
      %v2169 = vpow.pop %v2168
      %v2170 = vmul.f32 %v2147, 1.442695
      %v2171 = vpow.pop %v2170
      %v2172 = vmul.f32 %v2148, 1.442695
      %v2173 = vpow.pop %v2172
      %v2174 = vmul.f32 %v2149, 1.442695
      %v2175 = vpow.pop %v2174
      %v2176 = vadd.f32 %v2124, %v2151
      %v2177 = vadd.f32 %v2125, %v2153
      %v2178 = vadd.f32 %v2126, %v2155
      %v2179 = vadd.f32 %v2127, %v2157
      %v2180 = vadd.f32 %v2128, %v2159
      %v2181 = vadd.f32 %v2129, %v2161
      %v2182 = vadd.f32 %v2130, %v2163
      %v2183 = vadd.f32 %v2131, %v2165
      %v2184 = vadd.f32 %v2132, %v2167
      %v2185 = vadd.f32 %v2133, %v2169
      %v2186 = vadd.f32 %v2134, %v2171
      %v2187 = vadd.f32 %v2135, %v2173
      %v2188 = vadd.f32 %v2136, %v2175
      %v2189 = vsub.f32 %v953, %v993
      %v2190 = vsub.f32 %v954, %v994
      %v2191 = vsub.f32 %v955, %v995
      %v2192 = vsub.f32 %v956, %v996
      %v2193 = vsub.f32 %v957, %v997
      %v2194 = vsub.f32 %v958, %v998
      %v2195 = vsub.f32 %v959, %v999
      %v2196 = vsub.f32 %v960, %v1000
      %v2197 = vsub.f32 %v961, %v1001
      %v2198 = vsub.f32 %v962, %v1002
      %v2199 = vsub.f32 %v963, %v1003
      %v2200 = vsub.f32 %v964, %v1004
      %v2201 = vsub.f32 %v965, %v1005
      %v2202 = vmul.f32 %v2189, 1.442695
      %v2203 = vpow.pop %v2202
      %v2204 = vmul.f32 %v2190, 1.442695
      %v2205 = vpow.pop %v2204
      %v2206 = vmul.f32 %v2191, 1.442695
      %v2207 = vpow.pop %v2206
      %v2208 = vmul.f32 %v2192, 1.442695
      %v2209 = vpow.pop %v2208
      %v2210 = vmul.f32 %v2193, 1.442695
      %v2211 = vpow.pop %v2210
      %v2212 = vmul.f32 %v2194, 1.442695
      %v2213 = vpow.pop %v2212
      %v2214 = vmul.f32 %v2195, 1.442695
      %v2215 = vpow.pop %v2214
      %v2216 = vmul.f32 %v2196, 1.442695
      %v2217 = vpow.pop %v2216
      %v2218 = vmul.f32 %v2197, 1.442695
      %v2219 = vpow.pop %v2218
      %v2220 = vmul.f32 %v2198, 1.442695
      %v2221 = vpow.pop %v2220
      %v2222 = vmul.f32 %v2199, 1.442695
      %v2223 = vpow.pop %v2222
      %v2224 = vmul.f32 %v2200, 1.442695
      %v2225 = vpow.pop %v2224
      %v2226 = vmul.f32 %v2201, 1.442695
      %v2227 = vpow.pop %v2226
      %v2228 = vadd.f32 %v2176, %v2203
      %v2229 = vadd.f32 %v2177, %v2205
      %v2230 = vadd.f32 %v2178, %v2207
      %v2231 = vadd.f32 %v2179, %v2209
      %v2232 = vadd.f32 %v2180, %v2211
      %v2233 = vadd.f32 %v2181, %v2213
      %v2234 = vadd.f32 %v2182, %v2215
      %v2235 = vadd.f32 %v2183, %v2217
      %v2236 = vadd.f32 %v2184, %v2219
      %v2237 = vadd.f32 %v2185, %v2221
      %v2238 = vadd.f32 %v2186, %v2223
      %v2239 = vadd.f32 %v2187, %v2225
      %v2240 = vadd.f32 %v2188, %v2227
      %v2241 = vsub.f32 %v980, %v993
      %v2242 = vsub.f32 %v981, %v994
      %v2243 = vsub.f32 %v982, %v995
      %v2244 = vsub.f32 %v983, %v996
      %v2245 = vsub.f32 %v984, %v997
      %v2246 = vsub.f32 %v985, %v998
      %v2247 = vsub.f32 %v986, %v999
      %v2248 = vsub.f32 %v987, %v1000
      %v2249 = vsub.f32 %v988, %v1001
      %v2250 = vsub.f32 %v989, %v1002
      %v2251 = vsub.f32 %v990, %v1003
      %v2252 = vsub.f32 %v991, %v1004
      %v2253 = vsub.f32 %v992, %v1005
      %v2254 = vmul.f32 %v2241, 1.442695
      %v2255 = vpow.pop %v2254
      %v2256 = vmul.f32 %v2242, 1.442695
      %v2257 = vpow.pop %v2256
      %v2258 = vmul.f32 %v2243, 1.442695
      %v2259 = vpow.pop %v2258
      %v2260 = vmul.f32 %v2244, 1.442695
      %v2261 = vpow.pop %v2260
      %v2262 = vmul.f32 %v2245, 1.442695
      %v2263 = vpow.pop %v2262
      %v2264 = vmul.f32 %v2246, 1.442695
      %v2265 = vpow.pop %v2264
      %v2266 = vmul.f32 %v2247, 1.442695
      %v2267 = vpow.pop %v2266
      %v2268 = vmul.f32 %v2248, 1.442695
      %v2269 = vpow.pop %v2268
      %v2270 = vmul.f32 %v2249, 1.442695
      %v2271 = vpow.pop %v2270
      %v2272 = vmul.f32 %v2250, 1.442695
      %v2273 = vpow.pop %v2272
      %v2274 = vmul.f32 %v2251, 1.442695
      %v2275 = vpow.pop %v2274
      %v2276 = vmul.f32 %v2252, 1.442695
      %v2277 = vpow.pop %v2276
      %v2278 = vmul.f32 %v2253, 1.442695
      %v2279 = vpow.pop %v2278
      %v2280 = vadd.f32 %v2228, %v2255
      %v2281 = vadd.f32 %v2229, %v2257
      %v2282 = vadd.f32 %v2230, %v2259
      %v2283 = vadd.f32 %v2231, %v2261
      %v2284 = vadd.f32 %v2232, %v2263
      %v2285 = vadd.f32 %v2233, %v2265
      %v2286 = vadd.f32 %v2234, %v2267
      %v2287 = vadd.f32 %v2235, %v2269
      %v2288 = vadd.f32 %v2236, %v2271
      %v2289 = vadd.f32 %v2237, %v2273
      %v2290 = vadd.f32 %v2238, %v2275
      %v2291 = vadd.f32 %v2239, %v2277
      %v2292 = vadd.f32 %v2240, %v2279
      %v2293 = vmul.f32 %v332, %v2280
      %v2294 = vmul.f32 %v333, %v2281
      %v2295 = vmul.f32 %v334, %v2282
      %v2296 = vmul.f32 %v335, %v2283
      %v2297 = vmul.f32 %v336, %v2284
      %v2298 = vmul.f32 %v337, %v2285
      %v2299 = vmul.f32 %v338, %v2286
      %v2300 = vmul.f32 %v339, %v2287
      %v2301 = vmul.f32 %v340, %v2288
      %v2302 = vmul.f32 %v341, %v2289
      %v2303 = vmul.f32 %v342, %v2290
      %v2304 = vmul.f32 %v343, %v2291
      %v2305 = vmul.f32 %v344, %v2292
      %v2306 = vrcp.pop %v2293
      %v2307 = vrcp.pop %v2294
      %v2308 = vrcp.pop %v2295
      %v2309 = vrcp.pop %v2296
      %v2310 = vrcp.pop %v2297
      %v2311 = vrcp.pop %v2298
      %v2312 = vrcp.pop %v2299
      %v2313 = vrcp.pop %v2300
      %v2314 = vrcp.pop %v2301
      %v2315 = vrcp.pop %v2302
      %v2316 = vrcp.pop %v2303
      %v2317 = vrcp.pop %v2304
      %v2318 = vrcp.pop %v2305
      %v2319 = vmul.f32 %v2293, %v2306
      %v2320 = vmul.f32 %v2294, %v2307
      %v2321 = vmul.f32 %v2295, %v2308
      %v2322 = vmul.f32 %v2296, %v2309
      %v2323 = vmul.f32 %v2297, %v2310
      %v2324 = vmul.f32 %v2298, %v2311
      %v2325 = vmul.f32 %v2299, %v2312
      %v2326 = vmul.f32 %v2300, %v2313
      %v2327 = vmul.f32 %v2301, %v2314
      %v2328 = vmul.f32 %v2302, %v2315
      %v2329 = vmul.f32 %v2303, %v2316
      %v2330 = vmul.f32 %v2304, %v2317
      %v2331 = vmul.f32 %v2305, %v2318
      %v2332 = vsub.f32 2.0, %v2319
      %v2333 = vsub.f32 2.0, %v2320
      %v2334 = vsub.f32 2.0, %v2321
      %v2335 = vsub.f32 2.0, %v2322
      %v2336 = vsub.f32 2.0, %v2323
      %v2337 = vsub.f32 2.0, %v2324
      %v2338 = vsub.f32 2.0, %v2325
      %v2339 = vsub.f32 2.0, %v2326
      %v2340 = vsub.f32 2.0, %v2327
      %v2341 = vsub.f32 2.0, %v2328
      %v2342 = vsub.f32 2.0, %v2329
      %v2343 = vsub.f32 2.0, %v2330
      %v2344 = vsub.f32 2.0, %v2331
      %v2345 = vmul.f32 %v2306, %v2332
      %v2346 = vmul.f32 %v2307, %v2333
      %v2347 = vmul.f32 %v2308, %v2334
      %v2348 = vmul.f32 %v2309, %v2335
      %v2349 = vmul.f32 %v2310, %v2336
      %v2350 = vmul.f32 %v2311, %v2337
      %v2351 = vmul.f32 %v2312, %v2338
      %v2352 = vmul.f32 %v2313, %v2339
      %v2353 = vmul.f32 %v2314, %v2340
      %v2354 = vmul.f32 %v2315, %v2341
      %v2355 = vmul.f32 %v2316, %v2342
      %v2356 = vmul.f32 %v2317, %v2343
      %v2357 = vmul.f32 %v2318, %v2344
      %v2358 = vmul.f32 %v307, %v2345
      %v2359 = vmul.f32 %v309, %v2346
      %v2360 = vmul.f32 %v311, %v2347
      %v2361 = vmul.f32 %v313, %v2348
      %v2362 = vmul.f32 %v315, %v2349
      %v2363 = vmul.f32 %v317, %v2350
      %v2364 = vmul.f32 %v319, %v2351
      %v2365 = vmul.f32 %v321, %v2352
      %v2366 = vmul.f32 %v323, %v2353
      %v2367 = vmul.f32 %v325, %v2354
      %v2368 = vmul.f32 %v327, %v2355
      %v2369 = vmul.f32 %v329, %v2356
      %v2370 = vmul.f32 %v331, %v2357
      %v2371 = vmul.f32 %v1059, %v2358
      %v2372 = vmul.f32 %v1061, %v2359
      %v2373 = vmul.f32 %v1063, %v2360
      %v2374 = vmul.f32 %v1065, %v2361
      %v2375 = vmul.f32 %v1067, %v2362
      %v2376 = vmul.f32 %v1069, %v2363
      %v2377 = vmul.f32 %v1071, %v2364
      %v2378 = vmul.f32 %v1073, %v2365
      %v2379 = vmul.f32 %v1075, %v2366
      %v2380 = vmul.f32 %v1077, %v2367
      %v2381 = vmul.f32 %v1079, %v2368
      %v2382 = vmul.f32 %v1081, %v2369
      %v2383 = vmul.f32 %v1083, %v2370
      %2384 = vst [vmem:[%s213] sm:$0xff] %v2371
      %2385 = vst [vmem:[%s213 + $0x8] sm:$0xff] %v2372
      %2386 = vst [vmem:[%s213 + $0x10] sm:$0xff] %v2373
      %2387 = vst [vmem:[%s213 + $0x18] sm:$0xff] %v2374
      %2388 = vst [vmem:[%s213 + $0x20] sm:$0xff] %v2375
      %2389 = vst [vmem:[%s213 + $0x28] sm:$0xff] %v2376
      %2390 = vst [vmem:[%s213 + $0x30] sm:$0xff] %v2377
      %2391 = vst [vmem:[%s213 + $0x38] sm:$0xff] %v2378
      %2392 = vst [vmem:[%s213 + $0x40] sm:$0xff] %v2379
      %2393 = vst [vmem:[%s213 + $0x48] sm:$0xff] %v2380
      %2394 = vst [vmem:[%s213 + $0x50] sm:$0xff] %v2381
      %2395 = vst [vmem:[%s213 + $0x58] sm:$0xff] %v2382
      %2396 = vst [vmem:[%s213 + $0x60] sm:$0x3] %v2383
      %v2397 = vld [vmem:[%s385] sm:$0xff]
      %v2398 = vld [vmem:[%s385 + $0x8] sm:$0xff]
      %v2399 = vld [vmem:[%s385 + $0x10] sm:$0xff]
      %v2400 = vld [vmem:[%s385 + $0x18] sm:$0xff]
      %v2401 = vld [vmem:[%s385 + $0x20] sm:$0xff]
      %v2402 = vld [vmem:[%s385 + $0x28] sm:$0xff]
      %v2403 = vld [vmem:[%s385 + $0x30] sm:$0xff]
      %v2404 = vld [vmem:[%s385 + $0x38] sm:$0xff]
      %v2405 = vld [vmem:[%s385 + $0x40] sm:$0xff]
      %v2406 = vld [vmem:[%s385 + $0x48] sm:$0xff]
      %v2407 = vld [vmem:[%s385 + $0x50] sm:$0xff]
      %v2408 = vld [vmem:[%s385 + $0x58] sm:$0xff]
      %v2409 = vld [vmem:[%s385 + $0x60] sm:$0x3]
      %v2410 = vsub.f32 %v2397, %v993
      %v2411 = vsub.f32 %v2398, %v994
      %v2412 = vsub.f32 %v2399, %v995
      %v2413 = vsub.f32 %v2400, %v996
      %v2414 = vsub.f32 %v2401, %v997
      %v2415 = vsub.f32 %v2402, %v998
      %v2416 = vsub.f32 %v2403, %v999
      %v2417 = vsub.f32 %v2404, %v1000
      %v2418 = vsub.f32 %v2405, %v1001
      %v2419 = vsub.f32 %v2406, %v1002
      %v2420 = vsub.f32 %v2407, %v1003
      %v2421 = vsub.f32 %v2408, %v1004
      %v2422 = vsub.f32 %v2409, %v1005
      %v2423 = vmul.f32 %v2410, 1.442695
      %v2424 = vpow.pop %v2423
      %v2425 = vmul.f32 %v2411, 1.442695
      %v2426 = vpow.pop %v2425
      %v2427 = vmul.f32 %v2412, 1.442695
      %v2428 = vpow.pop %v2427
      %v2429 = vmul.f32 %v2413, 1.442695
      %v2430 = vpow.pop %v2429
      %v2431 = vmul.f32 %v2414, 1.442695
      %v2432 = vpow.pop %v2431
      %v2433 = vmul.f32 %v2415, 1.442695
      %v2434 = vpow.pop %v2433
      %v2435 = vmul.f32 %v2416, 1.442695
      %v2436 = vpow.pop %v2435
      %v2437 = vmul.f32 %v2417, 1.442695
      %v2438 = vpow.pop %v2437
      %v2439 = vmul.f32 %v2418, 1.442695
      %v2440 = vpow.pop %v2439
      %v2441 = vmul.f32 %v2419, 1.442695
      %v2442 = vpow.pop %v2441
      %v2443 = vmul.f32 %v2420, 1.442695
      %v2444 = vpow.pop %v2443
      %v2445 = vmul.f32 %v2421, 1.442695
      %v2446 = vpow.pop %v2445
      %v2447 = vmul.f32 %v2422, 1.442695
      %v2448 = vpow.pop %v2447
      %v2449 = vmul.f32 %v2424, %v2358
      %v2450 = vmul.f32 %v2426, %v2359
      %v2451 = vmul.f32 %v2428, %v2360
      %v2452 = vmul.f32 %v2430, %v2361
      %v2453 = vmul.f32 %v2432, %v2362
      %v2454 = vmul.f32 %v2434, %v2363
      %v2455 = vmul.f32 %v2436, %v2364
      %v2456 = vmul.f32 %v2438, %v2365
      %v2457 = vmul.f32 %v2440, %v2366
      %v2458 = vmul.f32 %v2442, %v2367
      %v2459 = vmul.f32 %v2444, %v2368
      %v2460 = vmul.f32 %v2446, %v2369
      %v2461 = vmul.f32 %v2448, %v2370
      %s2462 = scalar_lea.vmem %s213, 104
      %2463 = vst [vmem:[%s2462] sm:$0xff] %v2449
      %2464 = vst [vmem:[%s2462 + $0x8] sm:$0xff] %v2450
      %2465 = vst [vmem:[%s2462 + $0x10] sm:$0xff] %v2451
      %2466 = vst [vmem:[%s2462 + $0x18] sm:$0xff] %v2452
      %2467 = vst [vmem:[%s2462 + $0x20] sm:$0xff] %v2453
      %2468 = vst [vmem:[%s2462 + $0x28] sm:$0xff] %v2454
      %2469 = vst [vmem:[%s2462 + $0x30] sm:$0xff] %v2455
      %2470 = vst [vmem:[%s2462 + $0x38] sm:$0xff] %v2456
      %2471 = vst [vmem:[%s2462 + $0x40] sm:$0xff] %v2457
      %2472 = vst [vmem:[%s2462 + $0x48] sm:$0xff] %v2458
      %2473 = vst [vmem:[%s2462 + $0x50] sm:$0xff] %v2459
      %2474 = vst [vmem:[%s2462 + $0x58] sm:$0xff] %v2460
      %2475 = vst [vmem:[%s2462 + $0x60] sm:$0x3] %v2461
      %v2476 = vld [vmem:[%s412] sm:$0xff]
      %v2477 = vld [vmem:[%s412 + $0x8] sm:$0xff]
      %v2478 = vld [vmem:[%s412 + $0x10] sm:$0xff]
      %v2479 = vld [vmem:[%s412 + $0x18] sm:$0xff]
      %v2480 = vld [vmem:[%s412 + $0x20] sm:$0xff]
      %v2481 = vld [vmem:[%s412 + $0x28] sm:$0xff]
      %v2482 = vld [vmem:[%s412 + $0x30] sm:$0xff]
      %v2483 = vld [vmem:[%s412 + $0x38] sm:$0xff]
      %v2484 = vld [vmem:[%s412 + $0x40] sm:$0xff]
      %v2485 = vld [vmem:[%s412 + $0x48] sm:$0xff]
      %v2486 = vld [vmem:[%s412 + $0x50] sm:$0xff]
      %v2487 = vld [vmem:[%s412 + $0x58] sm:$0xff]
      %v2488 = vld [vmem:[%s412 + $0x60] sm:$0x3]
      %v2489 = vsub.f32 %v2476, %v993
      %v2490 = vsub.f32 %v2477, %v994
      %v2491 = vsub.f32 %v2478, %v995
      %v2492 = vsub.f32 %v2479, %v996
      %v2493 = vsub.f32 %v2480, %v997
      %v2494 = vsub.f32 %v2481, %v998
      %v2495 = vsub.f32 %v2482, %v999
      %v2496 = vsub.f32 %v2483, %v1000
      %v2497 = vsub.f32 %v2484, %v1001
      %v2498 = vsub.f32 %v2485, %v1002
      %v2499 = vsub.f32 %v2486, %v1003
      %v2500 = vsub.f32 %v2487, %v1004
      %v2501 = vsub.f32 %v2488, %v1005
      %v2502 = vmul.f32 %v2489, 1.442695
      %v2503 = vpow.pop %v2502
      %v2504 = vmul.f32 %v2490, 1.442695
      %v2505 = vpow.pop %v2504
      %v2506 = vmul.f32 %v2491, 1.442695
      %v2507 = vpow.pop %v2506
      %v2508 = vmul.f32 %v2492, 1.442695
      %v2509 = vpow.pop %v2508
      %v2510 = vmul.f32 %v2493, 1.442695
      %v2511 = vpow.pop %v2510
      %v2512 = vmul.f32 %v2494, 1.442695
      %v2513 = vpow.pop %v2512
      %v2514 = vmul.f32 %v2495, 1.442695
      %v2515 = vpow.pop %v2514
      %v2516 = vmul.f32 %v2496, 1.442695
      %v2517 = vpow.pop %v2516
      %v2518 = vmul.f32 %v2497, 1.442695
      %v2519 = vpow.pop %v2518
      %v2520 = vmul.f32 %v2498, 1.442695
      %v2521 = vpow.pop %v2520
      %v2522 = vmul.f32 %v2499, 1.442695
      %v2523 = vpow.pop %v2522
      %v2524 = vmul.f32 %v2500, 1.442695
      %v2525 = vpow.pop %v2524
      %v2526 = vmul.f32 %v2501, 1.442695
      %v2527 = vpow.pop %v2526
      %v2528 = vmul.f32 %v2503, %v2358
      %v2529 = vmul.f32 %v2505, %v2359
      %v2530 = vmul.f32 %v2507, %v2360
      %v2531 = vmul.f32 %v2509, %v2361
      %v2532 = vmul.f32 %v2511, %v2362
      %v2533 = vmul.f32 %v2513, %v2363
      %v2534 = vmul.f32 %v2515, %v2364
      %v2535 = vmul.f32 %v2517, %v2365
      %v2536 = vmul.f32 %v2519, %v2366
      %v2537 = vmul.f32 %v2521, %v2367
      %v2538 = vmul.f32 %v2523, %v2368
      %v2539 = vmul.f32 %v2525, %v2369
      %v2540 = vmul.f32 %v2527, %v2370
      %s2541 = scalar_lea.vmem %s213, 208
      %2542 = vst [vmem:[%s2541] sm:$0xff] %v2528
      %2543 = vst [vmem:[%s2541 + $0x8] sm:$0xff] %v2529
      %2544 = vst [vmem:[%s2541 + $0x10] sm:$0xff] %v2530
      %2545 = vst [vmem:[%s2541 + $0x18] sm:$0xff] %v2531
      %2546 = vst [vmem:[%s2541 + $0x20] sm:$0xff] %v2532
      %2547 = vst [vmem:[%s2541 + $0x28] sm:$0xff] %v2533
      %2548 = vst [vmem:[%s2541 + $0x30] sm:$0xff] %v2534
      %2549 = vst [vmem:[%s2541 + $0x38] sm:$0xff] %v2535
      %2550 = vst [vmem:[%s2541 + $0x40] sm:$0xff] %v2536
      %2551 = vst [vmem:[%s2541 + $0x48] sm:$0xff] %v2537
      %2552 = vst [vmem:[%s2541 + $0x50] sm:$0xff] %v2538
      %2553 = vst [vmem:[%s2541 + $0x58] sm:$0xff] %v2539
      %2554 = vst [vmem:[%s2541 + $0x60] sm:$0x3] %v2540
      %v2555 = vld [vmem:[%s439] sm:$0xff]
      %v2556 = vld [vmem:[%s439 + $0x8] sm:$0xff]
      %v2557 = vld [vmem:[%s439 + $0x10] sm:$0xff]
      %v2558 = vld [vmem:[%s439 + $0x18] sm:$0xff]
      %v2559 = vld [vmem:[%s439 + $0x20] sm:$0xff]
      %v2560 = vld [vmem:[%s439 + $0x28] sm:$0xff]
      %v2561 = vld [vmem:[%s439 + $0x30] sm:$0xff]
      %v2562 = vld [vmem:[%s439 + $0x38] sm:$0xff]
      %v2563 = vld [vmem:[%s439 + $0x40] sm:$0xff]
      %v2564 = vld [vmem:[%s439 + $0x48] sm:$0xff]
      %v2565 = vld [vmem:[%s439 + $0x50] sm:$0xff]
      %v2566 = vld [vmem:[%s439 + $0x58] sm:$0xff]
      %v2567 = vld [vmem:[%s439 + $0x60] sm:$0x3]
      %v2568 = vsub.f32 %v2555, %v993
      %v2569 = vsub.f32 %v2556, %v994
      %v2570 = vsub.f32 %v2557, %v995
      %v2571 = vsub.f32 %v2558, %v996
      %v2572 = vsub.f32 %v2559, %v997
      %v2573 = vsub.f32 %v2560, %v998
      %v2574 = vsub.f32 %v2561, %v999
      %v2575 = vsub.f32 %v2562, %v1000
      %v2576 = vsub.f32 %v2563, %v1001
      %v2577 = vsub.f32 %v2564, %v1002
      %v2578 = vsub.f32 %v2565, %v1003
      %v2579 = vsub.f32 %v2566, %v1004
      %v2580 = vsub.f32 %v2567, %v1005
      %v2581 = vmul.f32 %v2568, 1.442695
      %v2582 = vpow.pop %v2581
      %v2583 = vmul.f32 %v2569, 1.442695
      %v2584 = vpow.pop %v2583
      %v2585 = vmul.f32 %v2570, 1.442695
      %v2586 = vpow.pop %v2585
      %v2587 = vmul.f32 %v2571, 1.442695
      %v2588 = vpow.pop %v2587
      %v2589 = vmul.f32 %v2572, 1.442695
      %v2590 = vpow.pop %v2589
      %v2591 = vmul.f32 %v2573, 1.442695
      %v2592 = vpow.pop %v2591
      %v2593 = vmul.f32 %v2574, 1.442695
      %v2594 = vpow.pop %v2593
      %v2595 = vmul.f32 %v2575, 1.442695
      %v2596 = vpow.pop %v2595
      %v2597 = vmul.f32 %v2576, 1.442695
      %v2598 = vpow.pop %v2597
      %v2599 = vmul.f32 %v2577, 1.442695
      %v2600 = vpow.pop %v2599
      %v2601 = vmul.f32 %v2578, 1.442695
      %v2602 = vpow.pop %v2601
      %v2603 = vmul.f32 %v2579, 1.442695
      %v2604 = vpow.pop %v2603
      %v2605 = vmul.f32 %v2580, 1.442695
      %v2606 = vpow.pop %v2605
      %v2607 = vmul.f32 %v2582, %v2358
      %v2608 = vmul.f32 %v2584, %v2359
      %v2609 = vmul.f32 %v2586, %v2360
      %v2610 = vmul.f32 %v2588, %v2361
      %v2611 = vmul.f32 %v2590, %v2362
      %v2612 = vmul.f32 %v2592, %v2363
      %v2613 = vmul.f32 %v2594, %v2364
      %v2614 = vmul.f32 %v2596, %v2365
      %v2615 = vmul.f32 %v2598, %v2366
      %v2616 = vmul.f32 %v2600, %v2367
      %v2617 = vmul.f32 %v2602, %v2368
      %v2618 = vmul.f32 %v2604, %v2369
      %v2619 = vmul.f32 %v2606, %v2370
      %s2620 = scalar_lea.vmem %s213, 312
      %2621 = vst [vmem:[%s2620] sm:$0xff] %v2607
      %2622 = vst [vmem:[%s2620 + $0x8] sm:$0xff] %v2608
      %2623 = vst [vmem:[%s2620 + $0x10] sm:$0xff] %v2609
      %2624 = vst [vmem:[%s2620 + $0x18] sm:$0xff] %v2610
      %2625 = vst [vmem:[%s2620 + $0x20] sm:$0xff] %v2611
      %2626 = vst [vmem:[%s2620 + $0x28] sm:$0xff] %v2612
      %2627 = vst [vmem:[%s2620 + $0x30] sm:$0xff] %v2613
      %2628 = vst [vmem:[%s2620 + $0x38] sm:$0xff] %v2614
      %2629 = vst [vmem:[%s2620 + $0x40] sm:$0xff] %v2615
      %2630 = vst [vmem:[%s2620 + $0x48] sm:$0xff] %v2616
      %2631 = vst [vmem:[%s2620 + $0x50] sm:$0xff] %v2617
      %2632 = vst [vmem:[%s2620 + $0x58] sm:$0xff] %v2618
      %2633 = vst [vmem:[%s2620 + $0x60] sm:$0x3] %v2619
      %v2634 = vld [vmem:[%s736] sm:$0xff]
      %v2635 = vld [vmem:[%s736 + $0x8] sm:$0xff]
      %v2636 = vld [vmem:[%s736 + $0x10] sm:$0xff]
      %v2637 = vld [vmem:[%s736 + $0x18] sm:$0xff]
      %v2638 = vld [vmem:[%s736 + $0x20] sm:$0xff]
      %v2639 = vld [vmem:[%s736 + $0x28] sm:$0xff]
      %v2640 = vld [vmem:[%s736 + $0x30] sm:$0xff]
      %v2641 = vld [vmem:[%s736 + $0x38] sm:$0xff]
      %v2642 = vld [vmem:[%s736 + $0x40] sm:$0xff]
      %v2643 = vld [vmem:[%s736 + $0x48] sm:$0xff]
      %v2644 = vld [vmem:[%s736 + $0x50] sm:$0xff]
      %v2645 = vld [vmem:[%s736 + $0x58] sm:$0xff]
      %v2646 = vld [vmem:[%s736 + $0x60] sm:$0x3]
      %v2647 = vsub.f32 %v2634, %v993
      %v2648 = vsub.f32 %v2635, %v994
      %v2649 = vsub.f32 %v2636, %v995
      %v2650 = vsub.f32 %v2637, %v996
      %v2651 = vsub.f32 %v2638, %v997
      %v2652 = vsub.f32 %v2639, %v998
      %v2653 = vsub.f32 %v2640, %v999
      %v2654 = vsub.f32 %v2641, %v1000
      %v2655 = vsub.f32 %v2642, %v1001
      %v2656 = vsub.f32 %v2643, %v1002
      %v2657 = vsub.f32 %v2644, %v1003
      %v2658 = vsub.f32 %v2645, %v1004
      %v2659 = vsub.f32 %v2646, %v1005
      %v2660 = vmul.f32 %v2647, 1.442695
      %v2661 = vpow.pop %v2660
      %v2662 = vmul.f32 %v2648, 1.442695
      %v2663 = vpow.pop %v2662
      %v2664 = vmul.f32 %v2649, 1.442695
      %v2665 = vpow.pop %v2664
      %v2666 = vmul.f32 %v2650, 1.442695
      %v2667 = vpow.pop %v2666
      %v2668 = vmul.f32 %v2651, 1.442695
      %v2669 = vpow.pop %v2668
      %v2670 = vmul.f32 %v2652, 1.442695
      %v2671 = vpow.pop %v2670
      %v2672 = vmul.f32 %v2653, 1.442695
      %v2673 = vpow.pop %v2672
      %v2674 = vmul.f32 %v2654, 1.442695
      %v2675 = vpow.pop %v2674
      %v2676 = vmul.f32 %v2655, 1.442695
      %v2677 = vpow.pop %v2676
      %v2678 = vmul.f32 %v2656, 1.442695
      %v2679 = vpow.pop %v2678
      %v2680 = vmul.f32 %v2657, 1.442695
      %v2681 = vpow.pop %v2680
      %v2682 = vmul.f32 %v2658, 1.442695
      %v2683 = vpow.pop %v2682
      %v2684 = vmul.f32 %v2659, 1.442695
      %v2685 = vpow.pop %v2684
      %v2686 = vmul.f32 %v2661, %v2358
      %v2687 = vmul.f32 %v2663, %v2359
      %v2688 = vmul.f32 %v2665, %v2360
      %v2689 = vmul.f32 %v2667, %v2361
      %v2690 = vmul.f32 %v2669, %v2362
      %v2691 = vmul.f32 %v2671, %v2363
      %v2692 = vmul.f32 %v2673, %v2364
      %v2693 = vmul.f32 %v2675, %v2365
      %v2694 = vmul.f32 %v2677, %v2366
      %v2695 = vmul.f32 %v2679, %v2367
      %v2696 = vmul.f32 %v2681, %v2368
      %v2697 = vmul.f32 %v2683, %v2369
      %v2698 = vmul.f32 %v2685, %v2370
      %s2699 = scalar_lea.vmem %s213, 416
      %2700 = vst [vmem:[%s2699] sm:$0xff] %v2686
      %2701 = vst [vmem:[%s2699 + $0x8] sm:$0xff] %v2687
      %2702 = vst [vmem:[%s2699 + $0x10] sm:$0xff] %v2688
      %2703 = vst [vmem:[%s2699 + $0x18] sm:$0xff] %v2689
      %2704 = vst [vmem:[%s2699 + $0x20] sm:$0xff] %v2690
      %2705 = vst [vmem:[%s2699 + $0x28] sm:$0xff] %v2691
      %2706 = vst [vmem:[%s2699 + $0x30] sm:$0xff] %v2692
      %2707 = vst [vmem:[%s2699 + $0x38] sm:$0xff] %v2693
      %2708 = vst [vmem:[%s2699 + $0x40] sm:$0xff] %v2694
      %2709 = vst [vmem:[%s2699 + $0x48] sm:$0xff] %v2695
      %2710 = vst [vmem:[%s2699 + $0x50] sm:$0xff] %v2696
      %2711 = vst [vmem:[%s2699 + $0x58] sm:$0xff] %v2697
      %2712 = vst [vmem:[%s2699 + $0x60] sm:$0x3] %v2698
      %v2713 = vld [vmem:[%s763] sm:$0xff]
      %v2714 = vld [vmem:[%s763 + $0x8] sm:$0xff]
      %v2715 = vld [vmem:[%s763 + $0x10] sm:$0xff]
      %v2716 = vld [vmem:[%s763 + $0x18] sm:$0xff]
      %v2717 = vld [vmem:[%s763 + $0x20] sm:$0xff]
      %v2718 = vld [vmem:[%s763 + $0x28] sm:$0xff]
      %v2719 = vld [vmem:[%s763 + $0x30] sm:$0xff]
      %v2720 = vld [vmem:[%s763 + $0x38] sm:$0xff]
      %v2721 = vld [vmem:[%s763 + $0x40] sm:$0xff]
      %v2722 = vld [vmem:[%s763 + $0x48] sm:$0xff]
      %v2723 = vld [vmem:[%s763 + $0x50] sm:$0xff]
      %v2724 = vld [vmem:[%s763 + $0x58] sm:$0xff]
      %v2725 = vld [vmem:[%s763 + $0x60] sm:$0x3]
      %v2726 = vsub.f32 %v2713, %v993
      %v2727 = vsub.f32 %v2714, %v994
      %v2728 = vsub.f32 %v2715, %v995
      %v2729 = vsub.f32 %v2716, %v996
      %v2730 = vsub.f32 %v2717, %v997
      %v2731 = vsub.f32 %v2718, %v998
      %v2732 = vsub.f32 %v2719, %v999
      %v2733 = vsub.f32 %v2720, %v1000
      %v2734 = vsub.f32 %v2721, %v1001
      %v2735 = vsub.f32 %v2722, %v1002
      %v2736 = vsub.f32 %v2723, %v1003
      %v2737 = vsub.f32 %v2724, %v1004
      %v2738 = vsub.f32 %v2725, %v1005
      %v2739 = vmul.f32 %v2726, 1.442695
      %v2740 = vpow.pop %v2739
      %v2741 = vmul.f32 %v2727, 1.442695
      %v2742 = vpow.pop %v2741
      %v2743 = vmul.f32 %v2728, 1.442695
      %v2744 = vpow.pop %v2743
      %v2745 = vmul.f32 %v2729, 1.442695
      %v2746 = vpow.pop %v2745
      %v2747 = vmul.f32 %v2730, 1.442695
      %v2748 = vpow.pop %v2747
      %v2749 = vmul.f32 %v2731, 1.442695
      %v2750 = vpow.pop %v2749
      %v2751 = vmul.f32 %v2732, 1.442695
      %v2752 = vpow.pop %v2751
      %v2753 = vmul.f32 %v2733, 1.442695
      %v2754 = vpow.pop %v2753
      %v2755 = vmul.f32 %v2734, 1.442695
      %v2756 = vpow.pop %v2755
      %v2757 = vmul.f32 %v2735, 1.442695
      %v2758 = vpow.pop %v2757
      %v2759 = vmul.f32 %v2736, 1.442695
      %v2760 = vpow.pop %v2759
      %v2761 = vmul.f32 %v2737, 1.442695
      %v2762 = vpow.pop %v2761
      %v2763 = vmul.f32 %v2738, 1.442695
      %v2764 = vpow.pop %v2763
      %v2765 = vmul.f32 %v2740, %v2358
      %v2766 = vmul.f32 %v2742, %v2359
      %v2767 = vmul.f32 %v2744, %v2360
      %v2768 = vmul.f32 %v2746, %v2361
      %v2769 = vmul.f32 %v2748, %v2362
      %v2770 = vmul.f32 %v2750, %v2363
      %v2771 = vmul.f32 %v2752, %v2364
      %v2772 = vmul.f32 %v2754, %v2365
      %v2773 = vmul.f32 %v2756, %v2366
      %v2774 = vmul.f32 %v2758, %v2367
      %v2775 = vmul.f32 %v2760, %v2368
      %v2776 = vmul.f32 %v2762, %v2369
      %v2777 = vmul.f32 %v2764, %v2370
      %s2778 = scalar_lea.vmem %s213, 520
      %2779 = vst [vmem:[%s2778] sm:$0xff] %v2765
      %2780 = vst [vmem:[%s2778 + $0x8] sm:$0xff] %v2766
      %2781 = vst [vmem:[%s2778 + $0x10] sm:$0xff] %v2767
      %2782 = vst [vmem:[%s2778 + $0x18] sm:$0xff] %v2768
      %2783 = vst [vmem:[%s2778 + $0x20] sm:$0xff] %v2769
      %2784 = vst [vmem:[%s2778 + $0x28] sm:$0xff] %v2770
      %2785 = vst [vmem:[%s2778 + $0x30] sm:$0xff] %v2771
      %2786 = vst [vmem:[%s2778 + $0x38] sm:$0xff] %v2772
      %2787 = vst [vmem:[%s2778 + $0x40] sm:$0xff] %v2773
      %2788 = vst [vmem:[%s2778 + $0x48] sm:$0xff] %v2774
      %2789 = vst [vmem:[%s2778 + $0x50] sm:$0xff] %v2775
      %2790 = vst [vmem:[%s2778 + $0x58] sm:$0xff] %v2776
      %2791 = vst [vmem:[%s2778 + $0x60] sm:$0x3] %v2777
      %v2792 = vld [vmem:[%s790] sm:$0xff]
      %v2793 = vld [vmem:[%s790 + $0x8] sm:$0xff]
      %v2794 = vld [vmem:[%s790 + $0x10] sm:$0xff]
      %v2795 = vld [vmem:[%s790 + $0x18] sm:$0xff]
      %v2796 = vld [vmem:[%s790 + $0x20] sm:$0xff]
      %v2797 = vld [vmem:[%s790 + $0x28] sm:$0xff]
      %v2798 = vld [vmem:[%s790 + $0x30] sm:$0xff]
      %v2799 = vld [vmem:[%s790 + $0x38] sm:$0xff]
      %v2800 = vld [vmem:[%s790 + $0x40] sm:$0xff]
      %v2801 = vld [vmem:[%s790 + $0x48] sm:$0xff]
      %v2802 = vld [vmem:[%s790 + $0x50] sm:$0xff]
      %v2803 = vld [vmem:[%s790 + $0x58] sm:$0xff]
      %v2804 = vld [vmem:[%s790 + $0x60] sm:$0x3]
      %v2805 = vsub.f32 %v2792, %v993
      %v2806 = vsub.f32 %v2793, %v994
      %v2807 = vsub.f32 %v2794, %v995
      %v2808 = vsub.f32 %v2795, %v996
      %v2809 = vsub.f32 %v2796, %v997
      %v2810 = vsub.f32 %v2797, %v998
      %v2811 = vsub.f32 %v2798, %v999
      %v2812 = vsub.f32 %v2799, %v1000
      %v2813 = vsub.f32 %v2800, %v1001
      %v2814 = vsub.f32 %v2801, %v1002
      %v2815 = vsub.f32 %v2802, %v1003
      %v2816 = vsub.f32 %v2803, %v1004
      %v2817 = vsub.f32 %v2804, %v1005
      %v2818 = vmul.f32 %v2805, 1.442695
      %v2819 = vpow.pop %v2818
      %v2820 = vmul.f32 %v2806, 1.442695
      %v2821 = vpow.pop %v2820
      %v2822 = vmul.f32 %v2807, 1.442695
      %v2823 = vpow.pop %v2822
      %v2824 = vmul.f32 %v2808, 1.442695
      %v2825 = vpow.pop %v2824
      %v2826 = vmul.f32 %v2809, 1.442695
      %v2827 = vpow.pop %v2826
      %v2828 = vmul.f32 %v2810, 1.442695
      %v2829 = vpow.pop %v2828
      %v2830 = vmul.f32 %v2811, 1.442695
      %v2831 = vpow.pop %v2830
      %v2832 = vmul.f32 %v2812, 1.442695
      %v2833 = vpow.pop %v2832
      %v2834 = vmul.f32 %v2813, 1.442695
      %v2835 = vpow.pop %v2834
      %v2836 = vmul.f32 %v2814, 1.442695
      %v2837 = vpow.pop %v2836
      %v2838 = vmul.f32 %v2815, 1.442695
      %v2839 = vpow.pop %v2838
      %v2840 = vmul.f32 %v2816, 1.442695
      %v2841 = vpow.pop %v2840
      %v2842 = vmul.f32 %v2817, 1.442695
      %v2843 = vpow.pop %v2842
      %v2844 = vmul.f32 %v2819, %v2358
      %v2845 = vmul.f32 %v2821, %v2359
      %v2846 = vmul.f32 %v2823, %v2360
      %v2847 = vmul.f32 %v2825, %v2361
      %v2848 = vmul.f32 %v2827, %v2362
      %v2849 = vmul.f32 %v2829, %v2363
      %v2850 = vmul.f32 %v2831, %v2364
      %v2851 = vmul.f32 %v2833, %v2365
      %v2852 = vmul.f32 %v2835, %v2366
      %v2853 = vmul.f32 %v2837, %v2367
      %v2854 = vmul.f32 %v2839, %v2368
      %v2855 = vmul.f32 %v2841, %v2369
      %v2856 = vmul.f32 %v2843, %v2370
      %s2857 = scalar_lea.vmem %s213, 624
      %2858 = vst [vmem:[%s2857] sm:$0xff] %v2844
      %2859 = vst [vmem:[%s2857 + $0x8] sm:$0xff] %v2845
      %2860 = vst [vmem:[%s2857 + $0x10] sm:$0xff] %v2846
      %2861 = vst [vmem:[%s2857 + $0x18] sm:$0xff] %v2847
      %2862 = vst [vmem:[%s2857 + $0x20] sm:$0xff] %v2848
      %2863 = vst [vmem:[%s2857 + $0x28] sm:$0xff] %v2849
      %2864 = vst [vmem:[%s2857 + $0x30] sm:$0xff] %v2850
      %2865 = vst [vmem:[%s2857 + $0x38] sm:$0xff] %v2851
      %2866 = vst [vmem:[%s2857 + $0x40] sm:$0xff] %v2852
      %2867 = vst [vmem:[%s2857 + $0x48] sm:$0xff] %v2853
      %2868 = vst [vmem:[%s2857 + $0x50] sm:$0xff] %v2854
      %2869 = vst [vmem:[%s2857 + $0x58] sm:$0xff] %v2855
      %2870 = vst [vmem:[%s2857 + $0x60] sm:$0x3] %v2856
      %v2871 = vld [vmem:[%s817] sm:$0xff]
      %v2872 = vld [vmem:[%s817 + $0x8] sm:$0xff]
      %v2873 = vld [vmem:[%s817 + $0x10] sm:$0xff]
      %v2874 = vld [vmem:[%s817 + $0x18] sm:$0xff]
      %v2875 = vld [vmem:[%s817 + $0x20] sm:$0xff]
      %v2876 = vld [vmem:[%s817 + $0x28] sm:$0xff]
      %v2877 = vld [vmem:[%s817 + $0x30] sm:$0xff]
      %v2878 = vld [vmem:[%s817 + $0x38] sm:$0xff]
      %v2879 = vld [vmem:[%s817 + $0x40] sm:$0xff]
      %v2880 = vld [vmem:[%s817 + $0x48] sm:$0xff]
      %v2881 = vld [vmem:[%s817 + $0x50] sm:$0xff]
      %v2882 = vld [vmem:[%s817 + $0x58] sm:$0xff]
      %v2883 = vld [vmem:[%s817 + $0x60] sm:$0x3]
      %v2884 = vsub.f32 %v2871, %v993
      %v2885 = vsub.f32 %v2872, %v994
      %v2886 = vsub.f32 %v2873, %v995
      %v2887 = vsub.f32 %v2874, %v996
      %v2888 = vsub.f32 %v2875, %v997
      %v2889 = vsub.f32 %v2876, %v998
      %v2890 = vsub.f32 %v2877, %v999
      %v2891 = vsub.f32 %v2878, %v1000
      %v2892 = vsub.f32 %v2879, %v1001
      %v2893 = vsub.f32 %v2880, %v1002
      %v2894 = vsub.f32 %v2881, %v1003
      %v2895 = vsub.f32 %v2882, %v1004
      %v2896 = vsub.f32 %v2883, %v1005
      %v2897 = vmul.f32 %v2884, 1.442695
      %v2898 = vpow.pop %v2897
      %v2899 = vmul.f32 %v2885, 1.442695
      %v2900 = vpow.pop %v2899
      %v2901 = vmul.f32 %v2886, 1.442695
      %v2902 = vpow.pop %v2901
      %v2903 = vmul.f32 %v2887, 1.442695
      %v2904 = vpow.pop %v2903
      %v2905 = vmul.f32 %v2888, 1.442695
      %v2906 = vpow.pop %v2905
      %v2907 = vmul.f32 %v2889, 1.442695
      %v2908 = vpow.pop %v2907
      %v2909 = vmul.f32 %v2890, 1.442695
      %v2910 = vpow.pop %v2909
      %v2911 = vmul.f32 %v2891, 1.442695
      %v2912 = vpow.pop %v2911
      %v2913 = vmul.f32 %v2892, 1.442695
      %v2914 = vpow.pop %v2913
      %v2915 = vmul.f32 %v2893, 1.442695
      %v2916 = vpow.pop %v2915
      %v2917 = vmul.f32 %v2894, 1.442695
      %v2918 = vpow.pop %v2917
      %v2919 = vmul.f32 %v2895, 1.442695
      %v2920 = vpow.pop %v2919
      %v2921 = vmul.f32 %v2896, 1.442695
      %v2922 = vpow.pop %v2921
      %v2923 = vmul.f32 %v2898, %v2358
      %v2924 = vmul.f32 %v2900, %v2359
      %v2925 = vmul.f32 %v2902, %v2360
      %v2926 = vmul.f32 %v2904, %v2361
      %v2927 = vmul.f32 %v2906, %v2362
      %v2928 = vmul.f32 %v2908, %v2363
      %v2929 = vmul.f32 %v2910, %v2364
      %v2930 = vmul.f32 %v2912, %v2365
      %v2931 = vmul.f32 %v2914, %v2366
      %v2932 = vmul.f32 %v2916, %v2367
      %v2933 = vmul.f32 %v2918, %v2368
      %v2934 = vmul.f32 %v2920, %v2369
      %v2935 = vmul.f32 %v2922, %v2370
      %s2936 = scalar_lea.vmem %s213, 728
      %2937 = vst [vmem:[%s2936] sm:$0xff] %v2923
      %2938 = vst [vmem:[%s2936 + $0x8] sm:$0xff] %v2924
      %2939 = vst [vmem:[%s2936 + $0x10] sm:$0xff] %v2925
      %2940 = vst [vmem:[%s2936 + $0x18] sm:$0xff] %v2926
      %2941 = vst [vmem:[%s2936 + $0x20] sm:$0xff] %v2927
      %2942 = vst [vmem:[%s2936 + $0x28] sm:$0xff] %v2928
      %2943 = vst [vmem:[%s2936 + $0x30] sm:$0xff] %v2929
      %2944 = vst [vmem:[%s2936 + $0x38] sm:$0xff] %v2930
      %2945 = vst [vmem:[%s2936 + $0x40] sm:$0xff] %v2931
      %2946 = vst [vmem:[%s2936 + $0x48] sm:$0xff] %v2932
      %2947 = vst [vmem:[%s2936 + $0x50] sm:$0xff] %v2933
      %2948 = vst [vmem:[%s2936 + $0x58] sm:$0xff] %v2934
      %2949 = vst [vmem:[%s2936 + $0x60] sm:$0x3] %v2935
      %v2950 = vld [vmem:[%s844] sm:$0xff]
      %v2951 = vld [vmem:[%s844 + $0x8] sm:$0xff]
      %v2952 = vld [vmem:[%s844 + $0x10] sm:$0xff]
      %v2953 = vld [vmem:[%s844 + $0x18] sm:$0xff]
      %v2954 = vld [vmem:[%s844 + $0x20] sm:$0xff]
      %v2955 = vld [vmem:[%s844 + $0x28] sm:$0xff]
      %v2956 = vld [vmem:[%s844 + $0x30] sm:$0xff]
      %v2957 = vld [vmem:[%s844 + $0x38] sm:$0xff]
      %v2958 = vld [vmem:[%s844 + $0x40] sm:$0xff]
      %v2959 = vld [vmem:[%s844 + $0x48] sm:$0xff]
      %v2960 = vld [vmem:[%s844 + $0x50] sm:$0xff]
      %v2961 = vld [vmem:[%s844 + $0x58] sm:$0xff]
      %v2962 = vld [vmem:[%s844 + $0x60] sm:$0x3]
      %v2963 = vsub.f32 %v2950, %v993
      %v2964 = vsub.f32 %v2951, %v994
      %v2965 = vsub.f32 %v2952, %v995
      %v2966 = vsub.f32 %v2953, %v996
      %v2967 = vsub.f32 %v2954, %v997
      %v2968 = vsub.f32 %v2955, %v998
      %v2969 = vsub.f32 %v2956, %v999
      %v2970 = vsub.f32 %v2957, %v1000
      %v2971 = vsub.f32 %v2958, %v1001
      %v2972 = vsub.f32 %v2959, %v1002
      %v2973 = vsub.f32 %v2960, %v1003
      %v2974 = vsub.f32 %v2961, %v1004
      %v2975 = vsub.f32 %v2962, %v1005
      %v2976 = vmul.f32 %v2963, 1.442695
      %v2977 = vpow.pop %v2976
      %v2978 = vmul.f32 %v2964, 1.442695
      %v2979 = vpow.pop %v2978
      %v2980 = vmul.f32 %v2965, 1.442695
      %v2981 = vpow.pop %v2980
      %v2982 = vmul.f32 %v2966, 1.442695
      %v2983 = vpow.pop %v2982
      %v2984 = vmul.f32 %v2967, 1.442695
      %v2985 = vpow.pop %v2984
      %v2986 = vmul.f32 %v2968, 1.442695
      %v2987 = vpow.pop %v2986
      %v2988 = vmul.f32 %v2969, 1.442695
      %v2989 = vpow.pop %v2988
      %v2990 = vmul.f32 %v2970, 1.442695
      %v2991 = vpow.pop %v2990
      %v2992 = vmul.f32 %v2971, 1.442695
      %v2993 = vpow.pop %v2992
      %v2994 = vmul.f32 %v2972, 1.442695
      %v2995 = vpow.pop %v2994
      %v2996 = vmul.f32 %v2973, 1.442695
      %v2997 = vpow.pop %v2996
      %v2998 = vmul.f32 %v2974, 1.442695
      %v2999 = vpow.pop %v2998
      %v3000 = vmul.f32 %v2975, 1.442695
      %v3001 = vpow.pop %v3000
      %v3002 = vmul.f32 %v2977, %v2358
      %v3003 = vmul.f32 %v2979, %v2359
      %v3004 = vmul.f32 %v2981, %v2360
      %v3005 = vmul.f32 %v2983, %v2361
      %v3006 = vmul.f32 %v2985, %v2362
      %v3007 = vmul.f32 %v2987, %v2363
      %v3008 = vmul.f32 %v2989, %v2364
      %v3009 = vmul.f32 %v2991, %v2365
      %v3010 = vmul.f32 %v2993, %v2366
      %v3011 = vmul.f32 %v2995, %v2367
      %v3012 = vmul.f32 %v2997, %v2368
      %v3013 = vmul.f32 %v2999, %v2369
      %v3014 = vmul.f32 %v3001, %v2370
      %s3015 = scalar_lea.vmem %s213, 832
      %3016 = vst [vmem:[%s3015] sm:$0xff] %v3002
      %3017 = vst [vmem:[%s3015 + $0x8] sm:$0xff] %v3003
      %3018 = vst [vmem:[%s3015 + $0x10] sm:$0xff] %v3004
      %3019 = vst [vmem:[%s3015 + $0x18] sm:$0xff] %v3005
      %3020 = vst [vmem:[%s3015 + $0x20] sm:$0xff] %v3006
      %3021 = vst [vmem:[%s3015 + $0x28] sm:$0xff] %v3007
      %3022 = vst [vmem:[%s3015 + $0x30] sm:$0xff] %v3008
      %3023 = vst [vmem:[%s3015 + $0x38] sm:$0xff] %v3009
      %3024 = vst [vmem:[%s3015 + $0x40] sm:$0xff] %v3010
      %3025 = vst [vmem:[%s3015 + $0x48] sm:$0xff] %v3011
      %3026 = vst [vmem:[%s3015 + $0x50] sm:$0xff] %v3012
      %3027 = vst [vmem:[%s3015 + $0x58] sm:$0xff] %v3013
      %3028 = vst [vmem:[%s3015 + $0x60] sm:$0x3] %v3014
      %v3029 = vld [vmem:[%s871] sm:$0xff]
      %v3030 = vld [vmem:[%s871 + $0x8] sm:$0xff]
      %v3031 = vld [vmem:[%s871 + $0x10] sm:$0xff]
      %v3032 = vld [vmem:[%s871 + $0x18] sm:$0xff]
      %v3033 = vld [vmem:[%s871 + $0x20] sm:$0xff]
      %v3034 = vld [vmem:[%s871 + $0x28] sm:$0xff]
      %v3035 = vld [vmem:[%s871 + $0x30] sm:$0xff]
      %v3036 = vld [vmem:[%s871 + $0x38] sm:$0xff]
      %v3037 = vld [vmem:[%s871 + $0x40] sm:$0xff]
      %v3038 = vld [vmem:[%s871 + $0x48] sm:$0xff]
      %v3039 = vld [vmem:[%s871 + $0x50] sm:$0xff]
      %v3040 = vld [vmem:[%s871 + $0x58] sm:$0xff]
      %v3041 = vld [vmem:[%s871 + $0x60] sm:$0x3]
      %v3042 = vsub.f32 %v3029, %v993
      %v3043 = vsub.f32 %v3030, %v994
      %v3044 = vsub.f32 %v3031, %v995
      %v3045 = vsub.f32 %v3032, %v996
      %v3046 = vsub.f32 %v3033, %v997
      %v3047 = vsub.f32 %v3034, %v998
      %v3048 = vsub.f32 %v3035, %v999
      %v3049 = vsub.f32 %v3036, %v1000
      %v3050 = vsub.f32 %v3037, %v1001
      %v3051 = vsub.f32 %v3038, %v1002
      %v3052 = vsub.f32 %v3039, %v1003
      %v3053 = vsub.f32 %v3040, %v1004
      %v3054 = vsub.f32 %v3041, %v1005
      %v3055 = vmul.f32 %v3042, 1.442695
      %v3056 = vpow.pop %v3055
      %v3057 = vmul.f32 %v3043, 1.442695
      %v3058 = vpow.pop %v3057
      %v3059 = vmul.f32 %v3044, 1.442695
      %v3060 = vpow.pop %v3059
      %v3061 = vmul.f32 %v3045, 1.442695
      %v3062 = vpow.pop %v3061
      %v3063 = vmul.f32 %v3046, 1.442695
      %v3064 = vpow.pop %v3063
      %v3065 = vmul.f32 %v3047, 1.442695
      %v3066 = vpow.pop %v3065
      %v3067 = vmul.f32 %v3048, 1.442695
      %v3068 = vpow.pop %v3067
      %v3069 = vmul.f32 %v3049, 1.442695
      %v3070 = vpow.pop %v3069
      %v3071 = vmul.f32 %v3050, 1.442695
      %v3072 = vpow.pop %v3071
      %v3073 = vmul.f32 %v3051, 1.442695
      %v3074 = vpow.pop %v3073
      %v3075 = vmul.f32 %v3052, 1.442695
      %v3076 = vpow.pop %v3075
      %v3077 = vmul.f32 %v3053, 1.442695
      %v3078 = vpow.pop %v3077
      %v3079 = vmul.f32 %v3054, 1.442695
      %v3080 = vpow.pop %v3079
      %v3081 = vmul.f32 %v3056, %v2358
      %v3082 = vmul.f32 %v3058, %v2359
      %v3083 = vmul.f32 %v3060, %v2360
      %v3084 = vmul.f32 %v3062, %v2361
      %v3085 = vmul.f32 %v3064, %v2362
      %v3086 = vmul.f32 %v3066, %v2363
      %v3087 = vmul.f32 %v3068, %v2364
      %v3088 = vmul.f32 %v3070, %v2365
      %v3089 = vmul.f32 %v3072, %v2366
      %v3090 = vmul.f32 %v3074, %v2367
      %v3091 = vmul.f32 %v3076, %v2368
      %v3092 = vmul.f32 %v3078, %v2369
      %v3093 = vmul.f32 %v3080, %v2370
      %s3094 = scalar_lea.vmem %s213, 936
      %3095 = vst [vmem:[%s3094] sm:$0xff] %v3081
      %3096 = vst [vmem:[%s3094 + $0x8] sm:$0xff] %v3082
      %3097 = vst [vmem:[%s3094 + $0x10] sm:$0xff] %v3083
      %3098 = vst [vmem:[%s3094 + $0x18] sm:$0xff] %v3084
      %3099 = vst [vmem:[%s3094 + $0x20] sm:$0xff] %v3085
      %3100 = vst [vmem:[%s3094 + $0x28] sm:$0xff] %v3086
      %3101 = vst [vmem:[%s3094 + $0x30] sm:$0xff] %v3087
      %3102 = vst [vmem:[%s3094 + $0x38] sm:$0xff] %v3088
      %3103 = vst [vmem:[%s3094 + $0x40] sm:$0xff] %v3089
      %3104 = vst [vmem:[%s3094 + $0x48] sm:$0xff] %v3090
      %3105 = vst [vmem:[%s3094 + $0x50] sm:$0xff] %v3091
      %3106 = vst [vmem:[%s3094 + $0x58] sm:$0xff] %v3092
      %3107 = vst [vmem:[%s3094 + $0x60] sm:$0x3] %v3093
      %v3108 = vld [vmem:[%s898] sm:$0xff]
      %v3109 = vld [vmem:[%s898 + $0x8] sm:$0xff]
      %v3110 = vld [vmem:[%s898 + $0x10] sm:$0xff]
      %v3111 = vld [vmem:[%s898 + $0x18] sm:$0xff]
      %v3112 = vld [vmem:[%s898 + $0x20] sm:$0xff]
      %v3113 = vld [vmem:[%s898 + $0x28] sm:$0xff]
      %v3114 = vld [vmem:[%s898 + $0x30] sm:$0xff]
      %v3115 = vld [vmem:[%s898 + $0x38] sm:$0xff]
      %v3116 = vld [vmem:[%s898 + $0x40] sm:$0xff]
      %v3117 = vld [vmem:[%s898 + $0x48] sm:$0xff]
      %v3118 = vld [vmem:[%s898 + $0x50] sm:$0xff]
      %v3119 = vld [vmem:[%s898 + $0x58] sm:$0xff]
      %v3120 = vld [vmem:[%s898 + $0x60] sm:$0x3]
      %v3121 = vsub.f32 %v3108, %v993
      %v3122 = vsub.f32 %v3109, %v994
      %v3123 = vsub.f32 %v3110, %v995
      %v3124 = vsub.f32 %v3111, %v996
      %v3125 = vsub.f32 %v3112, %v997
      %v3126 = vsub.f32 %v3113, %v998
      %v3127 = vsub.f32 %v3114, %v999
      %v3128 = vsub.f32 %v3115, %v1000
      %v3129 = vsub.f32 %v3116, %v1001
      %v3130 = vsub.f32 %v3117, %v1002
      %v3131 = vsub.f32 %v3118, %v1003
      %v3132 = vsub.f32 %v3119, %v1004
      %v3133 = vsub.f32 %v3120, %v1005
      %v3134 = vmul.f32 %v3121, 1.442695
      %v3135 = vpow.pop %v3134
      %v3136 = vmul.f32 %v3122, 1.442695
      %v3137 = vpow.pop %v3136
      %v3138 = vmul.f32 %v3123, 1.442695
      %v3139 = vpow.pop %v3138
      %v3140 = vmul.f32 %v3124, 1.442695
      %v3141 = vpow.pop %v3140
      %v3142 = vmul.f32 %v3125, 1.442695
      %v3143 = vpow.pop %v3142
      %v3144 = vmul.f32 %v3126, 1.442695
      %v3145 = vpow.pop %v3144
      %v3146 = vmul.f32 %v3127, 1.442695
      %v3147 = vpow.pop %v3146
      %v3148 = vmul.f32 %v3128, 1.442695
      %v3149 = vpow.pop %v3148
      %v3150 = vmul.f32 %v3129, 1.442695
      %v3151 = vpow.pop %v3150
      %v3152 = vmul.f32 %v3130, 1.442695
      %v3153 = vpow.pop %v3152
      %v3154 = vmul.f32 %v3131, 1.442695
      %v3155 = vpow.pop %v3154
      %v3156 = vmul.f32 %v3132, 1.442695
      %v3157 = vpow.pop %v3156
      %v3158 = vmul.f32 %v3133, 1.442695
      %v3159 = vpow.pop %v3158
      %v3160 = vmul.f32 %v3135, %v2358
      %v3161 = vmul.f32 %v3137, %v2359
      %v3162 = vmul.f32 %v3139, %v2360
      %v3163 = vmul.f32 %v3141, %v2361
      %v3164 = vmul.f32 %v3143, %v2362
      %v3165 = vmul.f32 %v3145, %v2363
      %v3166 = vmul.f32 %v3147, %v2364
      %v3167 = vmul.f32 %v3149, %v2365
      %v3168 = vmul.f32 %v3151, %v2366
      %v3169 = vmul.f32 %v3153, %v2367
      %v3170 = vmul.f32 %v3155, %v2368
      %v3171 = vmul.f32 %v3157, %v2369
      %v3172 = vmul.f32 %v3159, %v2370
      %s3173 = scalar_lea.vmem %s213, 1040
      %3174 = vst [vmem:[%s3173] sm:$0xff] %v3160
      %3175 = vst [vmem:[%s3173 + $0x8] sm:$0xff] %v3161
      %3176 = vst [vmem:[%s3173 + $0x10] sm:$0xff] %v3162
      %3177 = vst [vmem:[%s3173 + $0x18] sm:$0xff] %v3163
      %3178 = vst [vmem:[%s3173 + $0x20] sm:$0xff] %v3164
      %3179 = vst [vmem:[%s3173 + $0x28] sm:$0xff] %v3165
      %3180 = vst [vmem:[%s3173 + $0x30] sm:$0xff] %v3166
      %3181 = vst [vmem:[%s3173 + $0x38] sm:$0xff] %v3167
      %3182 = vst [vmem:[%s3173 + $0x40] sm:$0xff] %v3168
      %3183 = vst [vmem:[%s3173 + $0x48] sm:$0xff] %v3169
      %3184 = vst [vmem:[%s3173 + $0x50] sm:$0xff] %v3170
      %3185 = vst [vmem:[%s3173 + $0x58] sm:$0xff] %v3171
      %3186 = vst [vmem:[%s3173 + $0x60] sm:$0x3] %v3172
      %v3187 = vld [vmem:[%s925] sm:$0xff]
      %v3188 = vld [vmem:[%s925 + $0x8] sm:$0xff]
      %v3189 = vld [vmem:[%s925 + $0x10] sm:$0xff]
      %v3190 = vld [vmem:[%s925 + $0x18] sm:$0xff]
      %v3191 = vld [vmem:[%s925 + $0x20] sm:$0xff]
      %v3192 = vld [vmem:[%s925 + $0x28] sm:$0xff]
      %v3193 = vld [vmem:[%s925 + $0x30] sm:$0xff]
      %v3194 = vld [vmem:[%s925 + $0x38] sm:$0xff]
      %v3195 = vld [vmem:[%s925 + $0x40] sm:$0xff]
      %v3196 = vld [vmem:[%s925 + $0x48] sm:$0xff]
      %v3197 = vld [vmem:[%s925 + $0x50] sm:$0xff]
      %v3198 = vld [vmem:[%s925 + $0x58] sm:$0xff]
      %v3199 = vld [vmem:[%s925 + $0x60] sm:$0x3]
      %v3200 = vsub.f32 %v3187, %v993
      %v3201 = vsub.f32 %v3188, %v994
      %v3202 = vsub.f32 %v3189, %v995
      %v3203 = vsub.f32 %v3190, %v996
      %v3204 = vsub.f32 %v3191, %v997
      %v3205 = vsub.f32 %v3192, %v998
      %v3206 = vsub.f32 %v3193, %v999
      %v3207 = vsub.f32 %v3194, %v1000
      %v3208 = vsub.f32 %v3195, %v1001
      %v3209 = vsub.f32 %v3196, %v1002
      %v3210 = vsub.f32 %v3197, %v1003
      %v3211 = vsub.f32 %v3198, %v1004
      %v3212 = vsub.f32 %v3199, %v1005
      %v3213 = vmul.f32 %v3200, 1.442695
      %v3214 = vpow.pop %v3213
      %v3215 = vmul.f32 %v3201, 1.442695
      %v3216 = vpow.pop %v3215
      %v3217 = vmul.f32 %v3202, 1.442695
      %v3218 = vpow.pop %v3217
      %v3219 = vmul.f32 %v3203, 1.442695
      %v3220 = vpow.pop %v3219
      %v3221 = vmul.f32 %v3204, 1.442695
      %v3222 = vpow.pop %v3221
      %v3223 = vmul.f32 %v3205, 1.442695
      %v3224 = vpow.pop %v3223
      %v3225 = vmul.f32 %v3206, 1.442695
      %v3226 = vpow.pop %v3225
      %v3227 = vmul.f32 %v3207, 1.442695
      %v3228 = vpow.pop %v3227
      %v3229 = vmul.f32 %v3208, 1.442695
      %v3230 = vpow.pop %v3229
      %v3231 = vmul.f32 %v3209, 1.442695
      %v3232 = vpow.pop %v3231
      %v3233 = vmul.f32 %v3210, 1.442695
      %v3234 = vpow.pop %v3233
      %v3235 = vmul.f32 %v3211, 1.442695
      %v3236 = vpow.pop %v3235
      %v3237 = vmul.f32 %v3212, 1.442695
      %v3238 = vpow.pop %v3237
      %v3239 = vmul.f32 %v3214, %v2358
      %v3240 = vmul.f32 %v3216, %v2359
      %v3241 = vmul.f32 %v3218, %v2360
      %v3242 = vmul.f32 %v3220, %v2361
      %v3243 = vmul.f32 %v3222, %v2362
      %v3244 = vmul.f32 %v3224, %v2363
      %v3245 = vmul.f32 %v3226, %v2364
      %v3246 = vmul.f32 %v3228, %v2365
      %v3247 = vmul.f32 %v3230, %v2366
      %v3248 = vmul.f32 %v3232, %v2367
      %v3249 = vmul.f32 %v3234, %v2368
      %v3250 = vmul.f32 %v3236, %v2369
      %v3251 = vmul.f32 %v3238, %v2370
      %s3252 = scalar_lea.vmem %s213, 1144
      %3253 = vst [vmem:[%s3252] sm:$0xff] %v3239
      %3254 = vst [vmem:[%s3252 + $0x8] sm:$0xff] %v3240
      %3255 = vst [vmem:[%s3252 + $0x10] sm:$0xff] %v3241
      %3256 = vst [vmem:[%s3252 + $0x18] sm:$0xff] %v3242
      %3257 = vst [vmem:[%s3252 + $0x20] sm:$0xff] %v3243
      %3258 = vst [vmem:[%s3252 + $0x28] sm:$0xff] %v3244
      %3259 = vst [vmem:[%s3252 + $0x30] sm:$0xff] %v3245
      %3260 = vst [vmem:[%s3252 + $0x38] sm:$0xff] %v3246
      %3261 = vst [vmem:[%s3252 + $0x40] sm:$0xff] %v3247
      %3262 = vst [vmem:[%s3252 + $0x48] sm:$0xff] %v3248
      %3263 = vst [vmem:[%s3252 + $0x50] sm:$0xff] %v3249
      %3264 = vst [vmem:[%s3252 + $0x58] sm:$0xff] %v3250
      %3265 = vst [vmem:[%s3252 + $0x60] sm:$0x3] %v3251
      %v3266 = vld [vmem:[%s952] sm:$0xff]
      %v3267 = vld [vmem:[%s952 + $0x8] sm:$0xff]
      %v3268 = vld [vmem:[%s952 + $0x10] sm:$0xff]
      %v3269 = vld [vmem:[%s952 + $0x18] sm:$0xff]
      %v3270 = vld [vmem:[%s952 + $0x20] sm:$0xff]
      %v3271 = vld [vmem:[%s952 + $0x28] sm:$0xff]
      %v3272 = vld [vmem:[%s952 + $0x30] sm:$0xff]
      %v3273 = vld [vmem:[%s952 + $0x38] sm:$0xff]
      %v3274 = vld [vmem:[%s952 + $0x40] sm:$0xff]
      %v3275 = vld [vmem:[%s952 + $0x48] sm:$0xff]
      %v3276 = vld [vmem:[%s952 + $0x50] sm:$0xff]
      %v3277 = vld [vmem:[%s952 + $0x58] sm:$0xff]
      %v3278 = vld [vmem:[%s952 + $0x60] sm:$0x3]
      %v3279 = vsub.f32 %v3266, %v993
      %v3280 = vsub.f32 %v3267, %v994
      %v3281 = vsub.f32 %v3268, %v995
      %v3282 = vsub.f32 %v3269, %v996
      %v3283 = vsub.f32 %v3270, %v997
      %v3284 = vsub.f32 %v3271, %v998
      %v3285 = vsub.f32 %v3272, %v999
      %v3286 = vsub.f32 %v3273, %v1000
      %v3287 = vsub.f32 %v3274, %v1001
      %v3288 = vsub.f32 %v3275, %v1002
      %v3289 = vsub.f32 %v3276, %v1003
      %v3290 = vsub.f32 %v3277, %v1004
      %v3291 = vsub.f32 %v3278, %v1005
      %v3292 = vmul.f32 %v3279, 1.442695
      %v3293 = vpow.pop %v3292
      %v3294 = vmul.f32 %v3280, 1.442695
      %v3295 = vpow.pop %v3294
      %v3296 = vmul.f32 %v3281, 1.442695
      %v3297 = vpow.pop %v3296
      %v3298 = vmul.f32 %v3282, 1.442695
      %v3299 = vpow.pop %v3298
      %v3300 = vmul.f32 %v3283, 1.442695
      %v3301 = vpow.pop %v3300
      %v3302 = vmul.f32 %v3284, 1.442695
      %v3303 = vpow.pop %v3302
      %v3304 = vmul.f32 %v3285, 1.442695
      %v3305 = vpow.pop %v3304
      %v3306 = vmul.f32 %v3286, 1.442695
      %v3307 = vpow.pop %v3306
      %v3308 = vmul.f32 %v3287, 1.442695
      %v3309 = vpow.pop %v3308
      %v3310 = vmul.f32 %v3288, 1.442695
      %v3311 = vpow.pop %v3310
      %v3312 = vmul.f32 %v3289, 1.442695
      %v3313 = vpow.pop %v3312
      %v3314 = vmul.f32 %v3290, 1.442695
      %v3315 = vpow.pop %v3314
      %v3316 = vmul.f32 %v3291, 1.442695
      %v3317 = vpow.pop %v3316
      %v3318 = vmul.f32 %v3293, %v2358
      %v3319 = vmul.f32 %v3295, %v2359
      %v3320 = vmul.f32 %v3297, %v2360
      %v3321 = vmul.f32 %v3299, %v2361
      %v3322 = vmul.f32 %v3301, %v2362
      %v3323 = vmul.f32 %v3303, %v2363
      %v3324 = vmul.f32 %v3305, %v2364
      %v3325 = vmul.f32 %v3307, %v2365
      %v3326 = vmul.f32 %v3309, %v2366
      %v3327 = vmul.f32 %v3311, %v2367
      %v3328 = vmul.f32 %v3313, %v2368
      %v3329 = vmul.f32 %v3315, %v2369
      %v3330 = vmul.f32 %v3317, %v2370
      %s3331 = scalar_lea.vmem %s213, 1248
      %3332 = vst [vmem:[%s3331] sm:$0xff] %v3318
      %3333 = vst [vmem:[%s3331 + $0x8] sm:$0xff] %v3319
      %3334 = vst [vmem:[%s3331 + $0x10] sm:$0xff] %v3320
      %3335 = vst [vmem:[%s3331 + $0x18] sm:$0xff] %v3321
      %3336 = vst [vmem:[%s3331 + $0x20] sm:$0xff] %v3322
      %3337 = vst [vmem:[%s3331 + $0x28] sm:$0xff] %v3323
      %3338 = vst [vmem:[%s3331 + $0x30] sm:$0xff] %v3324
      %3339 = vst [vmem:[%s3331 + $0x38] sm:$0xff] %v3325
      %3340 = vst [vmem:[%s3331 + $0x40] sm:$0xff] %v3326
      %3341 = vst [vmem:[%s3331 + $0x48] sm:$0xff] %v3327
      %3342 = vst [vmem:[%s3331 + $0x50] sm:$0xff] %v3328
      %3343 = vst [vmem:[%s3331 + $0x58] sm:$0xff] %v3329
      %3344 = vst [vmem:[%s3331 + $0x60] sm:$0x3] %v3330
      %v3345 = vld [vmem:[%s979] sm:$0xff]
      %v3346 = vld [vmem:[%s979 + $0x8] sm:$0xff]
      %v3347 = vld [vmem:[%s979 + $0x10] sm:$0xff]
      %v3348 = vld [vmem:[%s979 + $0x18] sm:$0xff]
      %v3349 = vld [vmem:[%s979 + $0x20] sm:$0xff]
      %v3350 = vld [vmem:[%s979 + $0x28] sm:$0xff]
      %v3351 = vld [vmem:[%s979 + $0x30] sm:$0xff]
      %v3352 = vld [vmem:[%s979 + $0x38] sm:$0xff]
      %v3353 = vld [vmem:[%s979 + $0x40] sm:$0xff]
      %v3354 = vld [vmem:[%s979 + $0x48] sm:$0xff]
      %v3355 = vld [vmem:[%s979 + $0x50] sm:$0xff]
      %v3356 = vld [vmem:[%s979 + $0x58] sm:$0xff]
      %v3357 = vld [vmem:[%s979 + $0x60] sm:$0x3]
      %v3358 = vsub.f32 %v3345, %v993
      %v3359 = vsub.f32 %v3346, %v994
      %v3360 = vsub.f32 %v3347, %v995
      %v3361 = vsub.f32 %v3348, %v996
      %v3362 = vsub.f32 %v3349, %v997
      %v3363 = vsub.f32 %v3350, %v998
      %v3364 = vsub.f32 %v3351, %v999
      %v3365 = vsub.f32 %v3352, %v1000
      %v3366 = vsub.f32 %v3353, %v1001
      %v3367 = vsub.f32 %v3354, %v1002
      %v3368 = vsub.f32 %v3355, %v1003
      %v3369 = vsub.f32 %v3356, %v1004
      %v3370 = vsub.f32 %v3357, %v1005
      %v3371 = vmul.f32 %v3358, 1.442695
      %v3372 = vpow.pop %v3371
      %v3373 = vmul.f32 %v3359, 1.442695
      %v3374 = vpow.pop %v3373
      %v3375 = vmul.f32 %v3360, 1.442695
      %v3376 = vpow.pop %v3375
      %v3377 = vmul.f32 %v3361, 1.442695
      %v3378 = vpow.pop %v3377
      %v3379 = vmul.f32 %v3362, 1.442695
      %v3380 = vpow.pop %v3379
      %v3381 = vmul.f32 %v3363, 1.442695
      %v3382 = vpow.pop %v3381
      %v3383 = vmul.f32 %v3364, 1.442695
      %v3384 = vpow.pop %v3383
      %v3385 = vmul.f32 %v3365, 1.442695
      %v3386 = vpow.pop %v3385
      %v3387 = vmul.f32 %v3366, 1.442695
      %v3388 = vpow.pop %v3387
      %v3389 = vmul.f32 %v3367, 1.442695
      %v3390 = vpow.pop %v3389
      %v3391 = vmul.f32 %v3368, 1.442695
      %v3392 = vpow.pop %v3391
      %v3393 = vmul.f32 %v3369, 1.442695
      %v3394 = vpow.pop %v3393
      %v3395 = vmul.f32 %v3370, 1.442695
      %v3396 = vpow.pop %v3395
      %v3397 = vmul.f32 %v3372, %v2358
      %v3398 = vmul.f32 %v3374, %v2359
      %v3399 = vmul.f32 %v3376, %v2360
      %v3400 = vmul.f32 %v3378, %v2361
      %v3401 = vmul.f32 %v3380, %v2362
      %v3402 = vmul.f32 %v3382, %v2363
      %v3403 = vmul.f32 %v3384, %v2364
      %v3404 = vmul.f32 %v3386, %v2365
      %v3405 = vmul.f32 %v3388, %v2366
      %v3406 = vmul.f32 %v3390, %v2367
      %v3407 = vmul.f32 %v3392, %v2368
      %v3408 = vmul.f32 %v3394, %v2369
      %v3409 = vmul.f32 %v3396, %v2370
      %s3410 = scalar_lea.vmem %s213, 1352
      %3411 = vst [vmem:[%s3410] sm:$0xff] %v3397
      %3412 = vst [vmem:[%s3410 + $0x8] sm:$0xff] %v3398
      %3413 = vst [vmem:[%s3410 + $0x10] sm:$0xff] %v3399
      %3414 = vst [vmem:[%s3410 + $0x18] sm:$0xff] %v3400
      %3415 = vst [vmem:[%s3410 + $0x20] sm:$0xff] %v3401
      %3416 = vst [vmem:[%s3410 + $0x28] sm:$0xff] %v3402
      %3417 = vst [vmem:[%s3410 + $0x30] sm:$0xff] %v3403
      %3418 = vst [vmem:[%s3410 + $0x38] sm:$0xff] %v3404
      %3419 = vst [vmem:[%s3410 + $0x40] sm:$0xff] %v3405
      %3420 = vst [vmem:[%s3410 + $0x48] sm:$0xff] %v3406
      %3421 = vst [vmem:[%s3410 + $0x50] sm:$0xff] %v3407
      %3422 = vst [vmem:[%s3410 + $0x58] sm:$0xff] %v3408
      %3423 = vst [vmem:[%s3410 + $0x60] sm:$0x3] %v3409
      %p3424 = scmp.lt.s32.totalorder %s17, 1
      %s3425 = scalar_select %p3424, %s17, 1
      %p3426 = scmp.lt.s32.totalorder %s18, 0
      %s3427 = scalar_select %p3426, %s18, 0
      %s3428 = smul.addr %s3427, 13
      %s3429 = smul.addr %s3425, 182
      %s3430 = sadd.s32 %s3428, %s3429
      %s3431 = smul.addr %s3430, 8
      %s3432 = scalar_lea.vmem %s2, %s3431
      // Predicated region
      $region29: #{tpu_custom_call.1} parent=27 // pred_check
        %p3433 = pneg %p101
      $region30: #{tpu_custom_call.1} parent=27 // pred_check_branch
        %3435 = sbr.rel (%p3433) target = $region32
      $region31: #{tpu_custom_call.1} parent=27 // pred_region
        _
      $region32: #{tpu_custom_call.1} parent=27 // pred_fallthru
        _
    $region28: #{tpu_custom_call.1} parent=5 // pred_fallthru
      _
    %p3436 = scmp.le.s32.totalorder 2, %s8
    // Predicated region
    $region33: #{tpu_custom_call.1} parent=5 // pred_check
      %p3437 = pneg %p3436
    $region34: #{tpu_custom_call.1} parent=5 // pred_check_branch
      %3439 = sbr.rel (%p3437) target = $region36
    $region35: #{tpu_custom_call.1} parent=5 // pred_region
      %s3440 = ssub.s32 %s8, 2
      // Predicated region
      $region37: #{tpu_custom_call.1} parent=35 // pred_check
        %p3441 = pneg %p107
      $region38: #{tpu_custom_call.1} parent=35 // pred_check_branch
        %3443 = sbr.rel (%p3441) target = $region40
      $region39: #{tpu_custom_call.1} parent=35 // pred_region
        %p3444 = scmp.lt.s32.totalorder %s19, 1
        %s3445 = scalar_select %p3444, %s19, 1
        %p3446 = scmp.lt.s32.totalorder %s20, 0
        %s3447 = scalar_select %p3446, %s20, 0
        %s3448 = smul.addr %s3447, 13
        %s3449 = smul.addr %s3445, 182
        %s3450 = sadd.s32 %s3448, %s3449
        %s3451 = smul.addr %s3450, 8
        %s3452 = scalar_lea.vmem %s2, %s3451
      $region40: #{tpu_custom_call.1} parent=35 // pred_fallthru
        _
    $region36: #{tpu_custom_call.1} parent=5 // pred_fallthru
      _
  $region6: #{tpu_custom_call.1} parent=0 // loop_footer
    %s12 = sadd.s32 1, %s8
  $region7: #{tpu_custom_call.1} parent=0 // loop_footer_branch
    %7 = sbr.rel target = $region3
  $region8: #{tpu_custom_call.1} parent=0 // loop_exit
    _

</llo_original>
